<compile_context>
chip_gen: v6e
topology: v6e:2x2x1
jax: 0.10.0
libtpu: 0.0.40
codegen_flags: <defaults>
</compile_context>

<pallas_src>
import functools

import jax
import jax.numpy as jnp
from jax import lax
from jax.experimental import pallas as pl
from jax.experimental.pallas import tpu as pltpu


def _vmem_capacity_bytes(default=64 * 1024 * 1024):
    """Physical VMEM capacity, with a conservative fallback (v7x = 64 MiB)."""
    try:
        info = pltpu.get_tpu_info()
        cap = getattr(info, "vmem_capacity_bytes", None)
        if cap:
            return int(cap)
    except Exception:
        pass
    return default


def _per_image_vmem_bytes(C, HW, itemsize):
    # in + out blocks (double-buffered by the BlockSpec pipeline), native dtype.
    io = 2 * 2 * C * HW * itemsize
    # live per-image temporaries (rolled/masked taps, f32 accumulator, h1,
    # residual copy) -- conservative since the unrolled image loop does not
    # strictly bound live ranges.
    tmp = 8 * C * HW * 4
    return io + tmp


def _pick_block_n(N, C, HW, itemsize, vmem_cap, max_unroll=8):
    """Largest divisor of N that fits the VMEM budget (no forced >=2 steps:
    v5e/v6e have a single TensorCore, so fewer/larger steps win)."""
    per_image = _per_image_vmem_bytes(C, HW, itemsize)
    budget = max(int(0.4 * vmem_cap), per_image)
    cap = max(1, min(budget // per_image, max_unroll))
    best = 1
    for nb in range(1, N + 1):
        if N % nb == 0 and nb <= cap:
            best = nb
    return best


def _resblock_kernel(x_ref, w1_ref, b1_ref, w2_ref, b2_ref, mask_ref, out_ref,
                     *, W, shortcut):
    """Fused ResBlock on a block of Nb images, each seen as a (C, H*W) matrix."""
    Nb, C, HW = out_ref.shape

    # tap t = (dy+1)*3 + (dx+1) matches the wrapper's weight flattening order.
    offsets = [(dy, dx) for dy in (-1, 0, 1) for dx in (-1, 0, 1)]

    # Hoist all parameter loads once per grid step (they stay in vregs/VMEM).
    w1 = w1_ref[...]                              # (9, C, C)
    w2 = w2_ref[...]                              # (9, C, C)
    b1 = b1_ref[...].astype(jnp.float32)          # (C, 1) -> lane-broadcast
    b2 = b2_ref[...].astype(jnp.float32)          # (C, 1)
    masks = mask_ref[...]                         # (9, HW) 0/1, input dtype

    def conv3x3(x2d, w, b):
        # x2d: (C, HW) in native dtype.  Each tap is a circular roll of the
        # flattened spatial axis (XLU) times a boundary mask (VPU), followed by
        # a tiny (C, C) @ (C, HW) MXU dot accumulated in f32.
        acc = jnp.zeros((C, HW), jnp.float32)
        for t, (dy, dx) in enumerate(offsets):
            shift = dy * W + dx
            if shift == 0:
                xs = x2d                                     # center tap
            else:
                xs = pltpu.roll(x2d, (-shift) % HW, axis=1)  # xs[p] = x[p+shift]
                xs = xs * masks[t:t + 1, :]                  # zero wrapped taps
            acc = acc + jnp.dot(w[t], xs, preferred_element_type=jnp.float32)
        return acc + b                                        # bias (C,1) bcast

    for i in range(Nb):                                       # static unroll
        x2d = x_ref[i]                                        # (C, HW)
        h1 = jnp.maximum(conv3x3(x2d, w1, b1), 0.0).astype(x2d.dtype)
        h2 = jnp.maximum(conv3x3(h1, w2, b2), 0.0)            # f32
        if shortcut:
            h2 = h2 + x2d.astype(jnp.float32)
        out_ref[i] = h2.astype(out_ref.dtype)                 # lane-dense store


def resblock_forward(x_nchw, w1, b1, w2, b2, *, shortcut=True, block_n=None):
    """x_nchw: (N, C, H, W); w1/w2: (C, C, 3, 3) PyTorch OIHW; b1/b2: (C,).

    Note: for bf16 inputs the intermediate activation is rounded to bf16
    between the two convs (same as a bf16 reference); 1e-4 tolerances only
    hold for f32.
    """
    N, C, H, W = x_nchw.shape
    HW = H * W
    if w1.shape != (C, C, 3, 3) or w2.shape != (C, C, 3, 3):
        raise ValueError("expected (C, C, 3, 3) conv weights")

    # Free reshape: NCHW is already channel-major with contiguous spatial minor,
    # so no HBM relayout happens here (unlike the old NCHW<->NHWC transposes).
    x = x_nchw.reshape(N, C, HW)

    # Weights -> (tap, Cout, Cin) with tap = ky*3 + kx; biases -> (Cout, 1).
    w1_k = jnp.transpose(w1, (2, 3, 0, 1)).reshape(9, C, C)
    w2_k = jnp.transpose(w2, (2, 3, 0, 1)).reshape(9, C, C)
    b1_k = b1.reshape(C, 1)
    b2_k = b2.reshape(C, 1)

    # 0/1 validity masks of the 9 taps over flattened (h, w) positions.  Built
    # in the wrapper (XLA constant-folds them), kept resident in VMEM, so the
    # kernel needs no in-kernel iota / integer div / mod.
    hh = jnp.arange(H).reshape(H, 1)
    ww = jnp.arange(W).reshape(1, W)
    tap_masks = []
    for dy in (-1, 0, 1):
        for dx in (-1, 0, 1):
            valid = ((hh + dy >= 0) & (hh + dy < H) &
                     (ww + dx >= 0) & (ww + dx < W))
            tap_masks.append(valid.reshape(HW))
    tap_mask = jnp.stack(tap_masks, axis=0).astype(x.dtype)        # (9, HW)

    itemsize = jnp.dtype(x.dtype).itemsize
    vmem_cap = _vmem_capacity_bytes()
    if block_n is None:
        block_n = _pick_block_n(N, C, HW, itemsize, vmem_cap)
    if N % block_n != 0:
        raise ValueError(f"block_n={block_n} must divide N={N}")
    grid_n = N // block_n

    const_bytes = 2 * (2 * 9 * C * C + 2 * C + 9 * HW) * itemsize
    need = block_n * _per_image_vmem_bytes(C, HW, itemsize) + const_bytes
    vmem_limit = int(min(0.9 * vmem_cap, max(32 * 1024 * 1024, 2 * need)))
    vmem_limit = max(vmem_limit, need)

    kernel = functools.partial(_resblock_kernel, W=W, shortcut=shortcut)

    out = pl.pallas_call(
        kernel,
        out_shape=jax.ShapeDtypeStruct((N, C, HW), x.dtype),
        grid_spec=pltpu.PrefetchScalarGridSpec(
            num_scalar_prefetch=0,
            grid=(grid_n,),
            in_specs=[
                pl.BlockSpec((block_n, C, HW), lambda n: (n, 0, 0)),
                pl.BlockSpec((9, C, C), lambda n: (0, 0, 0)),
                pl.BlockSpec((C, 1), lambda n: (0, 0)),
                pl.BlockSpec((9, C, C), lambda n: (0, 0, 0)),
                pl.BlockSpec((C, 1), lambda n: (0, 0)),
                pl.BlockSpec((9, HW), lambda n: (0, 0)),
            ],
            out_specs=pl.BlockSpec((block_n, C, HW), lambda n: (n, 0, 0)),
        ),
        compiler_params=pltpu.CompilerParams(
            dimension_semantics=("parallel",),
            vmem_limit_bytes=vmem_limit,
        ),
    )(x, w1_k, b1_k, w2_k, b2_k, tap_mask)

    return out.reshape(N, C, H, W)


def resblock_reference(x, w1, b1, w2, b2, *, shortcut=True):
    """Pure-JAX reference matching PyTorch semantics (NCHW)."""
    def conv_relu(inp, w, b):
        y = lax.conv_general_dilated(
            inp, w, window_strides=(1, 1), padding=((1, 1), (1, 1)),
            dimension_numbers=('NCHW', 'OIHW', 'NCHW'))
        return jax.nn.relu(y + b.reshape(1, -1, 1, 1))
    h = conv_relu(conv_relu(x, w1, b1), w2, b2)
    return x + h if shortcut else h


if __name__ == "__main__":
    # ResBlock(in_dim=4, out_dim=4, shortcut=True) -> residual path active.
    N, C, H, W = 2, 4, 16, 16

    key = jax.random.PRNGKey(0)
    kx, kw1, kb1, kw2, kb2 = jax.random.split(key, 5)

    x = jax.random.normal(kx, (N, C, H, W), jnp.float32)
    w1 = 0.1 * jax.random.normal(kw1, (C, C, 3, 3), jnp.float32)
    b1 = 0.1 * jax.random.normal(kb1, (C,), jnp.float32)
    w2 = 0.1 * jax.random.normal(kw2, (C, C, 3, 3), jnp.float32)
    b2 = 0.1 * jax.random.normal(kb2, (C,), jnp.float32)

    ref = resblock_reference(x, w1, b1, w2, b2, shortcut=True)

    # Auto-picked block_n (largest divisor of N that fits the VMEM budget).
    out = resblock_forward(x, w1, b1, w2, b2, shortcut=True)
    out = jax.block_until_ready(out)
    assert out.shape == (N, C, H, W)
    assert jnp.allclose(out, ref, atol=1e-4, rtol=1e-4), "mismatch vs reference"

    # Also exercise a multi-step grid (block_n=1) to check the index_map path.
    out2 = resblock_forward(x, w1, b1, w2, b2, shortcut=True, block_n=1)
    out2 = jax.block_until_ready(out2)
    assert jnp.allclose(out2, ref, atol=1e-4, rtol=1e-4), "mismatch (block_n=1)"

    print("KERNEL_OK")
</pallas_src>

<mosaic_0001>
module attributes {stable_mosaic.version = 11 : i64} {
  func.func @_resblock_kernel(%arg0: i32, %arg1: memref<2x4x256xf32, #tpu.memory_space<vmem>>, %arg2: memref<9x4x4xf32, #tpu.memory_space<vmem>>, %arg3: memref<4x1xf32, #tpu.memory_space<vmem>>, %arg4: memref<9x4x4xf32, #tpu.memory_space<vmem>>, %arg5: memref<4x1xf32, #tpu.memory_space<vmem>>, %arg6: memref<9x256xf32, #tpu.memory_space<vmem>>, %arg7: memref<2x4x256xf32, #tpu.memory_space<vmem>>) attributes {dimension_semantics = [#tpu.dimension_semantics<parallel>], iteration_bounds = array<i64: 1>, scalar_prefetch = 0 : i64, scratch_operands = 0 : i64, tpu.core_type = #tpu.core_type<tc>, window_params = [{transform_indices = @transform_0, window_bounds = array<i64: 2, 4, 256>}, {pipeline_mode = #tpu.pipeline_mode<synchronous>, transform_indices = @transform_1, window_bounds = array<i64: 9, 4, 4>}, {pipeline_mode = #tpu.pipeline_mode<synchronous>, transform_indices = @transform_2, window_bounds = array<i64: 4, 1>}, {pipeline_mode = #tpu.pipeline_mode<synchronous>, transform_indices = @transform_3, window_bounds = array<i64: 9, 4, 4>}, {pipeline_mode = #tpu.pipeline_mode<synchronous>, transform_indices = @transform_4, window_bounds = array<i64: 4, 1>}, {pipeline_mode = #tpu.pipeline_mode<synchronous>, transform_indices = @transform_5, window_bounds = array<i64: 9, 256>}, {transform_indices = @transform_6, window_bounds = array<i64: 2, 4, 256>}]} {
    %c0 = arith.constant 0 : index
    %c0_0 = arith.constant 0 : index
    %c0_1 = arith.constant 0 : index
    %0 = vector.load %arg2[%c0, %c0_0, %c0_1] : memref<9x4x4xf32, #tpu.memory_space<vmem>>, vector<9x4x4xf32>
    %c0_2 = arith.constant 0 : index
    %c0_3 = arith.constant 0 : index
    %c0_4 = arith.constant 0 : index
    %1 = vector.load %arg4[%c0_2, %c0_3, %c0_4] : memref<9x4x4xf32, #tpu.memory_space<vmem>>, vector<9x4x4xf32>
    %c0_5 = arith.constant 0 : index
    %c0_6 = arith.constant 0 : index
    %2 = vector.load %arg3[%c0_5, %c0_6] : memref<4x1xf32, #tpu.memory_space<vmem>>, vector<4x1xf32>
    %c0_7 = arith.constant 0 : index
    %c0_8 = arith.constant 0 : index
    %3 = vector.load %arg5[%c0_7, %c0_8] : memref<4x1xf32, #tpu.memory_space<vmem>>, vector<4x1xf32>
    %c0_9 = arith.constant 0 : index
    %c0_10 = arith.constant 0 : index
    %4 = vector.load %arg6[%c0_9, %c0_10] : memref<9x256xf32, #tpu.memory_space<vmem>>, vector<9x256xf32>
    %c0_11 = arith.constant 0 : index
    %c0_12 = arith.constant 0 : index
    %c0_13 = arith.constant 0 : index
    %5 = vector.load %arg1[%c0_11, %c0_12, %c0_13] : memref<2x4x256xf32, #tpu.memory_space<vmem>>, vector<1x4x256xf32>
    %6 = vector.shape_cast %5 : vector<1x4x256xf32> to vector<4x256xf32>
    %cst = arith.constant 0.000000e+00 : f32
    %7 = vector.broadcast %cst : f32 to vector<4x256xf32>
    %c17_i32 = arith.constant 17 : i32
    %8 = tpu.dynamic_rotate %6 by %c17_i32 dim 1 : vector<4x256xf32>, i32 -> vector<4x256xf32>
    %9 = vector.extract_strided_slice %4 {offsets = [0, 0], sizes = [1, 256], strides = [1, 1]} : vector<9x256xf32> to vector<1x256xf32>
    %10 = vector.broadcast %9 : vector<1x256xf32> to vector<4x256xf32>
    %11 = arith.mulf %8, %10 : vector<4x256xf32>
    %12 = vector.extract_strided_slice %0 {offsets = [0, 0, 0], sizes = [1, 4, 4], strides = [1, 1, 1]} : vector<9x4x4xf32> to vector<1x4x4xf32>
    %13 = vector.shape_cast %12 : vector<1x4x4xf32> to vector<4x4xf32>
    %cst_14 = arith.constant dense<0.000000e+00> : vector<4x256xf32>
    %14 = tpu.matmul %13, %11, %cst_14 {dimension_numbers = #tpu.dot_dimension_numbers<[1], [0], [0], [1], [0, 0, 1, 1], [], []>} : vector<4x4xf32>, vector<4x256xf32>, vector<4x256xf32> -> vector<4x256xf32>
    %15 = arith.addf %7, %14 : vector<4x256xf32>
    %c16_i32 = arith.constant 16 : i32
    %16 = tpu.dynamic_rotate %6 by %c16_i32 dim 1 : vector<4x256xf32>, i32 -> vector<4x256xf32>
    %17 = vector.extract_strided_slice %4 {offsets = [1, 0], sizes = [1, 256], strides = [1, 1]} : vector<9x256xf32> to vector<1x256xf32>
    %18 = vector.broadcast %17 : vector<1x256xf32> to vector<4x256xf32>
    %19 = arith.mulf %16, %18 : vector<4x256xf32>
    %20 = vector.extract_strided_slice %0 {offsets = [1, 0, 0], sizes = [1, 4, 4], strides = [1, 1, 1]} : vector<9x4x4xf32> to vector<1x4x4xf32>
    %21 = vector.shape_cast %20 : vector<1x4x4xf32> to vector<4x4xf32>
    %cst_15 = arith.constant dense<0.000000e+00> : vector<4x256xf32>
    %22 = tpu.matmul %21, %19, %cst_15 {dimension_numbers = #tpu.dot_dimension_numbers<[1], [0], [0], [1], [0, 0, 1, 1], [], []>} : vector<4x4xf32>, vector<4x256xf32>, vector<4x256xf32> -> vector<4x256xf32>
    %23 = arith.addf %15, %22 : vector<4x256xf32>
    %c15_i32 = arith.constant 15 : i32
    %24 = tpu.dynamic_rotate %6 by %c15_i32 dim 1 : vector<4x256xf32>, i32 -> vector<4x256xf32>
    %25 = vector.extract_strided_slice %4 {offsets = [2, 0], sizes = [1, 256], strides = [1, 1]} : vector<9x256xf32> to vector<1x256xf32>
    %26 = vector.broadcast %25 : vector<1x256xf32> to vector<4x256xf32>
    %27 = arith.mulf %24, %26 : vector<4x256xf32>
    %28 = vector.extract_strided_slice %0 {offsets = [2, 0, 0], sizes = [1, 4, 4], strides = [1, 1, 1]} : vector<9x4x4xf32> to vector<1x4x4xf32>
    %29 = vector.shape_cast %28 : vector<1x4x4xf32> to vector<4x4xf32>
    %cst_16 = arith.constant dense<0.000000e+00> : vector<4x256xf32>
    %30 = tpu.matmul %29, %27, %cst_16 {dimension_numbers = #tpu.dot_dimension_numbers<[1], [0], [0], [1], [0, 0, 1, 1], [], []>} : vector<4x4xf32>, vector<4x256xf32>, vector<4x256xf32> -> vector<4x256xf32>
    %31 = arith.addf %23, %30 : vector<4x256xf32>
    %c1_i32 = arith.constant 1 : i32
    %32 = tpu.dynamic_rotate %6 by %c1_i32 dim 1 : vector<4x256xf32>, i32 -> vector<4x256xf32>
    %33 = vector.extract_strided_slice %4 {offsets = [3, 0], sizes = [1, 256], strides = [1, 1]} : vector<9x256xf32> to vector<1x256xf32>
    %34 = vector.broadcast %33 : vector<1x256xf32> to vector<4x256xf32>
    %35 = arith.mulf %32, %34 : vector<4x256xf32>
    %36 = vector.extract_strided_slice %0 {offsets = [3, 0, 0], sizes = [1, 4, 4], strides = [1, 1, 1]} : vector<9x4x4xf32> to vector<1x4x4xf32>
    %37 = vector.shape_cast %36 : vector<1x4x4xf32> to vector<4x4xf32>
    %cst_17 = arith.constant dense<0.000000e+00> : vector<4x256xf32>
    %38 = tpu.matmul %37, %35, %cst_17 {dimension_numbers = #tpu.dot_dimension_numbers<[1], [0], [0], [1], [0, 0, 1, 1], [], []>} : vector<4x4xf32>, vector<4x256xf32>, vector<4x256xf32> -> vector<4x256xf32>
    %39 = arith.addf %31, %38 : vector<4x256xf32>
    %40 = vector.extract_strided_slice %0 {offsets = [4, 0, 0], sizes = [1, 4, 4], strides = [1, 1, 1]} : vector<9x4x4xf32> to vector<1x4x4xf32>
    %41 = vector.shape_cast %40 : vector<1x4x4xf32> to vector<4x4xf32>
    %cst_18 = arith.constant dense<0.000000e+00> : vector<4x256xf32>
    %42 = tpu.matmul %41, %6, %cst_18 {dimension_numbers = #tpu.dot_dimension_numbers<[1], [0], [0], [1], [0, 0, 1, 1], [], []>} : vector<4x4xf32>, vector<4x256xf32>, vector<4x256xf32> -> vector<4x256xf32>
    %43 = arith.addf %39, %42 : vector<4x256xf32>
    %c255_i32 = arith.constant 255 : i32
    %44 = tpu.dynamic_rotate %6 by %c255_i32 dim 1 : vector<4x256xf32>, i32 -> vector<4x256xf32>
    %45 = vector.extract_strided_slice %4 {offsets = [5, 0], sizes = [1, 256], strides = [1, 1]} : vector<9x256xf32> to vector<1x256xf32>
    %46 = vector.broadcast %45 : vector<1x256xf32> to vector<4x256xf32>
    %47 = arith.mulf %44, %46 : vector<4x256xf32>
    %48 = vector.extract_strided_slice %0 {offsets = [5, 0, 0], sizes = [1, 4, 4], strides = [1, 1, 1]} : vector<9x4x4xf32> to vector<1x4x4xf32>
    %49 = vector.shape_cast %48 : vector<1x4x4xf32> to vector<4x4xf32>
    %cst_19 = arith.constant dense<0.000000e+00> : vector<4x256xf32>
    %50 = tpu.matmul %49, %47, %cst_19 {dimension_numbers = #tpu.dot_dimension_numbers<[1], [0], [0], [1], [0, 0, 1, 1], [], []>} : vector<4x4xf32>, vector<4x256xf32>, vector<4x256xf32> -> vector<4x256xf32>
    %51 = arith.addf %43, %50 : vector<4x256xf32>
    %c241_i32 = arith.constant 241 : i32
    %52 = tpu.dynamic_rotate %6 by %c241_i32 dim 1 : vector<4x256xf32>, i32 -> vector<4x256xf32>
    %53 = vector.extract_strided_slice %4 {offsets = [6, 0], sizes = [1, 256], strides = [1, 1]} : vector<9x256xf32> to vector<1x256xf32>
    %54 = vector.broadcast %53 : vector<1x256xf32> to vector<4x256xf32>
    %55 = arith.mulf %52, %54 : vector<4x256xf32>
    %56 = vector.extract_strided_slice %0 {offsets = [6, 0, 0], sizes = [1, 4, 4], strides = [1, 1, 1]} : vector<9x4x4xf32> to vector<1x4x4xf32>
    %57 = vector.shape_cast %56 : vector<1x4x4xf32> to vector<4x4xf32>
    %cst_20 = arith.constant dense<0.000000e+00> : vector<4x256xf32>
    %58 = tpu.matmul %57, %55, %cst_20 {dimension_numbers = #tpu.dot_dimension_numbers<[1], [0], [0], [1], [0, 0, 1, 1], [], []>} : vector<4x4xf32>, vector<4x256xf32>, vector<4x256xf32> -> vector<4x256xf32>
    %59 = arith.addf %51, %58 : vector<4x256xf32>
    %c240_i32 = arith.constant 240 : i32
    %60 = tpu.dynamic_rotate %6 by %c240_i32 dim 1 : vector<4x256xf32>, i32 -> vector<4x256xf32>
    %61 = vector.extract_strided_slice %4 {offsets = [7, 0], sizes = [1, 256], strides = [1, 1]} : vector<9x256xf32> to vector<1x256xf32>
    %62 = vector.broadcast %61 : vector<1x256xf32> to vector<4x256xf32>
    %63 = arith.mulf %60, %62 : vector<4x256xf32>
    %64 = vector.extract_strided_slice %0 {offsets = [7, 0, 0], sizes = [1, 4, 4], strides = [1, 1, 1]} : vector<9x4x4xf32> to vector<1x4x4xf32>
    %65 = vector.shape_cast %64 : vector<1x4x4xf32> to vector<4x4xf32>
    %cst_21 = arith.constant dense<0.000000e+00> : vector<4x256xf32>
    %66 = tpu.matmul %65, %63, %cst_21 {dimension_numbers = #tpu.dot_dimension_numbers<[1], [0], [0], [1], [0, 0, 1, 1], [], []>} : vector<4x4xf32>, vector<4x256xf32>, vector<4x256xf32> -> vector<4x256xf32>
    %67 = arith.addf %59, %66 : vector<4x256xf32>
    %c239_i32 = arith.constant 239 : i32
    %68 = tpu.dynamic_rotate %6 by %c239_i32 dim 1 : vector<4x256xf32>, i32 -> vector<4x256xf32>
    %69 = vector.extract_strided_slice %4 {offsets = [8, 0], sizes = [1, 256], strides = [1, 1]} : vector<9x256xf32> to vector<1x256xf32>
    %70 = vector.broadcast %69 : vector<1x256xf32> to vector<4x256xf32>
    %71 = arith.mulf %68, %70 : vector<4x256xf32>
    %72 = vector.extract_strided_slice %0 {offsets = [8, 0, 0], sizes = [1, 4, 4], strides = [1, 1, 1]} : vector<9x4x4xf32> to vector<1x4x4xf32>
    %73 = vector.shape_cast %72 : vector<1x4x4xf32> to vector<4x4xf32>
    %cst_22 = arith.constant dense<0.000000e+00> : vector<4x256xf32>
    %74 = tpu.matmul %73, %71, %cst_22 {dimension_numbers = #tpu.dot_dimension_numbers<[1], [0], [0], [1], [0, 0, 1, 1], [], []>} : vector<4x4xf32>, vector<4x256xf32>, vector<4x256xf32> -> vector<4x256xf32>
    %75 = arith.addf %67, %74 : vector<4x256xf32>
    %76 = vector.broadcast %2 : vector<4x1xf32> to vector<4x256xf32>
    %77 = arith.addf %75, %76 : vector<4x256xf32>
    %cst_23 = arith.constant 0.000000e+00 : f32
    %78 = vector.broadcast %cst_23 : f32 to vector<4x256xf32>
    %79 = arith.maximumf %77, %78 : vector<4x256xf32>
    %cst_24 = arith.constant 0.000000e+00 : f32
    %80 = vector.broadcast %cst_24 : f32 to vector<4x256xf32>
    %c17_i32_25 = arith.constant 17 : i32
    %81 = tpu.dynamic_rotate %79 by %c17_i32_25 dim 1 : vector<4x256xf32>, i32 -> vector<4x256xf32>
    %82 = vector.extract_strided_slice %4 {offsets = [0, 0], sizes = [1, 256], strides = [1, 1]} : vector<9x256xf32> to vector<1x256xf32>
    %83 = vector.broadcast %82 : vector<1x256xf32> to vector<4x256xf32>
    %84 = arith.mulf %81, %83 : vector<4x256xf32>
    %85 = vector.extract_strided_slice %1 {offsets = [0, 0, 0], sizes = [1, 4, 4], strides = [1, 1, 1]} : vector<9x4x4xf32> to vector<1x4x4xf32>
    %86 = vector.shape_cast %85 : vector<1x4x4xf32> to vector<4x4xf32>
    %cst_26 = arith.constant dense<0.000000e+00> : vector<4x256xf32>
    %87 = tpu.matmul %86, %84, %cst_26 {dimension_numbers = #tpu.dot_dimension_numbers<[1], [0], [0], [1], [0, 0, 1, 1], [], []>} : vector<4x4xf32>, vector<4x256xf32>, vector<4x256xf32> -> vector<4x256xf32>
    %88 = arith.addf %80, %87 : vector<4x256xf32>
    %c16_i32_27 = arith.constant 16 : i32
    %89 = tpu.dynamic_rotate %79 by %c16_i32_27 dim 1 : vector<4x256xf32>, i32 -> vector<4x256xf32>
    %90 = vector.extract_strided_slice %4 {offsets = [1, 0], sizes = [1, 256], strides = [1, 1]} : vector<9x256xf32> to vector<1x256xf32>
    %91 = vector.broadcast %90 : vector<1x256xf32> to vector<4x256xf32>
    %92 = arith.mulf %89, %91 : vector<4x256xf32>
    %93 = vector.extract_strided_slice %1 {offsets = [1, 0, 0], sizes = [1, 4, 4], strides = [1, 1, 1]} : vector<9x4x4xf32> to vector<1x4x4xf32>
    %94 = vector.shape_cast %93 : vector<1x4x4xf32> to vector<4x4xf32>
    %cst_28 = arith.constant dense<0.000000e+00> : vector<4x256xf32>
    %95 = tpu.matmul %94, %92, %cst_28 {dimension_numbers = #tpu.dot_dimension_numbers<[1], [0], [0], [1], [0, 0, 1, 1], [], []>} : vector<4x4xf32>, vector<4x256xf32>, vector<4x256xf32> -> vector<4x256xf32>
    %96 = arith.addf %88, %95 : vector<4x256xf32>
    %c15_i32_29 = arith.constant 15 : i32
    %97 = tpu.dynamic_rotate %79 by %c15_i32_29 dim 1 : vector<4x256xf32>, i32 -> vector<4x256xf32>
    %98 = vector.extract_strided_slice %4 {offsets = [2, 0], sizes = [1, 256], strides = [1, 1]} : vector<9x256xf32> to vector<1x256xf32>
    %99 = vector.broadcast %98 : vector<1x256xf32> to vector<4x256xf32>
    %100 = arith.mulf %97, %99 : vector<4x256xf32>
    %101 = vector.extract_strided_slice %1 {offsets = [2, 0, 0], sizes = [1, 4, 4], strides = [1, 1, 1]} : vector<9x4x4xf32> to vector<1x4x4xf32>
    %102 = vector.shape_cast %101 : vector<1x4x4xf32> to vector<4x4xf32>
    %cst_30 = arith.constant dense<0.000000e+00> : vector<4x256xf32>
    %103 = tpu.matmul %102, %100, %cst_30 {dimension_numbers = #tpu.dot_dimension_numbers<[1], [0], [0], [1], [0, 0, 1, 1], [], []>} : vector<4x4xf32>, vector<4x256xf32>, vector<4x256xf32> -> vector<4x256xf32>
    %104 = arith.addf %96, %103 : vector<4x256xf32>
    %c1_i32_31 = arith.constant 1 : i32
    %105 = tpu.dynamic_rotate %79 by %c1_i32_31 dim 1 : vector<4x256xf32>, i32 -> vector<4x256xf32>
    %106 = vector.extract_strided_slice %4 {offsets = [3, 0], sizes = [1, 256], strides = [1, 1]} : vector<9x256xf32> to vector<1x256xf32>
    %107 = vector.broadcast %106 : vector<1x256xf32> to vector<4x256xf32>
    %108 = arith.mulf %105, %107 : vector<4x256xf32>
    %109 = vector.extract_strided_slice %1 {offsets = [3, 0, 0], sizes = [1, 4, 4], strides = [1, 1, 1]} : vector<9x4x4xf32> to vector<1x4x4xf32>
    %110 = vector.shape_cast %109 : vector<1x4x4xf32> to vector<4x4xf32>
    %cst_32 = arith.constant dense<0.000000e+00> : vector<4x256xf32>
    %111 = tpu.matmul %110, %108, %cst_32 {dimension_numbers = #tpu.dot_dimension_numbers<[1], [0], [0], [1], [0, 0, 1, 1], [], []>} : vector<4x4xf32>, vector<4x256xf32>, vector<4x256xf32> -> vector<4x256xf32>
    %112 = arith.addf %104, %111 : vector<4x256xf32>
    %113 = vector.extract_strided_slice %1 {offsets = [4, 0, 0], sizes = [1, 4, 4], strides = [1, 1, 1]} : vector<9x4x4xf32> to vector<1x4x4xf32>
    %114 = vector.shape_cast %113 : vector<1x4x4xf32> to vector<4x4xf32>
    %cst_33 = arith.constant dense<0.000000e+00> : vector<4x256xf32>
    %115 = tpu.matmul %114, %79, %cst_33 {dimension_numbers = #tpu.dot_dimension_numbers<[1], [0], [0], [1], [0, 0, 1, 1], [], []>} : vector<4x4xf32>, vector<4x256xf32>, vector<4x256xf32> -> vector<4x256xf32>
    %116 = arith.addf %112, %115 : vector<4x256xf32>
    %c255_i32_34 = arith.constant 255 : i32
    %117 = tpu.dynamic_rotate %79 by %c255_i32_34 dim 1 : vector<4x256xf32>, i32 -> vector<4x256xf32>
    %118 = vector.extract_strided_slice %4 {offsets = [5, 0], sizes = [1, 256], strides = [1, 1]} : vector<9x256xf32> to vector<1x256xf32>
    %119 = vector.broadcast %118 : vector<1x256xf32> to vector<4x256xf32>
    %120 = arith.mulf %117, %119 : vector<4x256xf32>
    %121 = vector.extract_strided_slice %1 {offsets = [5, 0, 0], sizes = [1, 4, 4], strides = [1, 1, 1]} : vector<9x4x4xf32> to vector<1x4x4xf32>
    %122 = vector.shape_cast %121 : vector<1x4x4xf32> to vector<4x4xf32>
    %cst_35 = arith.constant dense<0.000000e+00> : vector<4x256xf32>
    %123 = tpu.matmul %122, %120, %cst_35 {dimension_numbers = #tpu.dot_dimension_numbers<[1], [0], [0], [1], [0, 0, 1, 1], [], []>} : vector<4x4xf32>, vector<4x256xf32>, vector<4x256xf32> -> vector<4x256xf32>
    %124 = arith.addf %116, %123 : vector<4x256xf32>
    %c241_i32_36 = arith.constant 241 : i32
    %125 = tpu.dynamic_rotate %79 by %c241_i32_36 dim 1 : vector<4x256xf32>, i32 -> vector<4x256xf32>
    %126 = vector.extract_strided_slice %4 {offsets = [6, 0], sizes = [1, 256], strides = [1, 1]} : vector<9x256xf32> to vector<1x256xf32>
    %127 = vector.broadcast %126 : vector<1x256xf32> to vector<4x256xf32>
    %128 = arith.mulf %125, %127 : vector<4x256xf32>
    %129 = vector.extract_strided_slice %1 {offsets = [6, 0, 0], sizes = [1, 4, 4], strides = [1, 1, 1]} : vector<9x4x4xf32> to vector<1x4x4xf32>
    %130 = vector.shape_cast %129 : vector<1x4x4xf32> to vector<4x4xf32>
    %cst_37 = arith.constant dense<0.000000e+00> : vector<4x256xf32>
    %131 = tpu.matmul %130, %128, %cst_37 {dimension_numbers = #tpu.dot_dimension_numbers<[1], [0], [0], [1], [0, 0, 1, 1], [], []>} : vector<4x4xf32>, vector<4x256xf32>, vector<4x256xf32> -> vector<4x256xf32>
    %132 = arith.addf %124, %131 : vector<4x256xf32>
    %c240_i32_38 = arith.constant 240 : i32
    %133 = tpu.dynamic_rotate %79 by %c240_i32_38 dim 1 : vector<4x256xf32>, i32 -> vector<4x256xf32>
    %134 = vector.extract_strided_slice %4 {offsets = [7, 0], sizes = [1, 256], strides = [1, 1]} : vector<9x256xf32> to vector<1x256xf32>
    %135 = vector.broadcast %134 : vector<1x256xf32> to vector<4x256xf32>
    %136 = arith.mulf %133, %135 : vector<4x256xf32>
    %137 = vector.extract_strided_slice %1 {offsets = [7, 0, 0], sizes = [1, 4, 4], strides = [1, 1, 1]} : vector<9x4x4xf32> to vector<1x4x4xf32>
    %138 = vector.shape_cast %137 : vector<1x4x4xf32> to vector<4x4xf32>
    %cst_39 = arith.constant dense<0.000000e+00> : vector<4x256xf32>
    %139 = tpu.matmul %138, %136, %cst_39 {dimension_numbers = #tpu.dot_dimension_numbers<[1], [0], [0], [1], [0, 0, 1, 1], [], []>} : vector<4x4xf32>, vector<4x256xf32>, vector<4x256xf32> -> vector<4x256xf32>
    %140 = arith.addf %132, %139 : vector<4x256xf32>
    %c239_i32_40 = arith.constant 239 : i32
    %141 = tpu.dynamic_rotate %79 by %c239_i32_40 dim 1 : vector<4x256xf32>, i32 -> vector<4x256xf32>
    %142 = vector.extract_strided_slice %4 {offsets = [8, 0], sizes = [1, 256], strides = [1, 1]} : vector<9x256xf32> to vector<1x256xf32>
    %143 = vector.broadcast %142 : vector<1x256xf32> to vector<4x256xf32>
    %144 = arith.mulf %141, %143 : vector<4x256xf32>
    %145 = vector.extract_strided_slice %1 {offsets = [8, 0, 0], sizes = [1, 4, 4], strides = [1, 1, 1]} : vector<9x4x4xf32> to vector<1x4x4xf32>
    %146 = vector.shape_cast %145 : vector<1x4x4xf32> to vector<4x4xf32>
    %cst_41 = arith.constant dense<0.000000e+00> : vector<4x256xf32>
    %147 = tpu.matmul %146, %144, %cst_41 {dimension_numbers = #tpu.dot_dimension_numbers<[1], [0], [0], [1], [0, 0, 1, 1], [], []>} : vector<4x4xf32>, vector<4x256xf32>, vector<4x256xf32> -> vector<4x256xf32>
    %148 = arith.addf %140, %147 : vector<4x256xf32>
    %149 = vector.broadcast %3 : vector<4x1xf32> to vector<4x256xf32>
    %150 = arith.addf %148, %149 : vector<4x256xf32>
    %cst_42 = arith.constant 0.000000e+00 : f32
    %151 = vector.broadcast %cst_42 : f32 to vector<4x256xf32>
    %152 = arith.maximumf %150, %151 : vector<4x256xf32>
    %153 = arith.addf %152, %6 : vector<4x256xf32>
    %c0_43 = arith.constant 0 : index
    %c0_44 = arith.constant 0 : index
    %c0_45 = arith.constant 0 : index
    %154 = vector.load %arg7[%c0_43, %c0_44, %c0_45] : memref<2x4x256xf32, #tpu.memory_space<vmem>>, vector<1x4x256xf32>
    %155 = vector.shape_cast %154 : vector<1x4x256xf32> to vector<4x256xf32>
    %156 = vector.shape_cast %153 : vector<4x256xf32> to vector<1x4x256xf32>
    tpu.vector_store %arg7[%c0_43, %c0_44, %c0_45], %156 {strides = array<i32>} : memref<2x4x256xf32, #tpu.memory_space<vmem>>, vector<1x4x256xf32>,
    %c1 = arith.constant 1 : index
    %c0_46 = arith.constant 0 : index
    %c0_47 = arith.constant 0 : index
    %157 = vector.load %arg1[%c1, %c0_46, %c0_47] : memref<2x4x256xf32, #tpu.memory_space<vmem>>, vector<1x4x256xf32>
    %158 = vector.shape_cast %157 : vector<1x4x256xf32> to vector<4x256xf32>
    %cst_48 = arith.constant 0.000000e+00 : f32
    %159 = vector.broadcast %cst_48 : f32 to vector<4x256xf32>
    %c17_i32_49 = arith.constant 17 : i32
    %160 = tpu.dynamic_rotate %158 by %c17_i32_49 dim 1 : vector<4x256xf32>, i32 -> vector<4x256xf32>
    %161 = vector.extract_strided_slice %4 {offsets = [0, 0], sizes = [1, 256], strides = [1, 1]} : vector<9x256xf32> to vector<1x256xf32>
    %162 = vector.broadcast %161 : vector<1x256xf32> to vector<4x256xf32>
    %163 = arith.mulf %160, %162 : vector<4x256xf32>
    %164 = vector.extract_strided_slice %0 {offsets = [0, 0, 0], sizes = [1, 4, 4], strides = [1, 1, 1]} : vector<9x4x4xf32> to vector<1x4x4xf32>
    %165 = vector.shape_cast %164 : vector<1x4x4xf32> to vector<4x4xf32>
    %cst_50 = arith.constant dense<0.000000e+00> : vector<4x256xf32>
    %166 = tpu.matmul %165, %163, %cst_50 {dimension_numbers = #tpu.dot_dimension_numbers<[1], [0], [0], [1], [0, 0, 1, 1], [], []>} : vector<4x4xf32>, vector<4x256xf32>, vector<4x256xf32> -> vector<4x256xf32>
    %167 = arith.addf %159, %166 : vector<4x256xf32>
    %c16_i32_51 = arith.constant 16 : i32
    %168 = tpu.dynamic_rotate %158 by %c16_i32_51 dim 1 : vector<4x256xf32>, i32 -> vector<4x256xf32>
    %169 = vector.extract_strided_slice %4 {offsets = [1, 0], sizes = [1, 256], strides = [1, 1]} : vector<9x256xf32> to vector<1x256xf32>
    %170 = vector.broadcast %169 : vector<1x256xf32> to vector<4x256xf32>
    %171 = arith.mulf %168, %170 : vector<4x256xf32>
    %172 = vector.extract_strided_slice %0 {offsets = [1, 0, 0], sizes = [1, 4, 4], strides = [1, 1, 1]} : vector<9x4x4xf32> to vector<1x4x4xf32>
    %173 = vector.shape_cast %172 : vector<1x4x4xf32> to vector<4x4xf32>
    %cst_52 = arith.constant dense<0.000000e+00> : vector<4x256xf32>
    %174 = tpu.matmul %173, %171, %cst_52 {dimension_numbers = #tpu.dot_dimension_numbers<[1], [0], [0], [1], [0, 0, 1, 1], [], []>} : vector<4x4xf32>, vector<4x256xf32>, vector<4x256xf32> -> vector<4x256xf32>
    %175 = arith.addf %167, %174 : vector<4x256xf32>
    %c15_i32_53 = arith.constant 15 : i32
    %176 = tpu.dynamic_rotate %158 by %c15_i32_53 dim 1 : vector<4x256xf32>, i32 -> vector<4x256xf32>
    %177 = vector.extract_strided_slice %4 {offsets = [2, 0], sizes = [1, 256], strides = [1, 1]} : vector<9x256xf32> to vector<1x256xf32>
    %178 = vector.broadcast %177 : vector<1x256xf32> to vector<4x256xf32>
    %179 = arith.mulf %176, %178 : vector<4x256xf32>
    %180 = vector.extract_strided_slice %0 {offsets = [2, 0, 0], sizes = [1, 4, 4], strides = [1, 1, 1]} : vector<9x4x4xf32> to vector<1x4x4xf32>
    %181 = vector.shape_cast %180 : vector<1x4x4xf32> to vector<4x4xf32>
    %cst_54 = arith.constant dense<0.000000e+00> : vector<4x256xf32>
    %182 = tpu.matmul %181, %179, %cst_54 {dimension_numbers = #tpu.dot_dimension_numbers<[1], [0], [0], [1], [0, 0, 1, 1], [], []>} : vector<4x4xf32>, vector<4x256xf32>, vector<4x256xf32> -> vector<4x256xf32>
    %183 = arith.addf %175, %182 : vector<4x256xf32>
    %c1_i32_55 = arith.constant 1 : i32
    %184 = tpu.dynamic_rotate %158 by %c1_i32_55 dim 1 : vector<4x256xf32>, i32 -> vector<4x256xf32>
    %185 = vector.extract_strided_slice %4 {offsets = [3, 0], sizes = [1, 256], strides = [1, 1]} : vector<9x256xf32> to vector<1x256xf32>
    %186 = vector.broadcast %185 : vector<1x256xf32> to vector<4x256xf32>
    %187 = arith.mulf %184, %186 : vector<4x256xf32>
    %188 = vector.extract_strided_slice %0 {offsets = [3, 0, 0], sizes = [1, 4, 4], strides = [1, 1, 1]} : vector<9x4x4xf32> to vector<1x4x4xf32>
    %189 = vector.shape_cast %188 : vector<1x4x4xf32> to vector<4x4xf32>
    %cst_56 = arith.constant dense<0.000000e+00> : vector<4x256xf32>
    %190 = tpu.matmul %189, %187, %cst_56 {dimension_numbers = #tpu.dot_dimension_numbers<[1], [0], [0], [1], [0, 0, 1, 1], [], []>} : vector<4x4xf32>, vector<4x256xf32>, vector<4x256xf32> -> vector<4x256xf32>
    %191 = arith.addf %183, %190 : vector<4x256xf32>
    %192 = vector.extract_strided_slice %0 {offsets = [4, 0, 0], sizes = [1, 4, 4], strides = [1, 1, 1]} : vector<9x4x4xf32> to vector<1x4x4xf32>
    %193 = vector.shape_cast %192 : vector<1x4x4xf32> to vector<4x4xf32>
    %cst_57 = arith.constant dense<0.000000e+00> : vector<4x256xf32>
    %194 = tpu.matmul %193, %158, %cst_57 {dimension_numbers = #tpu.dot_dimension_numbers<[1], [0], [0], [1], [0, 0, 1, 1], [], []>} : vector<4x4xf32>, vector<4x256xf32>, vector<4x256xf32> -> vector<4x256xf32>
    %195 = arith.addf %191, %194 : vector<4x256xf32>
    %c255_i32_58 = arith.constant 255 : i32
    %196 = tpu.dynamic_rotate %158 by %c255_i32_58 dim 1 : vector<4x256xf32>, i32 -> vector<4x256xf32>
    %197 = vector.extract_strided_slice %4 {offsets = [5, 0], sizes = [1, 256], strides = [1, 1]} : vector<9x256xf32> to vector<1x256xf32>
    %198 = vector.broadcast %197 : vector<1x256xf32> to vector<4x256xf32>
    %199 = arith.mulf %196, %198 : vector<4x256xf32>
    %200 = vector.extract_strided_slice %0 {offsets = [5, 0, 0], sizes = [1, 4, 4], strides = [1, 1, 1]} : vector<9x4x4xf32> to vector<1x4x4xf32>
    %201 = vector.shape_cast %200 : vector<1x4x4xf32> to vector<4x4xf32>
    %cst_59 = arith.constant dense<0.000000e+00> : vector<4x256xf32>
    %202 = tpu.matmul %201, %199, %cst_59 {dimension_numbers = #tpu.dot_dimension_numbers<[1], [0], [0], [1], [0, 0, 1, 1], [], []>} : vector<4x4xf32>, vector<4x256xf32>, vector<4x256xf32> -> vector<4x256xf32>
    %203 = arith.addf %195, %202 : vector<4x256xf32>
    %c241_i32_60 = arith.constant 241 : i32
    %204 = tpu.dynamic_rotate %158 by %c241_i32_60 dim 1 : vector<4x256xf32>, i32 -> vector<4x256xf32>
    %205 = vector.extract_strided_slice %4 {offsets = [6, 0], sizes = [1, 256], strides = [1, 1]} : vector<9x256xf32> to vector<1x256xf32>
    %206 = vector.broadcast %205 : vector<1x256xf32> to vector<4x256xf32>
    %207 = arith.mulf %204, %206 : vector<4x256xf32>
    %208 = vector.extract_strided_slice %0 {offsets = [6, 0, 0], sizes = [1, 4, 4], strides = [1, 1, 1]} : vector<9x4x4xf32> to vector<1x4x4xf32>
    %209 = vector.shape_cast %208 : vector<1x4x4xf32> to vector<4x4xf32>
    %cst_61 = arith.constant dense<0.000000e+00> : vector<4x256xf32>
    %210 = tpu.matmul %209, %207, %cst_61 {dimension_numbers = #tpu.dot_dimension_numbers<[1], [0], [0], [1], [0, 0, 1, 1], [], []>} : vector<4x4xf32>, vector<4x256xf32>, vector<4x256xf32> -> vector<4x256xf32>
    %211 = arith.addf %203, %210 : vector<4x256xf32>
    %c240_i32_62 = arith.constant 240 : i32
    %212 = tpu.dynamic_rotate %158 by %c240_i32_62 dim 1 : vector<4x256xf32>, i32 -> vector<4x256xf32>
    %213 = vector.extract_strided_slice %4 {offsets = [7, 0], sizes = [1, 256], strides = [1, 1]} : vector<9x256xf32> to vector<1x256xf32>
    %214 = vector.broadcast %213 : vector<1x256xf32> to vector<4x256xf32>
    %215 = arith.mulf %212, %214 : vector<4x256xf32>
    %216 = vector.extract_strided_slice %0 {offsets = [7, 0, 0], sizes = [1, 4, 4], strides = [1, 1, 1]} : vector<9x4x4xf32> to vector<1x4x4xf32>
    %217 = vector.shape_cast %216 : vector<1x4x4xf32> to vector<4x4xf32>
    %cst_63 = arith.constant dense<0.000000e+00> : vector<4x256xf32>
    %218 = tpu.matmul %217, %215, %cst_63 {dimension_numbers = #tpu.dot_dimension_numbers<[1], [0], [0], [1], [0, 0, 1, 1], [], []>} : vector<4x4xf32>, vector<4x256xf32>, vector<4x256xf32> -> vector<4x256xf32>
    %219 = arith.addf %211, %218 : vector<4x256xf32>
    %c239_i32_64 = arith.constant 239 : i32
    %220 = tpu.dynamic_rotate %158 by %c239_i32_64 dim 1 : vector<4x256xf32>, i32 -> vector<4x256xf32>
    %221 = vector.extract_strided_slice %4 {offsets = [8, 0], sizes = [1, 256], strides = [1, 1]} : vector<9x256xf32> to vector<1x256xf32>
    %222 = vector.broadcast %221 : vector<1x256xf32> to vector<4x256xf32>
    %223 = arith.mulf %220, %222 : vector<4x256xf32>
    %224 = vector.extract_strided_slice %0 {offsets = [8, 0, 0], sizes = [1, 4, 4], strides = [1, 1, 1]} : vector<9x4x4xf32> to vector<1x4x4xf32>
    %225 = vector.shape_cast %224 : vector<1x4x4xf32> to vector<4x4xf32>
    %cst_65 = arith.constant dense<0.000000e+00> : vector<4x256xf32>
    %226 = tpu.matmul %225, %223, %cst_65 {dimension_numbers = #tpu.dot_dimension_numbers<[1], [0], [0], [1], [0, 0, 1, 1], [], []>} : vector<4x4xf32>, vector<4x256xf32>, vector<4x256xf32> -> vector<4x256xf32>
    %227 = arith.addf %219, %226 : vector<4x256xf32>
    %228 = vector.broadcast %2 : vector<4x1xf32> to vector<4x256xf32>
    %229 = arith.addf %227, %228 : vector<4x256xf32>
    %cst_66 = arith.constant 0.000000e+00 : f32
    %230 = vector.broadcast %cst_66 : f32 to vector<4x256xf32>
    %231 = arith.maximumf %229, %230 : vector<4x256xf32>
    %cst_67 = arith.constant 0.000000e+00 : f32
    %232 = vector.broadcast %cst_67 : f32 to vector<4x256xf32>
    %c17_i32_68 = arith.constant 17 : i32
    %233 = tpu.dynamic_rotate %231 by %c17_i32_68 dim 1 : vector<4x256xf32>, i32 -> vector<4x256xf32>
    %234 = vector.extract_strided_slice %4 {offsets = [0, 0], sizes = [1, 256], strides = [1, 1]} : vector<9x256xf32> to vector<1x256xf32>
    %235 = vector.broadcast %234 : vector<1x256xf32> to vector<4x256xf32>
    %236 = arith.mulf %233, %235 : vector<4x256xf32>
    %237 = vector.extract_strided_slice %1 {offsets = [0, 0, 0], sizes = [1, 4, 4], strides = [1, 1, 1]} : vector<9x4x4xf32> to vector<1x4x4xf32>
    %238 = vector.shape_cast %237 : vector<1x4x4xf32> to vector<4x4xf32>
    %cst_69 = arith.constant dense<0.000000e+00> : vector<4x256xf32>
    %239 = tpu.matmul %238, %236, %cst_69 {dimension_numbers = #tpu.dot_dimension_numbers<[1], [0], [0], [1], [0, 0, 1, 1], [], []>} : vector<4x4xf32>, vector<4x256xf32>, vector<4x256xf32> -> vector<4x256xf32>
    %240 = arith.addf %232, %239 : vector<4x256xf32>
    %c16_i32_70 = arith.constant 16 : i32
    %241 = tpu.dynamic_rotate %231 by %c16_i32_70 dim 1 : vector<4x256xf32>, i32 -> vector<4x256xf32>
    %242 = vector.extract_strided_slice %4 {offsets = [1, 0], sizes = [1, 256], strides = [1, 1]} : vector<9x256xf32> to vector<1x256xf32>
    %243 = vector.broadcast %242 : vector<1x256xf32> to vector<4x256xf32>
    %244 = arith.mulf %241, %243 : vector<4x256xf32>
    %245 = vector.extract_strided_slice %1 {offsets = [1, 0, 0], sizes = [1, 4, 4], strides = [1, 1, 1]} : vector<9x4x4xf32> to vector<1x4x4xf32>
    %246 = vector.shape_cast %245 : vector<1x4x4xf32> to vector<4x4xf32>
    %cst_71 = arith.constant dense<0.000000e+00> : vector<4x256xf32>
    %247 = tpu.matmul %246, %244, %cst_71 {dimension_numbers = #tpu.dot_dimension_numbers<[1], [0], [0], [1], [0, 0, 1, 1], [], []>} : vector<4x4xf32>, vector<4x256xf32>, vector<4x256xf32> -> vector<4x256xf32>
    %248 = arith.addf %240, %247 : vector<4x256xf32>
    %c15_i32_72 = arith.constant 15 : i32
    %249 = tpu.dynamic_rotate %231 by %c15_i32_72 dim 1 : vector<4x256xf32>, i32 -> vector<4x256xf32>
    %250 = vector.extract_strided_slice %4 {offsets = [2, 0], sizes = [1, 256], strides = [1, 1]} : vector<9x256xf32> to vector<1x256xf32>
    %251 = vector.broadcast %250 : vector<1x256xf32> to vector<4x256xf32>
    %252 = arith.mulf %249, %251 : vector<4x256xf32>
    %253 = vector.extract_strided_slice %1 {offsets = [2, 0, 0], sizes = [1, 4, 4], strides = [1, 1, 1]} : vector<9x4x4xf32> to vector<1x4x4xf32>
    %254 = vector.shape_cast %253 : vector<1x4x4xf32> to vector<4x4xf32>
    %cst_73 = arith.constant dense<0.000000e+00> : vector<4x256xf32>
    %255 = tpu.matmul %254, %252, %cst_73 {dimension_numbers = #tpu.dot_dimension_numbers<[1], [0], [0], [1], [0, 0, 1, 1], [], []>} : vector<4x4xf32>, vector<4x256xf32>, vector<4x256xf32> -> vector<4x256xf32>
    %256 = arith.addf %248, %255 : vector<4x256xf32>
    %c1_i32_74 = arith.constant 1 : i32
    %257 = tpu.dynamic_rotate %231 by %c1_i32_74 dim 1 : vector<4x256xf32>, i32 -> vector<4x256xf32>
    %258 = vector.extract_strided_slice %4 {offsets = [3, 0], sizes = [1, 256], strides = [1, 1]} : vector<9x256xf32> to vector<1x256xf32>
    %259 = vector.broadcast %258 : vector<1x256xf32> to vector<4x256xf32>
    %260 = arith.mulf %257, %259 : vector<4x256xf32>
    %261 = vector.extract_strided_slice %1 {offsets = [3, 0, 0], sizes = [1, 4, 4], strides = [1, 1, 1]} : vector<9x4x4xf32> to vector<1x4x4xf32>
    %262 = vector.shape_cast %261 : vector<1x4x4xf32> to vector<4x4xf32>
    %cst_75 = arith.constant dense<0.000000e+00> : vector<4x256xf32>
    %263 = tpu.matmul %262, %260, %cst_75 {dimension_numbers = #tpu.dot_dimension_numbers<[1], [0], [0], [1], [0, 0, 1, 1], [], []>} : vector<4x4xf32>, vector<4x256xf32>, vector<4x256xf32> -> vector<4x256xf32>
    %264 = arith.addf %256, %263 : vector<4x256xf32>
    %265 = vector.extract_strided_slice %1 {offsets = [4, 0, 0], sizes = [1, 4, 4], strides = [1, 1, 1]} : vector<9x4x4xf32> to vector<1x4x4xf32>
    %266 = vector.shape_cast %265 : vector<1x4x4xf32> to vector<4x4xf32>
    %cst_76 = arith.constant dense<0.000000e+00> : vector<4x256xf32>
    %267 = tpu.matmul %266, %231, %cst_76 {dimension_numbers = #tpu.dot_dimension_numbers<[1], [0], [0], [1], [0, 0, 1, 1], [], []>} : vector<4x4xf32>, vector<4x256xf32>, vector<4x256xf32> -> vector<4x256xf32>
    %268 = arith.addf %264, %267 : vector<4x256xf32>
    %c255_i32_77 = arith.constant 255 : i32
    %269 = tpu.dynamic_rotate %231 by %c255_i32_77 dim 1 : vector<4x256xf32>, i32 -> vector<4x256xf32>
    %270 = vector.extract_strided_slice %4 {offsets = [5, 0], sizes = [1, 256], strides = [1, 1]} : vector<9x256xf32> to vector<1x256xf32>
    %271 = vector.broadcast %270 : vector<1x256xf32> to vector<4x256xf32>
    %272 = arith.mulf %269, %271 : vector<4x256xf32>
    %273 = vector.extract_strided_slice %1 {offsets = [5, 0, 0], sizes = [1, 4, 4], strides = [1, 1, 1]} : vector<9x4x4xf32> to vector<1x4x4xf32>
    %274 = vector.shape_cast %273 : vector<1x4x4xf32> to vector<4x4xf32>
    %cst_78 = arith.constant dense<0.000000e+00> : vector<4x256xf32>
    %275 = tpu.matmul %274, %272, %cst_78 {dimension_numbers = #tpu.dot_dimension_numbers<[1], [0], [0], [1], [0, 0, 1, 1], [], []>} : vector<4x4xf32>, vector<4x256xf32>, vector<4x256xf32> -> vector<4x256xf32>
    %276 = arith.addf %268, %275 : vector<4x256xf32>
    %c241_i32_79 = arith.constant 241 : i32
    %277 = tpu.dynamic_rotate %231 by %c241_i32_79 dim 1 : vector<4x256xf32>, i32 -> vector<4x256xf32>
    %278 = vector.extract_strided_slice %4 {offsets = [6, 0], sizes = [1, 256], strides = [1, 1]} : vector<9x256xf32> to vector<1x256xf32>
    %279 = vector.broadcast %278 : vector<1x256xf32> to vector<4x256xf32>
    %280 = arith.mulf %277, %279 : vector<4x256xf32>
    %281 = vector.extract_strided_slice %1 {offsets = [6, 0, 0], sizes = [1, 4, 4], strides = [1, 1, 1]} : vector<9x4x4xf32> to vector<1x4x4xf32>
    %282 = vector.shape_cast %281 : vector<1x4x4xf32> to vector<4x4xf32>
    %cst_80 = arith.constant dense<0.000000e+00> : vector<4x256xf32>
    %283 = tpu.matmul %282, %280, %cst_80 {dimension_numbers = #tpu.dot_dimension_numbers<[1], [0], [0], [1], [0, 0, 1, 1], [], []>} : vector<4x4xf32>, vector<4x256xf32>, vector<4x256xf32> -> vector<4x256xf32>
    %284 = arith.addf %276, %283 : vector<4x256xf32>
    %c240_i32_81 = arith.constant 240 : i32
    %285 = tpu.dynamic_rotate %231 by %c240_i32_81 dim 1 : vector<4x256xf32>, i32 -> vector<4x256xf32>
    %286 = vector.extract_strided_slice %4 {offsets = [7, 0], sizes = [1, 256], strides = [1, 1]} : vector<9x256xf32> to vector<1x256xf32>
    %287 = vector.broadcast %286 : vector<1x256xf32> to vector<4x256xf32>
    %288 = arith.mulf %285, %287 : vector<4x256xf32>
    %289 = vector.extract_strided_slice %1 {offsets = [7, 0, 0], sizes = [1, 4, 4], strides = [1, 1, 1]} : vector<9x4x4xf32> to vector<1x4x4xf32>
    %290 = vector.shape_cast %289 : vector<1x4x4xf32> to vector<4x4xf32>
    %cst_82 = arith.constant dense<0.000000e+00> : vector<4x256xf32>
    %291 = tpu.matmul %290, %288, %cst_82 {dimension_numbers = #tpu.dot_dimension_numbers<[1], [0], [0], [1], [0, 0, 1, 1], [], []>} : vector<4x4xf32>, vector<4x256xf32>, vector<4x256xf32> -> vector<4x256xf32>
    %292 = arith.addf %284, %291 : vector<4x256xf32>
    %c239_i32_83 = arith.constant 239 : i32
    %293 = tpu.dynamic_rotate %231 by %c239_i32_83 dim 1 : vector<4x256xf32>, i32 -> vector<4x256xf32>
    %294 = vector.extract_strided_slice %4 {offsets = [8, 0], sizes = [1, 256], strides = [1, 1]} : vector<9x256xf32> to vector<1x256xf32>
    %295 = vector.broadcast %294 : vector<1x256xf32> to vector<4x256xf32>
    %296 = arith.mulf %293, %295 : vector<4x256xf32>
    %297 = vector.extract_strided_slice %1 {offsets = [8, 0, 0], sizes = [1, 4, 4], strides = [1, 1, 1]} : vector<9x4x4xf32> to vector<1x4x4xf32>
    %298 = vector.shape_cast %297 : vector<1x4x4xf32> to vector<4x4xf32>
    %cst_84 = arith.constant dense<0.000000e+00> : vector<4x256xf32>
    %299 = tpu.matmul %298, %296, %cst_84 {dimension_numbers = #tpu.dot_dimension_numbers<[1], [0], [0], [1], [0, 0, 1, 1], [], []>} : vector<4x4xf32>, vector<4x256xf32>, vector<4x256xf32> -> vector<4x256xf32>
    %300 = arith.addf %292, %299 : vector<4x256xf32>
    %301 = vector.broadcast %3 : vector<4x1xf32> to vector<4x256xf32>
    %302 = arith.addf %300, %301 : vector<4x256xf32>
    %cst_85 = arith.constant 0.000000e+00 : f32
    %303 = vector.broadcast %cst_85 : f32 to vector<4x256xf32>
    %304 = arith.maximumf %302, %303 : vector<4x256xf32>
    %305 = arith.addf %304, %158 : vector<4x256xf32>
    %c1_86 = arith.constant 1 : index
    %c0_87 = arith.constant 0 : index
    %c0_88 = arith.constant 0 : index
    %306 = vector.load %arg7[%c1_86, %c0_87, %c0_88] : memref<2x4x256xf32, #tpu.memory_space<vmem>>, vector<1x4x256xf32>
    %307 = vector.shape_cast %306 : vector<1x4x256xf32> to vector<4x256xf32>
    %308 = vector.shape_cast %305 : vector<4x256xf32> to vector<1x4x256xf32>
    tpu.vector_store %arg7[%c1_86, %c0_87, %c0_88], %308 {strides = array<i32>} : memref<2x4x256xf32, #tpu.memory_space<vmem>>, vector<1x4x256xf32>,
    return
  }
  func.func @transform_0(%arg0: i32) -> (i32, i32, i32) {
    %c0_i32 = arith.constant 0 : i32
    %c0_i32_0 = arith.constant 0 : i32
    %c0_i32_1 = arith.constant 0 : i32
    return %arg0, %c0_i32, %c0_i32_0 : i32, i32, i32
  }
  func.func @transform_1(%arg0: i32) -> (i32, i32, i32) {
    %c0_i32 = arith.constant 0 : i32
    %c0_i32_0 = arith.constant 0 : i32
    %c0_i32_1 = arith.constant 0 : i32
    %c0_i32_2 = arith.constant 0 : i32
    return %c0_i32, %c0_i32_0, %c0_i32_1 : i32, i32, i32
  }
  func.func @transform_2(%arg0: i32) -> (i32, i32) {
    %c0_i32 = arith.constant 0 : i32
    %c0_i32_0 = arith.constant 0 : i32
    %c0_i32_1 = arith.constant 0 : i32
    return %c0_i32, %c0_i32_0 : i32, i32
  }
  func.func @transform_3(%arg0: i32) -> (i32, i32, i32) {
    %c0_i32 = arith.constant 0 : i32
    %c0_i32_0 = arith.constant 0 : i32
    %c0_i32_1 = arith.constant 0 : i32
    %c0_i32_2 = arith.constant 0 : i32
    return %c0_i32, %c0_i32_0, %c0_i32_1 : i32, i32, i32
  }
  func.func @transform_4(%arg0: i32) -> (i32, i32) {
    %c0_i32 = arith.constant 0 : i32
    %c0_i32_0 = arith.constant 0 : i32
    %c0_i32_1 = arith.constant 0 : i32
    return %c0_i32, %c0_i32_0 : i32, i32
  }
  func.func @transform_5(%arg0: i32) -> (i32, i32) {
    %c0_i32 = arith.constant 0 : i32
    %c0_i32_0 = arith.constant 0 : i32
    %c0_i32_1 = arith.constant 0 : i32
    return %c0_i32, %c0_i32_0 : i32, i32
  }
  func.func @transform_6(%arg0: i32) -> (i32, i32, i32) {
    %c0_i32 = arith.constant 0 : i32
    %c0_i32_0 = arith.constant 0 : i32
    %c0_i32_1 = arith.constant 0 : i32
    return %arg0, %c0_i32, %c0_i32_0 : i32, i32, i32
  }
}

</mosaic_0001>

<llo_original>
// kernel: tpu_custom_call.1
$region0: #{tpu_custom_call.1}
  #allocation0 [shape = 'u32[]', space=smem, size = 0x4, offset = 0x4, fixed_abs, tag = 'smem constant byte address 0x4 - core index']
  #allocation1 [shape = 'u32[144,128]{1,0:T(1,128)}', space=vmem, size = 0x12000, scoped, tag = 'internal scratch']
  %s0 = inlined_call_operand.vmem [shape: f32[2,4,256], index: 0, kind: input, shape index: {}]
  %s1 = inlined_call_operand.vmem [shape: f32[9,4,4], index: 1, kind: input, shape index: {}]
  %s2 = inlined_call_operand.vmem [shape: f32[4,1], index: 2, kind: input, shape index: {}]
  %s3 = inlined_call_operand.vmem [shape: f32[9,4,4], index: 3, kind: input, shape index: {}]
  %s4 = inlined_call_operand.vmem [shape: f32[4,1], index: 4, kind: input, shape index: {}]
  %s5 = inlined_call_operand.vmem [shape: f32[9,256], index: 5, kind: input, shape index: {}]
  %s6 = inlined_call_operand.hbm [shape: f32[2,4,256], index: 6, kind: output, shape index: {}]
  %s7 = sld [smem:[#allocation0]]
  $region34: #{tpu_custom_call.1} parent=0
    _
  %s9 = ssub.s32 1, %s7
  %s10 = scalar_select 0, %s9, %s7
  $region1: #{tpu_custom_call.1} parent=0
    #allocation2 [shape = 'u8[8192]{0}', space=vmem, size = 0x2000, scoped, tag = 'output window, operand 0, single buffered']
    #allocation3 [shape = 's32[1]{0}', space=sflag, size = 0x4, scoped, tag = 'scoped memory for tpu_custom_call.1']
    %11 = vsyncpa [#allocation3], 0
    // Predicated region
    $region2: #{tpu_custom_call.1} parent=1 // pred_check
      _
    $region3: #{tpu_custom_call.1} parent=1 // pred_check_branch
      %13 = sbr.rel (0) target = $region5
    $region4: #{tpu_custom_call.1} parent=1 // pred_region
      _
    $region5: #{tpu_custom_call.1} parent=1 // pred_fallthru
      _
    // Predicated region
    $region6: #{tpu_custom_call.1} parent=1 // pred_check
      _
    $region7: #{tpu_custom_call.1} parent=1 // pred_check_branch
      %15 = sbr.rel (0) target = $region9
    $region8: #{tpu_custom_call.1} parent=1 // pred_region
      _
    $region9: #{tpu_custom_call.1} parent=1 // pred_fallthru
      _
    // Predicated region
    $region10: #{tpu_custom_call.1} parent=1 // pred_check
      _
    $region11: #{tpu_custom_call.1} parent=1 // pred_check_branch
      %17 = sbr.rel (0) target = $region13
    $region12: #{tpu_custom_call.1} parent=1 // pred_region
      _
    $region13: #{tpu_custom_call.1} parent=1 // pred_fallthru
      _
    // Predicated region
    $region14: #{tpu_custom_call.1} parent=1 // pred_check
      _
    $region15: #{tpu_custom_call.1} parent=1 // pred_check_branch
      %19 = sbr.rel (0) target = $region17
    $region16: #{tpu_custom_call.1} parent=1 // pred_region
      _
    $region17: #{tpu_custom_call.1} parent=1 // pred_fallthru
      _
    // Predicated region
    $region18: #{tpu_custom_call.1} parent=1 // pred_check
      _
    $region19: #{tpu_custom_call.1} parent=1 // pred_check_branch
      %21 = sbr.rel (0) target = $region21
    $region20: #{tpu_custom_call.1} parent=1 // pred_region
      _
    $region21: #{tpu_custom_call.1} parent=1 // pred_fallthru
      _
    // Predicated region
    $region22: #{tpu_custom_call.1} parent=1 // pred_check
      _
    $region23: #{tpu_custom_call.1} parent=1 // pred_check_branch
      %23 = sbr.rel (0) target = $region25
    $region24: #{tpu_custom_call.1} parent=1 // pred_region
      _
    $region25: #{tpu_custom_call.1} parent=1 // pred_fallthru
      _
    %v24 = vld [vmem:[%s1] sm:$0xf]
    %v25 = vld [vmem:[%s1 + $0x4] sm:$0xf]
    %v26 = vld [vmem:[%s1 + $0x8] sm:$0xf]
    %v27 = vld [vmem:[%s1 + $0xc] sm:$0xf]
    %v28 = vld [vmem:[%s1 + $0x10] sm:$0xf]
    %v29 = vld [vmem:[%s1 + $0x14] sm:$0xf]
    %v30 = vld [vmem:[%s1 + $0x18] sm:$0xf]
    %v31 = vld [vmem:[%s1 + $0x1c] sm:$0xf]
    %v32 = vld [vmem:[%s1 + $0x20] sm:$0xf]
    %v33 = vld [vmem:[%s3] sm:$0xf]
    %v34 = vld [vmem:[%s3 + $0x4] sm:$0xf]
    %v35 = vld [vmem:[%s3 + $0x8] sm:$0xf]
    %v36 = vld [vmem:[%s3 + $0xc] sm:$0xf]
    %v37 = vld [vmem:[%s3 + $0x10] sm:$0xf]
    %v38 = vld [vmem:[%s3 + $0x14] sm:$0xf]
    %v39 = vld [vmem:[%s3 + $0x18] sm:$0xf]
    %v40 = vld [vmem:[%s3 + $0x1c] sm:$0xf]
    %v41 = vld [vmem:[%s3 + $0x20] sm:$0xf]
    %v42 = vld [vmem:[%s2] sm:$0xf]
    %v43 = vld [vmem:[%s4] sm:$0xf]
    %v44 = vld [vmem:[%s5] sm:$0xff]
    %v45 = vld [vmem:[%s5 + $0x8] sm:$0xff]
    %v46 = vld [vmem:[%s5 + $0x10] sm:$0x1]
    %v47 = vld [vmem:[%s5 + $0x18] sm:$0x1]
    %v48 = vld [vmem:[%s0] sm:$0xff]
    %v50 = vcombine.high %v48, %v48
    %52 = vrot.lane.b32.xlu0 %v48, 17
    %v53 = vpop.permute.xlu0 %52
    %54 = vrot.lane.b32.xlu0 %v50, 17
    %v55 = vpop.permute.xlu0 %54
    %v56 = vlaneseq
    %v57 = vand.u32 %v56, 127
    %vm58 = vcmp.lt.s32.totalorder %v57, 17
    %v59 = vsel %vm58, %v53, %v55
    %v60 = vsel %vm58, %v55, %v53
    %v61 = vlaneseq
    %v62 = vshrl.u32 %v61, 7
    %v63 = vsub.s32 0, %v62
    %v64 = vrot.slane %v44, %v63
    %v65 = vlaneseq
    %v66 = vshrl.u32 %v65, 7
    %v67 = vsub.s32 0, %v66
    %v68 = vrot.slane %v45, %v67
    %v69 = vmul.f32 %v60, %v64
    %v70 = vmul.f32 %v59, %v68
    %71 = vrot.lane.b32.xlu0 %v48, 16
    %v72 = vpop.permute.xlu0 %71
    %73 = vrot.lane.b32.xlu0 %v50, 16
    %v74 = vpop.permute.xlu0 %73
    %vm75 = vcmp.lt.s32.totalorder %v57, 16
    %v76 = vsel %vm75, %v72, %v74
    %v77 = vsel %vm75, %v74, %v72
    %v78 = vlaneseq
    %v79 = vshrl.u32 %v78, 7
    %v80 = vsub.s32 1, %v79
    %v81 = vrot.slane %v44, %v80
    %v82 = vlaneseq
    %v83 = vshrl.u32 %v82, 7
    %v84 = vsub.s32 1, %v83
    %v85 = vrot.slane %v45, %v84
    %v86 = vmul.f32 %v77, %v81
    %v87 = vmul.f32 %v76, %v85
    %vm88 = vcmask 31744
    %v90 = vsel %vm88, %v25, 0
    %vm92 = vcmask 1043456
    %v94 = vsel %vm92, %v86, 0
    %v97 = vsel %vm92, %v87, 0
    %99 = vmatprep.subr.mxu0 0.0
    %100 = vmatpush1.msra.mxu0 0.0
    %101 = vmatprep.subr.mxu0 0.0
    %102 = vmatpush1.msra.mxu0 0.0
    %103 = vmatprep.subr.mxu0 0.0
    %104 = vmatpush1.msra.mxu0 0.0
    %105 = vmatprep.subr.mxu0 0.0
    %106 = vmatpush1.msra.mxu0 0.0
    %107 = vmatprep.subr.mxu0 0.0
    %108 = vmatpush1.msra.mxu0 0.0
    %109 = vmatprep.subr.mxu0 0.0
    %110 = vmatpush1.msra.mxu0 0.0
    %111 = vmatprep.subr.mxu0 0.0
    %112 = vmatpush1.msra.mxu0 0.0
    %113 = vmatprep.subr.mxu0 0.0
    %114 = vmatpush1.msra.mxu0 0.0
    %115 = vmatprep.subr.mxu0 0.0
    %116 = vmatpush1.msra.mxu0 0.0
    %117 = vmatprep.subr.mxu0 0.0
    %118 = vmatpush1.msra.mxu0 0.0
    %119 = vmatprep.subr.mxu0 0.0
    %120 = vmatpush1.msra.mxu0 0.0
    %121 = vmatprep.subr.mxu0 0.0
    %122 = vmatpush1.msra.mxu0 0.0
    %123 = vmatprep.subr.mxu0 0.0
    %124 = vmatpush1.msra.mxu0 0.0
    %125 = vmatprep.subr.mxu0 0.0
    %126 = vmatpush1.msra.mxu0 0.0
    %127 = vmatprep.subr.mxu0 0.0
    %128 = vmatpush1.msra.mxu0 0.0
    %129 = vmatprep.subr.mxu0 %v97
    %130 = vmatpush1.msra.mxu0 %v94
    %131 = vmatprep.subr.mxu0 0.0
    %132 = vmatpush2.msra.mxu0 0.0
    %133 = vmatprep.subr.mxu0 0.0
    %134 = vmatpush2.msra.mxu0 0.0
    %135 = vmatprep.subr.mxu0 0.0
    %136 = vmatpush2.msra.mxu0 0.0
    %137 = vmatprep.subr.mxu0 0.0
    %138 = vmatpush2.msra.mxu0 0.0
    %139 = vmatprep.subr.mxu0 0.0
    %140 = vmatpush2.msra.mxu0 0.0
    %141 = vmatprep.subr.mxu0 0.0
    %142 = vmatpush2.msra.mxu0 0.0
    %143 = vmatprep.subr.mxu0 0.0
    %144 = vmatpush2.msra.mxu0 0.0
    %145 = vmatprep.subr.mxu0 0.0
    %146 = vmatpush2.msra.mxu0 0.0
    %147 = vmatprep.subr.mxu0 0.0
    %148 = vmatpush2.msra.mxu0 0.0
    %149 = vmatprep.subr.mxu0 0.0
    %150 = vmatpush2.msra.mxu0 0.0
    %151 = vmatprep.subr.mxu0 0.0
    %152 = vmatpush2.msra.mxu0 0.0
    %153 = vmatprep.subr.mxu0 0.0
    %154 = vmatpush2.msra.mxu0 0.0
    %155 = vmatprep.subr.mxu0 0.0
    %156 = vmatpush2.msra.mxu0 0.0
    %157 = vmatprep.subr.mxu0 0.0
    %158 = vmatpush2.msra.mxu0 0.0
    %159 = vmatprep.subr.mxu0 0.0
    %160 = vmatpush2.msra.mxu0 0.0
    %161 = vmatprep.subr.mxu0 0.0
    %162 = vmatpush2.msra.mxu0 0.0
    %163 = vmatprep.mubr.f32.mxu0 0.0
    %164 = vmatmul.mubr.f32.gmra.mxu0 %v90
    %v165 = vpop.f32.mrf.mxu0
    %v166 = vadd.f32 0.0, %v165
    %v167 = vpop.f32.mrf.mxu0
    %v168 = vadd.f32 0.0, %v167
    %169 = vdwg.mxu0
    %v171 = vsel %vm88, %v24, 0
    %v174 = vsel %vm92, %v69, 0
    %v177 = vsel %vm92, %v70, 0
    %179 = vmatprep.subr.mxu0 0.0
    %180 = vmatpush1.msra.mxu0 0.0
    %181 = vmatprep.subr.mxu0 0.0
    %182 = vmatpush1.msra.mxu0 0.0
    %183 = vmatprep.subr.mxu0 0.0
    %184 = vmatpush1.msra.mxu0 0.0
    %185 = vmatprep.subr.mxu0 0.0
    %186 = vmatpush1.msra.mxu0 0.0
    %187 = vmatprep.subr.mxu0 0.0
    %188 = vmatpush1.msra.mxu0 0.0
    %189 = vmatprep.subr.mxu0 0.0
    %190 = vmatpush1.msra.mxu0 0.0
    %191 = vmatprep.subr.mxu0 0.0
    %192 = vmatpush1.msra.mxu0 0.0
    %193 = vmatprep.subr.mxu0 0.0
    %194 = vmatpush1.msra.mxu0 0.0
    %195 = vmatprep.subr.mxu0 0.0
    %196 = vmatpush1.msra.mxu0 0.0
    %197 = vmatprep.subr.mxu0 0.0
    %198 = vmatpush1.msra.mxu0 0.0
    %199 = vmatprep.subr.mxu0 0.0
    %200 = vmatpush1.msra.mxu0 0.0
    %201 = vmatprep.subr.mxu0 0.0
    %202 = vmatpush1.msra.mxu0 0.0
    %203 = vmatprep.subr.mxu0 0.0
    %204 = vmatpush1.msra.mxu0 0.0
    %205 = vmatprep.subr.mxu0 0.0
    %206 = vmatpush1.msra.mxu0 0.0
    %207 = vmatprep.subr.mxu0 0.0
    %208 = vmatpush1.msra.mxu0 0.0
    %209 = vmatprep.subr.mxu0 %v177
    %210 = vmatpush1.msra.mxu0 %v174
    %211 = vmatprep.subr.mxu0 0.0
    %212 = vmatpush2.msra.mxu0 0.0
    %213 = vmatprep.subr.mxu0 0.0
    %214 = vmatpush2.msra.mxu0 0.0
    %215 = vmatprep.subr.mxu0 0.0
    %216 = vmatpush2.msra.mxu0 0.0
    %217 = vmatprep.subr.mxu0 0.0
    %218 = vmatpush2.msra.mxu0 0.0
    %219 = vmatprep.subr.mxu0 0.0
    %220 = vmatpush2.msra.mxu0 0.0
    %221 = vmatprep.subr.mxu0 0.0
    %222 = vmatpush2.msra.mxu0 0.0
    %223 = vmatprep.subr.mxu0 0.0
    %224 = vmatpush2.msra.mxu0 0.0
    %225 = vmatprep.subr.mxu0 0.0
    %226 = vmatpush2.msra.mxu0 0.0
    %227 = vmatprep.subr.mxu0 0.0
    %228 = vmatpush2.msra.mxu0 0.0
    %229 = vmatprep.subr.mxu0 0.0
    %230 = vmatpush2.msra.mxu0 0.0
    %231 = vmatprep.subr.mxu0 0.0
    %232 = vmatpush2.msra.mxu0 0.0
    %233 = vmatprep.subr.mxu0 0.0
    %234 = vmatpush2.msra.mxu0 0.0
    %235 = vmatprep.subr.mxu0 0.0
    %236 = vmatpush2.msra.mxu0 0.0
    %237 = vmatprep.subr.mxu0 0.0
    %238 = vmatpush2.msra.mxu0 0.0
    %239 = vmatprep.subr.mxu0 0.0
    %240 = vmatpush2.msra.mxu0 0.0
    %241 = vmatprep.subr.mxu0 0.0
    %242 = vmatpush2.msra.mxu0 0.0
    %243 = vmatprep.mubr.f32.mxu0 0.0
    %244 = vmatmul.mubr.f32.gmra.mxu0 %v171
    %v245 = vpop.f32.mrf.mxu0
    %v246 = vadd.f32 %v166, %v245
    %v247 = vpop.f32.mrf.mxu0
    %v248 = vadd.f32 %v168, %v247
    %249 = vdwg.mxu0
    %250 = vrot.lane.b32.xlu0 %v48, 15
    %v251 = vpop.permute.xlu0 %250
    %252 = vrot.lane.b32.xlu0 %v50, 15
    %v253 = vpop.permute.xlu0 %252
    %vm254 = vcmp.lt.s32.totalorder %v57, 15
    %v255 = vsel %vm254, %v251, %v253
    %v256 = vsel %vm254, %v253, %v251
    %v257 = vlaneseq
    %v258 = vshrl.u32 %v257, 7
    %v259 = vsub.s32 2, %v258
    %v260 = vrot.slane %v44, %v259
    %v261 = vlaneseq
    %v262 = vshrl.u32 %v261, 7
    %v263 = vsub.s32 2, %v262
    %v264 = vrot.slane %v45, %v263
    %v265 = vmul.f32 %v256, %v260
    %v266 = vmul.f32 %v255, %v264
    %v268 = vsel %vm88, %v26, 0
    %v271 = vsel %vm92, %v265, 0
    %v274 = vsel %vm92, %v266, 0
    %276 = vmatprep.subr.mxu0 0.0
    %277 = vmatpush1.msra.mxu0 0.0
    %278 = vmatprep.subr.mxu0 0.0
    %279 = vmatpush1.msra.mxu0 0.0
    %280 = vmatprep.subr.mxu0 0.0
    %281 = vmatpush1.msra.mxu0 0.0
    %282 = vmatprep.subr.mxu0 0.0
    %283 = vmatpush1.msra.mxu0 0.0
    %284 = vmatprep.subr.mxu0 0.0
    %285 = vmatpush1.msra.mxu0 0.0
    %286 = vmatprep.subr.mxu0 0.0
    %287 = vmatpush1.msra.mxu0 0.0
    %288 = vmatprep.subr.mxu0 0.0
    %289 = vmatpush1.msra.mxu0 0.0
    %290 = vmatprep.subr.mxu0 0.0
    %291 = vmatpush1.msra.mxu0 0.0
    %292 = vmatprep.subr.mxu0 0.0
    %293 = vmatpush1.msra.mxu0 0.0
    %294 = vmatprep.subr.mxu0 0.0
    %295 = vmatpush1.msra.mxu0 0.0
    %296 = vmatprep.subr.mxu0 0.0
    %297 = vmatpush1.msra.mxu0 0.0
    %298 = vmatprep.subr.mxu0 0.0
    %299 = vmatpush1.msra.mxu0 0.0
    %300 = vmatprep.subr.mxu0 0.0
    %301 = vmatpush1.msra.mxu0 0.0
    %302 = vmatprep.subr.mxu0 0.0
    %303 = vmatpush1.msra.mxu0 0.0
    %304 = vmatprep.subr.mxu0 0.0
    %305 = vmatpush1.msra.mxu0 0.0
    %306 = vmatprep.subr.mxu0 %v274
    %307 = vmatpush1.msra.mxu0 %v271
    %308 = vmatprep.subr.mxu0 0.0
    %309 = vmatpush2.msra.mxu0 0.0
    %310 = vmatprep.subr.mxu0 0.0
    %311 = vmatpush2.msra.mxu0 0.0
    %312 = vmatprep.subr.mxu0 0.0
    %313 = vmatpush2.msra.mxu0 0.0
    %314 = vmatprep.subr.mxu0 0.0
    %315 = vmatpush2.msra.mxu0 0.0
    %316 = vmatprep.subr.mxu0 0.0
    %317 = vmatpush2.msra.mxu0 0.0
    %318 = vmatprep.subr.mxu0 0.0
    %319 = vmatpush2.msra.mxu0 0.0
    %320 = vmatprep.subr.mxu0 0.0
    %321 = vmatpush2.msra.mxu0 0.0
    %322 = vmatprep.subr.mxu0 0.0
    %323 = vmatpush2.msra.mxu0 0.0
    %324 = vmatprep.subr.mxu0 0.0
    %325 = vmatpush2.msra.mxu0 0.0
    %326 = vmatprep.subr.mxu0 0.0
    %327 = vmatpush2.msra.mxu0 0.0
    %328 = vmatprep.subr.mxu0 0.0
    %329 = vmatpush2.msra.mxu0 0.0
    %330 = vmatprep.subr.mxu0 0.0
    %331 = vmatpush2.msra.mxu0 0.0
    %332 = vmatprep.subr.mxu0 0.0
    %333 = vmatpush2.msra.mxu0 0.0
    %334 = vmatprep.subr.mxu0 0.0
    %335 = vmatpush2.msra.mxu0 0.0
    %336 = vmatprep.subr.mxu0 0.0
    %337 = vmatpush2.msra.mxu0 0.0
    %338 = vmatprep.subr.mxu0 0.0
    %339 = vmatpush2.msra.mxu0 0.0
    %340 = vmatprep.mubr.f32.mxu0 0.0
    %341 = vmatmul.mubr.f32.gmra.mxu0 %v268
    %v342 = vpop.f32.mrf.mxu0
    %v343 = vadd.f32 0.0, %v342
    %v344 = vpop.f32.mrf.mxu0
    %v345 = vadd.f32 0.0, %v344
    %346 = vdwg.mxu0
    %v347 = vadd.f32 %v246, %v343
    %v348 = vadd.f32 %v248, %v345
    %349 = vrot.lane.b32.xlu0 %v48, 1
    %v350 = vpop.permute.xlu0 %349
    %351 = vrot.lane.b32.xlu0 %v50, 1
    %v352 = vpop.permute.xlu0 %351
    %vm353 = vcmp.lt.s32.totalorder %v57, 1
    %v354 = vsel %vm353, %v350, %v352
    %v355 = vsel %vm353, %v352, %v350
    %v356 = vlaneseq
    %v357 = vshrl.u32 %v356, 7
    %v358 = vsub.s32 3, %v357
    %v359 = vrot.slane %v44, %v358
    %v360 = vlaneseq
    %v361 = vshrl.u32 %v360, 7
    %v362 = vsub.s32 3, %v361
    %v363 = vrot.slane %v45, %v362
    %v364 = vmul.f32 %v355, %v359
    %v365 = vmul.f32 %v354, %v363
    %v367 = vsel %vm88, %v27, 0
    %v370 = vsel %vm92, %v364, 0
    %v373 = vsel %vm92, %v365, 0
    %375 = vmatprep.subr.mxu0 0.0
    %376 = vmatpush1.msra.mxu0 0.0
    %377 = vmatprep.subr.mxu0 0.0
    %378 = vmatpush1.msra.mxu0 0.0
    %379 = vmatprep.subr.mxu0 0.0
    %380 = vmatpush1.msra.mxu0 0.0
    %381 = vmatprep.subr.mxu0 0.0
    %382 = vmatpush1.msra.mxu0 0.0
    %383 = vmatprep.subr.mxu0 0.0
    %384 = vmatpush1.msra.mxu0 0.0
    %385 = vmatprep.subr.mxu0 0.0
    %386 = vmatpush1.msra.mxu0 0.0
    %387 = vmatprep.subr.mxu0 0.0
    %388 = vmatpush1.msra.mxu0 0.0
    %389 = vmatprep.subr.mxu0 0.0
    %390 = vmatpush1.msra.mxu0 0.0
    %391 = vmatprep.subr.mxu0 0.0
    %392 = vmatpush1.msra.mxu0 0.0
    %393 = vmatprep.subr.mxu0 0.0
    %394 = vmatpush1.msra.mxu0 0.0
    %395 = vmatprep.subr.mxu0 0.0
    %396 = vmatpush1.msra.mxu0 0.0
    %397 = vmatprep.subr.mxu0 0.0
    %398 = vmatpush1.msra.mxu0 0.0
    %399 = vmatprep.subr.mxu0 0.0
    %400 = vmatpush1.msra.mxu0 0.0
    %401 = vmatprep.subr.mxu0 0.0
    %402 = vmatpush1.msra.mxu0 0.0
    %403 = vmatprep.subr.mxu0 0.0
    %404 = vmatpush1.msra.mxu0 0.0
    %405 = vmatprep.subr.mxu0 %v373
    %406 = vmatpush1.msra.mxu0 %v370
    %407 = vmatprep.subr.mxu0 0.0
    %408 = vmatpush2.msra.mxu0 0.0
    %409 = vmatprep.subr.mxu0 0.0
    %410 = vmatpush2.msra.mxu0 0.0
    %411 = vmatprep.subr.mxu0 0.0
    %412 = vmatpush2.msra.mxu0 0.0
    %413 = vmatprep.subr.mxu0 0.0
    %414 = vmatpush2.msra.mxu0 0.0
    %415 = vmatprep.subr.mxu0 0.0
    %416 = vmatpush2.msra.mxu0 0.0
    %417 = vmatprep.subr.mxu0 0.0
    %418 = vmatpush2.msra.mxu0 0.0
    %419 = vmatprep.subr.mxu0 0.0
    %420 = vmatpush2.msra.mxu0 0.0
    %421 = vmatprep.subr.mxu0 0.0
    %422 = vmatpush2.msra.mxu0 0.0
    %423 = vmatprep.subr.mxu0 0.0
    %424 = vmatpush2.msra.mxu0 0.0
    %425 = vmatprep.subr.mxu0 0.0
    %426 = vmatpush2.msra.mxu0 0.0
    %427 = vmatprep.subr.mxu0 0.0
    %428 = vmatpush2.msra.mxu0 0.0
    %429 = vmatprep.subr.mxu0 0.0
    %430 = vmatpush2.msra.mxu0 0.0
    %431 = vmatprep.subr.mxu0 0.0
    %432 = vmatpush2.msra.mxu0 0.0
    %433 = vmatprep.subr.mxu0 0.0
    %434 = vmatpush2.msra.mxu0 0.0
    %435 = vmatprep.subr.mxu0 0.0
    %436 = vmatpush2.msra.mxu0 0.0
    %437 = vmatprep.subr.mxu0 0.0
    %438 = vmatpush2.msra.mxu0 0.0
    %439 = vmatprep.mubr.f32.mxu0 0.0
    %440 = vmatmul.mubr.f32.gmra.mxu0 %v367
    %v441 = vpop.f32.mrf.mxu0
    %v442 = vadd.f32 0.0, %v441
    %v443 = vpop.f32.mrf.mxu0
    %v444 = vadd.f32 0.0, %v443
    %445 = vdwg.mxu0
    %v446 = vadd.f32 %v347, %v442
    %v447 = vadd.f32 %v348, %v444
    %v449 = vsel %vm88, %v28, 0
    %v451 = vsel %vm92, %v48, 0
    %v453 = vsel %vm92, %v50, 0
    %455 = vmatprep.subr.mxu0 0.0
    %456 = vmatpush1.msra.mxu0 0.0
    %457 = vmatprep.subr.mxu0 0.0
    %458 = vmatpush1.msra.mxu0 0.0
    %459 = vmatprep.subr.mxu0 0.0
    %460 = vmatpush1.msra.mxu0 0.0
    %461 = vmatprep.subr.mxu0 0.0
    %462 = vmatpush1.msra.mxu0 0.0
    %463 = vmatprep.subr.mxu0 0.0
    %464 = vmatpush1.msra.mxu0 0.0
    %465 = vmatprep.subr.mxu0 0.0
    %466 = vmatpush1.msra.mxu0 0.0
    %467 = vmatprep.subr.mxu0 0.0
    %468 = vmatpush1.msra.mxu0 0.0
    %469 = vmatprep.subr.mxu0 0.0
    %470 = vmatpush1.msra.mxu0 0.0
    %471 = vmatprep.subr.mxu0 0.0
    %472 = vmatpush1.msra.mxu0 0.0
    %473 = vmatprep.subr.mxu0 0.0
    %474 = vmatpush1.msra.mxu0 0.0
    %475 = vmatprep.subr.mxu0 0.0
    %476 = vmatpush1.msra.mxu0 0.0
    %477 = vmatprep.subr.mxu0 0.0
    %478 = vmatpush1.msra.mxu0 0.0
    %479 = vmatprep.subr.mxu0 0.0
    %480 = vmatpush1.msra.mxu0 0.0
    %481 = vmatprep.subr.mxu0 0.0
    %482 = vmatpush1.msra.mxu0 0.0
    %483 = vmatprep.subr.mxu0 0.0
    %484 = vmatpush1.msra.mxu0 0.0
    %485 = vmatprep.subr.mxu0 %v453
    %486 = vmatpush1.msra.mxu0 %v451
    %487 = vmatprep.subr.mxu0 0.0
    %488 = vmatpush2.msra.mxu0 0.0
    %489 = vmatprep.subr.mxu0 0.0
    %490 = vmatpush2.msra.mxu0 0.0
    %491 = vmatprep.subr.mxu0 0.0
    %492 = vmatpush2.msra.mxu0 0.0
    %493 = vmatprep.subr.mxu0 0.0
    %494 = vmatpush2.msra.mxu0 0.0
    %495 = vmatprep.subr.mxu0 0.0
    %496 = vmatpush2.msra.mxu0 0.0
    %497 = vmatprep.subr.mxu0 0.0
    %498 = vmatpush2.msra.mxu0 0.0
    %499 = vmatprep.subr.mxu0 0.0
    %500 = vmatpush2.msra.mxu0 0.0
    %501 = vmatprep.subr.mxu0 0.0
    %502 = vmatpush2.msra.mxu0 0.0
    %503 = vmatprep.subr.mxu0 0.0
    %504 = vmatpush2.msra.mxu0 0.0
    %505 = vmatprep.subr.mxu0 0.0
    %506 = vmatpush2.msra.mxu0 0.0
    %507 = vmatprep.subr.mxu0 0.0
    %508 = vmatpush2.msra.mxu0 0.0
    %509 = vmatprep.subr.mxu0 0.0
    %510 = vmatpush2.msra.mxu0 0.0
    %511 = vmatprep.subr.mxu0 0.0
    %512 = vmatpush2.msra.mxu0 0.0
    %513 = vmatprep.subr.mxu0 0.0
    %514 = vmatpush2.msra.mxu0 0.0
    %515 = vmatprep.subr.mxu0 0.0
    %516 = vmatpush2.msra.mxu0 0.0
    %517 = vmatprep.subr.mxu0 0.0
    %518 = vmatpush2.msra.mxu0 0.0
    %519 = vmatprep.mubr.f32.mxu0 0.0
    %520 = vmatmul.mubr.f32.gmra.mxu0 %v449
    %v521 = vpop.f32.mrf.mxu0
    %v522 = vadd.f32 0.0, %v521
    %v523 = vpop.f32.mrf.mxu0
    %v524 = vadd.f32 0.0, %v523
    %525 = vdwg.mxu0
    %v526 = vadd.f32 %v446, %v522
    %v527 = vadd.f32 %v447, %v524
    %528 = vrot.lane.b32.xlu0 %v48, 127
    %v529 = vpop.permute.xlu0 %528
    %530 = vrot.lane.b32.xlu0 %v50, 127
    %v531 = vpop.permute.xlu0 %530
    %vm532 = vcmp.lt.s32.totalorder %v57, 127
    %v533 = vsel %vm532, %v529, %v531
    %v534 = vsel %vm532, %v531, %v529
    %v535 = vlaneseq
    %v536 = vshrl.u32 %v535, 7
    %v537 = vsub.s32 5, %v536
    %v538 = vrot.slane %v44, %v537
    %v539 = vlaneseq
    %v540 = vshrl.u32 %v539, 7
    %v541 = vsub.s32 5, %v540
    %v542 = vrot.slane %v45, %v541
    %v543 = vmul.f32 %v533, %v538
    %v544 = vmul.f32 %v534, %v542
    %v546 = vsel %vm88, %v29, 0
    %v549 = vsel %vm92, %v543, 0
    %v552 = vsel %vm92, %v544, 0
    %554 = vmatprep.subr.mxu0 0.0
    %555 = vmatpush1.msra.mxu0 0.0
    %556 = vmatprep.subr.mxu0 0.0
    %557 = vmatpush1.msra.mxu0 0.0
    %558 = vmatprep.subr.mxu0 0.0
    %559 = vmatpush1.msra.mxu0 0.0
    %560 = vmatprep.subr.mxu0 0.0
    %561 = vmatpush1.msra.mxu0 0.0
    %562 = vmatprep.subr.mxu0 0.0
    %563 = vmatpush1.msra.mxu0 0.0
    %564 = vmatprep.subr.mxu0 0.0
    %565 = vmatpush1.msra.mxu0 0.0
    %566 = vmatprep.subr.mxu0 0.0
    %567 = vmatpush1.msra.mxu0 0.0
    %568 = vmatprep.subr.mxu0 0.0
    %569 = vmatpush1.msra.mxu0 0.0
    %570 = vmatprep.subr.mxu0 0.0
    %571 = vmatpush1.msra.mxu0 0.0
    %572 = vmatprep.subr.mxu0 0.0
    %573 = vmatpush1.msra.mxu0 0.0
    %574 = vmatprep.subr.mxu0 0.0
    %575 = vmatpush1.msra.mxu0 0.0
    %576 = vmatprep.subr.mxu0 0.0
    %577 = vmatpush1.msra.mxu0 0.0
    %578 = vmatprep.subr.mxu0 0.0
    %579 = vmatpush1.msra.mxu0 0.0
    %580 = vmatprep.subr.mxu0 0.0
    %581 = vmatpush1.msra.mxu0 0.0
    %582 = vmatprep.subr.mxu0 0.0
    %583 = vmatpush1.msra.mxu0 0.0
    %584 = vmatprep.subr.mxu0 %v552
    %585 = vmatpush1.msra.mxu0 %v549
    %586 = vmatprep.subr.mxu0 0.0
    %587 = vmatpush2.msra.mxu0 0.0
    %588 = vmatprep.subr.mxu0 0.0
    %589 = vmatpush2.msra.mxu0 0.0
    %590 = vmatprep.subr.mxu0 0.0
    %591 = vmatpush2.msra.mxu0 0.0
    %592 = vmatprep.subr.mxu0 0.0
    %593 = vmatpush2.msra.mxu0 0.0
    %594 = vmatprep.subr.mxu0 0.0
    %595 = vmatpush2.msra.mxu0 0.0
    %596 = vmatprep.subr.mxu0 0.0
    %597 = vmatpush2.msra.mxu0 0.0
    %598 = vmatprep.subr.mxu0 0.0
    %599 = vmatpush2.msra.mxu0 0.0
    %600 = vmatprep.subr.mxu0 0.0
    %601 = vmatpush2.msra.mxu0 0.0
    %602 = vmatprep.subr.mxu0 0.0
    %603 = vmatpush2.msra.mxu0 0.0
    %604 = vmatprep.subr.mxu0 0.0
    %605 = vmatpush2.msra.mxu0 0.0
    %606 = vmatprep.subr.mxu0 0.0
    %607 = vmatpush2.msra.mxu0 0.0
    %608 = vmatprep.subr.mxu0 0.0
    %609 = vmatpush2.msra.mxu0 0.0
    %610 = vmatprep.subr.mxu0 0.0
    %611 = vmatpush2.msra.mxu0 0.0
    %612 = vmatprep.subr.mxu0 0.0
    %613 = vmatpush2.msra.mxu0 0.0
    %614 = vmatprep.subr.mxu0 0.0
    %615 = vmatpush2.msra.mxu0 0.0
    %616 = vmatprep.subr.mxu0 0.0
    %617 = vmatpush2.msra.mxu0 0.0
    %618 = vmatprep.mubr.f32.mxu0 0.0
    %619 = vmatmul.mubr.f32.gmra.mxu0 %v546
    %v620 = vpop.f32.mrf.mxu0
    %v621 = vadd.f32 0.0, %v620
    %v622 = vpop.f32.mrf.mxu0
    %v623 = vadd.f32 0.0, %v622
    %624 = vdwg.mxu0
    %v625 = vadd.f32 %v526, %v621
    %v626 = vadd.f32 %v527, %v623
    %627 = vrot.lane.b32.xlu0 %v48, 113
    %v628 = vpop.permute.xlu0 %627
    %629 = vrot.lane.b32.xlu0 %v50, 113
    %v630 = vpop.permute.xlu0 %629
    %vm631 = vcmp.lt.s32.totalorder %v57, 113
    %v632 = vsel %vm631, %v628, %v630
    %v633 = vsel %vm631, %v630, %v628
    %v634 = vlaneseq
    %v635 = vshrl.u32 %v634, 7
    %v636 = vsub.s32 6, %v635
    %v637 = vrot.slane %v44, %v636
    %v638 = vlaneseq
    %v639 = vshrl.u32 %v638, 7
    %v640 = vsub.s32 6, %v639
    %v641 = vrot.slane %v45, %v640
    %v642 = vmul.f32 %v632, %v637
    %v643 = vmul.f32 %v633, %v641
    %v645 = vsel %vm88, %v30, 0
    %v648 = vsel %vm92, %v642, 0
    %v651 = vsel %vm92, %v643, 0
    %653 = vmatprep.subr.mxu0 0.0
    %654 = vmatpush1.msra.mxu0 0.0
    %655 = vmatprep.subr.mxu0 0.0
    %656 = vmatpush1.msra.mxu0 0.0
    %657 = vmatprep.subr.mxu0 0.0
    %658 = vmatpush1.msra.mxu0 0.0
    %659 = vmatprep.subr.mxu0 0.0
    %660 = vmatpush1.msra.mxu0 0.0
    %661 = vmatprep.subr.mxu0 0.0
    %662 = vmatpush1.msra.mxu0 0.0
    %663 = vmatprep.subr.mxu0 0.0
    %664 = vmatpush1.msra.mxu0 0.0
    %665 = vmatprep.subr.mxu0 0.0
    %666 = vmatpush1.msra.mxu0 0.0
    %667 = vmatprep.subr.mxu0 0.0
    %668 = vmatpush1.msra.mxu0 0.0
    %669 = vmatprep.subr.mxu0 0.0
    %670 = vmatpush1.msra.mxu0 0.0
    %671 = vmatprep.subr.mxu0 0.0
    %672 = vmatpush1.msra.mxu0 0.0
    %673 = vmatprep.subr.mxu0 0.0
    %674 = vmatpush1.msra.mxu0 0.0
    %675 = vmatprep.subr.mxu0 0.0
    %676 = vmatpush1.msra.mxu0 0.0
    %677 = vmatprep.subr.mxu0 0.0
    %678 = vmatpush1.msra.mxu0 0.0
    %679 = vmatprep.subr.mxu0 0.0
    %680 = vmatpush1.msra.mxu0 0.0
    %681 = vmatprep.subr.mxu0 0.0
    %682 = vmatpush1.msra.mxu0 0.0
    %683 = vmatprep.subr.mxu0 %v651
    %684 = vmatpush1.msra.mxu0 %v648
    %685 = vmatprep.subr.mxu0 0.0
    %686 = vmatpush2.msra.mxu0 0.0
    %687 = vmatprep.subr.mxu0 0.0
    %688 = vmatpush2.msra.mxu0 0.0
    %689 = vmatprep.subr.mxu0 0.0
    %690 = vmatpush2.msra.mxu0 0.0
    %691 = vmatprep.subr.mxu0 0.0
    %692 = vmatpush2.msra.mxu0 0.0
    %693 = vmatprep.subr.mxu0 0.0
    %694 = vmatpush2.msra.mxu0 0.0
    %695 = vmatprep.subr.mxu0 0.0
    %696 = vmatpush2.msra.mxu0 0.0
    %697 = vmatprep.subr.mxu0 0.0
    %698 = vmatpush2.msra.mxu0 0.0
    %699 = vmatprep.subr.mxu0 0.0
    %700 = vmatpush2.msra.mxu0 0.0
    %701 = vmatprep.subr.mxu0 0.0
    %702 = vmatpush2.msra.mxu0 0.0
    %703 = vmatprep.subr.mxu0 0.0
    %704 = vmatpush2.msra.mxu0 0.0
    %705 = vmatprep.subr.mxu0 0.0
    %706 = vmatpush2.msra.mxu0 0.0
    %707 = vmatprep.subr.mxu0 0.0
    %708 = vmatpush2.msra.mxu0 0.0
    %709 = vmatprep.subr.mxu0 0.0
    %710 = vmatpush2.msra.mxu0 0.0
    %711 = vmatprep.subr.mxu0 0.0
    %712 = vmatpush2.msra.mxu0 0.0
    %713 = vmatprep.subr.mxu0 0.0
    %714 = vmatpush2.msra.mxu0 0.0
    %715 = vmatprep.subr.mxu0 0.0
    %716 = vmatpush2.msra.mxu0 0.0
    %717 = vmatprep.mubr.f32.mxu0 0.0
    %718 = vmatmul.mubr.f32.gmra.mxu0 %v645
    %v719 = vpop.f32.mrf.mxu0
    %v720 = vadd.f32 0.0, %v719
    %v721 = vpop.f32.mrf.mxu0
    %v722 = vadd.f32 0.0, %v721
    %723 = vdwg.mxu0
    %v724 = vadd.f32 %v625, %v720
    %v725 = vadd.f32 %v626, %v722
    %726 = vrot.lane.b32.xlu0 %v48, 112
    %v727 = vpop.permute.xlu0 %726
    %728 = vrot.lane.b32.xlu0 %v50, 112
    %v729 = vpop.permute.xlu0 %728
    %vm730 = vcmp.lt.s32.totalorder %v57, 112
    %v731 = vsel %vm730, %v727, %v729
    %v732 = vsel %vm730, %v729, %v727
    %v733 = vlaneseq
    %v734 = vshrl.u32 %v733, 7
    %v735 = vsub.s32 7, %v734
    %v736 = vrot.slane %v44, %v735
    %v737 = vlaneseq
    %v738 = vshrl.u32 %v737, 7
    %v739 = vsub.s32 7, %v738
    %v740 = vrot.slane %v45, %v739
    %v741 = vmul.f32 %v731, %v736
    %v742 = vmul.f32 %v732, %v740
    %v744 = vsel %vm88, %v31, 0
    %v747 = vsel %vm92, %v741, 0
    %v750 = vsel %vm92, %v742, 0
    %752 = vmatprep.subr.mxu0 0.0
    %753 = vmatpush1.msra.mxu0 0.0
    %754 = vmatprep.subr.mxu0 0.0
    %755 = vmatpush1.msra.mxu0 0.0
    %756 = vmatprep.subr.mxu0 0.0
    %757 = vmatpush1.msra.mxu0 0.0
    %758 = vmatprep.subr.mxu0 0.0
    %759 = vmatpush1.msra.mxu0 0.0
    %760 = vmatprep.subr.mxu0 0.0
    %761 = vmatpush1.msra.mxu0 0.0
    %762 = vmatprep.subr.mxu0 0.0
    %763 = vmatpush1.msra.mxu0 0.0
    %764 = vmatprep.subr.mxu0 0.0
    %765 = vmatpush1.msra.mxu0 0.0
    %766 = vmatprep.subr.mxu0 0.0
    %767 = vmatpush1.msra.mxu0 0.0
    %768 = vmatprep.subr.mxu0 0.0
    %769 = vmatpush1.msra.mxu0 0.0
    %770 = vmatprep.subr.mxu0 0.0
    %771 = vmatpush1.msra.mxu0 0.0
    %772 = vmatprep.subr.mxu0 0.0
    %773 = vmatpush1.msra.mxu0 0.0
    %774 = vmatprep.subr.mxu0 0.0
    %775 = vmatpush1.msra.mxu0 0.0
    %776 = vmatprep.subr.mxu0 0.0
    %777 = vmatpush1.msra.mxu0 0.0
    %778 = vmatprep.subr.mxu0 0.0
    %779 = vmatpush1.msra.mxu0 0.0
    %780 = vmatprep.subr.mxu0 0.0
    %781 = vmatpush1.msra.mxu0 0.0
    %782 = vmatprep.subr.mxu0 %v750
    %783 = vmatpush1.msra.mxu0 %v747
    %784 = vmatprep.subr.mxu0 0.0
    %785 = vmatpush2.msra.mxu0 0.0
    %786 = vmatprep.subr.mxu0 0.0
    %787 = vmatpush2.msra.mxu0 0.0
    %788 = vmatprep.subr.mxu0 0.0
    %789 = vmatpush2.msra.mxu0 0.0
    %790 = vmatprep.subr.mxu0 0.0
    %791 = vmatpush2.msra.mxu0 0.0
    %792 = vmatprep.subr.mxu0 0.0
    %793 = vmatpush2.msra.mxu0 0.0
    %794 = vmatprep.subr.mxu0 0.0
    %795 = vmatpush2.msra.mxu0 0.0
    %796 = vmatprep.subr.mxu0 0.0
    %797 = vmatpush2.msra.mxu0 0.0
    %798 = vmatprep.subr.mxu0 0.0
    %799 = vmatpush2.msra.mxu0 0.0
    %800 = vmatprep.subr.mxu0 0.0
    %801 = vmatpush2.msra.mxu0 0.0
    %802 = vmatprep.subr.mxu0 0.0
    %803 = vmatpush2.msra.mxu0 0.0
    %804 = vmatprep.subr.mxu0 0.0
    %805 = vmatpush2.msra.mxu0 0.0
    %806 = vmatprep.subr.mxu0 0.0
    %807 = vmatpush2.msra.mxu0 0.0
    %808 = vmatprep.subr.mxu0 0.0
    %809 = vmatpush2.msra.mxu0 0.0
    %810 = vmatprep.subr.mxu0 0.0
    %811 = vmatpush2.msra.mxu0 0.0
    %812 = vmatprep.subr.mxu0 0.0
    %813 = vmatpush2.msra.mxu0 0.0
    %814 = vmatprep.subr.mxu0 0.0
    %815 = vmatpush2.msra.mxu0 0.0
    %816 = vmatprep.mubr.f32.mxu0 0.0
    %817 = vmatmul.mubr.f32.gmra.mxu0 %v744
    %v818 = vpop.f32.mrf.mxu0
    %v819 = vadd.f32 0.0, %v818
    %v820 = vpop.f32.mrf.mxu0
    %v821 = vadd.f32 0.0, %v820
    %822 = vdwg.mxu0
    %v823 = vadd.f32 %v724, %v819
    %v824 = vadd.f32 %v725, %v821
    %825 = vrot.lane.b32.xlu0 %v48, 111
    %v826 = vpop.permute.xlu0 %825
    %827 = vrot.lane.b32.xlu0 %v50, 111
    %v828 = vpop.permute.xlu0 %827
    %vm829 = vcmp.lt.s32.totalorder %v57, 111
    %v830 = vsel %vm829, %v826, %v828
    %v831 = vsel %vm829, %v828, %v826
    %v832 = vlaneseq
    %v833 = vshrl.u32 %v832, 7
    %v834 = vsub.s32 0, %v833
    %v835 = vrot.slane %v46, %v834
    %v836 = vlaneseq
    %v837 = vshrl.u32 %v836, 7
    %v838 = vsub.s32 0, %v837
    %v839 = vrot.slane %v47, %v838
    %v840 = vmul.f32 %v830, %v835
    %v841 = vmul.f32 %v831, %v839
    %v843 = vsel %vm88, %v32, 0
    %v846 = vsel %vm92, %v840, 0
    %v849 = vsel %vm92, %v841, 0
    %851 = vmatprep.subr.mxu0 0.0
    %852 = vmatpush1.msra.mxu0 0.0
    %853 = vmatprep.subr.mxu0 0.0
    %854 = vmatpush1.msra.mxu0 0.0
    %855 = vmatprep.subr.mxu0 0.0
    %856 = vmatpush1.msra.mxu0 0.0
    %857 = vmatprep.subr.mxu0 0.0
    %858 = vmatpush1.msra.mxu0 0.0
    %859 = vmatprep.subr.mxu0 0.0
    %860 = vmatpush1.msra.mxu0 0.0
    %861 = vmatprep.subr.mxu0 0.0
    %862 = vmatpush1.msra.mxu0 0.0
    %863 = vmatprep.subr.mxu0 0.0
    %864 = vmatpush1.msra.mxu0 0.0
    %865 = vmatprep.subr.mxu0 0.0
    %866 = vmatpush1.msra.mxu0 0.0
    %867 = vmatprep.subr.mxu0 0.0
    %868 = vmatpush1.msra.mxu0 0.0
    %869 = vmatprep.subr.mxu0 0.0
    %870 = vmatpush1.msra.mxu0 0.0
    %871 = vmatprep.subr.mxu0 0.0
    %872 = vmatpush1.msra.mxu0 0.0
    %873 = vmatprep.subr.mxu0 0.0
    %874 = vmatpush1.msra.mxu0 0.0
    %875 = vmatprep.subr.mxu0 0.0
    %876 = vmatpush1.msra.mxu0 0.0
    %877 = vmatprep.subr.mxu0 0.0
    %878 = vmatpush1.msra.mxu0 0.0
    %879 = vmatprep.subr.mxu0 0.0
    %880 = vmatpush1.msra.mxu0 0.0
    %881 = vmatprep.subr.mxu0 %v849
    %882 = vmatpush1.msra.mxu0 %v846
    %883 = vmatprep.subr.mxu0 0.0
    %884 = vmatpush2.msra.mxu0 0.0
    %885 = vmatprep.subr.mxu0 0.0
    %886 = vmatpush2.msra.mxu0 0.0
    %887 = vmatprep.subr.mxu0 0.0
    %888 = vmatpush2.msra.mxu0 0.0
    %889 = vmatprep.subr.mxu0 0.0
    %890 = vmatpush2.msra.mxu0 0.0
    %891 = vmatprep.subr.mxu0 0.0
    %892 = vmatpush2.msra.mxu0 0.0
    %893 = vmatprep.subr.mxu0 0.0
    %894 = vmatpush2.msra.mxu0 0.0
    %895 = vmatprep.subr.mxu0 0.0
    %896 = vmatpush2.msra.mxu0 0.0
    %897 = vmatprep.subr.mxu0 0.0
    %898 = vmatpush2.msra.mxu0 0.0
    %899 = vmatprep.subr.mxu0 0.0
    %900 = vmatpush2.msra.mxu0 0.0
    %901 = vmatprep.subr.mxu0 0.0
    %902 = vmatpush2.msra.mxu0 0.0
    %903 = vmatprep.subr.mxu0 0.0
    %904 = vmatpush2.msra.mxu0 0.0
    %905 = vmatprep.subr.mxu0 0.0
    %906 = vmatpush2.msra.mxu0 0.0
    %907 = vmatprep.subr.mxu0 0.0
    %908 = vmatpush2.msra.mxu0 0.0
    %909 = vmatprep.subr.mxu0 0.0
    %910 = vmatpush2.msra.mxu0 0.0
    %911 = vmatprep.subr.mxu0 0.0
    %912 = vmatpush2.msra.mxu0 0.0
    %913 = vmatprep.subr.mxu0 0.0
    %914 = vmatpush2.msra.mxu0 0.0
    %915 = vmatprep.mubr.f32.mxu0 0.0
    %916 = vmatmul.mubr.f32.gmra.mxu0 %v843
    %v917 = vpop.f32.mrf.mxu0
    %v918 = vadd.f32 0.0, %v917
    %v919 = vpop.f32.mrf.mxu0
    %v920 = vadd.f32 0.0, %v919
    %921 = vdwg.mxu0
    %v922 = vadd.f32 %v823, %v918
    %v923 = vadd.f32 %v824, %v920
    %925 = vset.pattern.permute.xlu0 0
    %926 = vperm.xlu0 %925, %v42
    %v927 = vpop.permute.xlu0 %926
    %v929 = vadd.f32 %v922, %v927
    %v930 = vadd.f32 %v923, %v927
    %v931 = vmax.f32 %v929, 0.0
    %v932 = vmax.f32 %v930, 0.0
    %933 = vrot.lane.b32.xlu0 %v931, 17
    %v934 = vpop.permute.xlu0 %933
    %935 = vrot.lane.b32.xlu0 %v932, 17
    %v936 = vpop.permute.xlu0 %935
    %v937 = vsel %vm58, %v934, %v936
    %v938 = vsel %vm58, %v936, %v934
    %v939 = vmul.f32 %v938, %v64
    %v940 = vmul.f32 %v937, %v68
    %941 = vrot.lane.b32.xlu0 %v931, 16
    %v942 = vpop.permute.xlu0 %941
    %943 = vrot.lane.b32.xlu0 %v932, 16
    %v944 = vpop.permute.xlu0 %943
    %v945 = vsel %vm75, %v942, %v944
    %v946 = vsel %vm75, %v944, %v942
    %v947 = vmul.f32 %v946, %v81
    %v948 = vmul.f32 %v945, %v85
    %v950 = vsel %vm88, %v34, 0
    %v953 = vsel %vm92, %v947, 0
    %v956 = vsel %vm92, %v948, 0
    %958 = vmatprep.subr.mxu0 0.0
    %959 = vmatpush1.msra.mxu0 0.0
    %960 = vmatprep.subr.mxu0 0.0
    %961 = vmatpush1.msra.mxu0 0.0
    %962 = vmatprep.subr.mxu0 0.0
    %963 = vmatpush1.msra.mxu0 0.0
    %964 = vmatprep.subr.mxu0 0.0
    %965 = vmatpush1.msra.mxu0 0.0
    %966 = vmatprep.subr.mxu0 0.0
    %967 = vmatpush1.msra.mxu0 0.0
    %968 = vmatprep.subr.mxu0 0.0
    %969 = vmatpush1.msra.mxu0 0.0
    %970 = vmatprep.subr.mxu0 0.0
    %971 = vmatpush1.msra.mxu0 0.0
    %972 = vmatprep.subr.mxu0 0.0
    %973 = vmatpush1.msra.mxu0 0.0
    %974 = vmatprep.subr.mxu0 0.0
    %975 = vmatpush1.msra.mxu0 0.0
    %976 = vmatprep.subr.mxu0 0.0
    %977 = vmatpush1.msra.mxu0 0.0
    %978 = vmatprep.subr.mxu0 0.0
    %979 = vmatpush1.msra.mxu0 0.0
    %980 = vmatprep.subr.mxu0 0.0
    %981 = vmatpush1.msra.mxu0 0.0
    %982 = vmatprep.subr.mxu0 0.0
    %983 = vmatpush1.msra.mxu0 0.0
    %984 = vmatprep.subr.mxu0 0.0
    %985 = vmatpush1.msra.mxu0 0.0
    %986 = vmatprep.subr.mxu0 0.0
    %987 = vmatpush1.msra.mxu0 0.0
    %988 = vmatprep.subr.mxu0 %v956
    %989 = vmatpush1.msra.mxu0 %v953
    %990 = vmatprep.subr.mxu0 0.0
    %991 = vmatpush2.msra.mxu0 0.0
    %992 = vmatprep.subr.mxu0 0.0
    %993 = vmatpush2.msra.mxu0 0.0
    %994 = vmatprep.subr.mxu0 0.0
    %995 = vmatpush2.msra.mxu0 0.0
    %996 = vmatprep.subr.mxu0 0.0
    %997 = vmatpush2.msra.mxu0 0.0
    %998 = vmatprep.subr.mxu0 0.0
    %999 = vmatpush2.msra.mxu0 0.0
    %1000 = vmatprep.subr.mxu0 0.0
    %1001 = vmatpush2.msra.mxu0 0.0
    %1002 = vmatprep.subr.mxu0 0.0
    %1003 = vmatpush2.msra.mxu0 0.0
    %1004 = vmatprep.subr.mxu0 0.0
    %1005 = vmatpush2.msra.mxu0 0.0
    %1006 = vmatprep.subr.mxu0 0.0
    %1007 = vmatpush2.msra.mxu0 0.0
    %1008 = vmatprep.subr.mxu0 0.0
    %1009 = vmatpush2.msra.mxu0 0.0
    %1010 = vmatprep.subr.mxu0 0.0
    %1011 = vmatpush2.msra.mxu0 0.0
    %1012 = vmatprep.subr.mxu0 0.0
    %1013 = vmatpush2.msra.mxu0 0.0
    %1014 = vmatprep.subr.mxu0 0.0
    %1015 = vmatpush2.msra.mxu0 0.0
    %1016 = vmatprep.subr.mxu0 0.0
    %1017 = vmatpush2.msra.mxu0 0.0
    %1018 = vmatprep.subr.mxu0 0.0
    %1019 = vmatpush2.msra.mxu0 0.0
    %1020 = vmatprep.subr.mxu0 0.0
    %1021 = vmatpush2.msra.mxu0 0.0
    %1022 = vmatprep.mubr.f32.mxu0 0.0
    %1023 = vmatmul.mubr.f32.gmra.mxu0 %v950
    %v1024 = vpop.f32.mrf.mxu0
    %v1025 = vadd.f32 0.0, %v1024
    %v1026 = vpop.f32.mrf.mxu0
    %v1027 = vadd.f32 0.0, %v1026
    %1028 = vdwg.mxu0
    %v1030 = vsel %vm88, %v33, 0
    %v1033 = vsel %vm92, %v939, 0
    %v1036 = vsel %vm92, %v940, 0
    %1038 = vmatprep.subr.mxu0 0.0
    %1039 = vmatpush1.msra.mxu0 0.0
    %1040 = vmatprep.subr.mxu0 0.0
    %1041 = vmatpush1.msra.mxu0 0.0
    %1042 = vmatprep.subr.mxu0 0.0
    %1043 = vmatpush1.msra.mxu0 0.0
    %1044 = vmatprep.subr.mxu0 0.0
    %1045 = vmatpush1.msra.mxu0 0.0
    %1046 = vmatprep.subr.mxu0 0.0
    %1047 = vmatpush1.msra.mxu0 0.0
    %1048 = vmatprep.subr.mxu0 0.0
    %1049 = vmatpush1.msra.mxu0 0.0
    %1050 = vmatprep.subr.mxu0 0.0
    %1051 = vmatpush1.msra.mxu0 0.0
    %1052 = vmatprep.subr.mxu0 0.0
    %1053 = vmatpush1.msra.mxu0 0.0
    %1054 = vmatprep.subr.mxu0 0.0
    %1055 = vmatpush1.msra.mxu0 0.0
    %1056 = vmatprep.subr.mxu0 0.0
    %1057 = vmatpush1.msra.mxu0 0.0
    %1058 = vmatprep.subr.mxu0 0.0
    %1059 = vmatpush1.msra.mxu0 0.0
    %1060 = vmatprep.subr.mxu0 0.0
    %1061 = vmatpush1.msra.mxu0 0.0
    %1062 = vmatprep.subr.mxu0 0.0
    %1063 = vmatpush1.msra.mxu0 0.0
    %1064 = vmatprep.subr.mxu0 0.0
    %1065 = vmatpush1.msra.mxu0 0.0
    %1066 = vmatprep.subr.mxu0 0.0
    %1067 = vmatpush1.msra.mxu0 0.0
    %1068 = vmatprep.subr.mxu0 %v1036
    %1069 = vmatpush1.msra.mxu0 %v1033
    %1070 = vmatprep.subr.mxu0 0.0
    %1071 = vmatpush2.msra.mxu0 0.0
    %1072 = vmatprep.subr.mxu0 0.0
    %1073 = vmatpush2.msra.mxu0 0.0
    %1074 = vmatprep.subr.mxu0 0.0
    %1075 = vmatpush2.msra.mxu0 0.0
    %1076 = vmatprep.subr.mxu0 0.0
    %1077 = vmatpush2.msra.mxu0 0.0
    %1078 = vmatprep.subr.mxu0 0.0
    %1079 = vmatpush2.msra.mxu0 0.0
    %1080 = vmatprep.subr.mxu0 0.0
    %1081 = vmatpush2.msra.mxu0 0.0
    %1082 = vmatprep.subr.mxu0 0.0
    %1083 = vmatpush2.msra.mxu0 0.0
    %1084 = vmatprep.subr.mxu0 0.0
    %1085 = vmatpush2.msra.mxu0 0.0
    %1086 = vmatprep.subr.mxu0 0.0
    %1087 = vmatpush2.msra.mxu0 0.0
    %1088 = vmatprep.subr.mxu0 0.0
    %1089 = vmatpush2.msra.mxu0 0.0
    %1090 = vmatprep.subr.mxu0 0.0
    %1091 = vmatpush2.msra.mxu0 0.0
    %1092 = vmatprep.subr.mxu0 0.0
    %1093 = vmatpush2.msra.mxu0 0.0
    %1094 = vmatprep.subr.mxu0 0.0
    %1095 = vmatpush2.msra.mxu0 0.0
    %1096 = vmatprep.subr.mxu0 0.0
    %1097 = vmatpush2.msra.mxu0 0.0
    %1098 = vmatprep.subr.mxu0 0.0
    %1099 = vmatpush2.msra.mxu0 0.0
    %1100 = vmatprep.subr.mxu0 0.0
    %1101 = vmatpush2.msra.mxu0 0.0
    %1102 = vmatprep.mubr.f32.mxu0 0.0
    %1103 = vmatmul.mubr.f32.gmra.mxu0 %v1030
    %v1104 = vpop.f32.mrf.mxu0
    %v1105 = vadd.f32 %v1025, %v1104
    %v1106 = vpop.f32.mrf.mxu0
    %v1107 = vadd.f32 %v1027, %v1106
    %1108 = vdwg.mxu0
    %1109 = vrot.lane.b32.xlu0 %v931, 15
    %v1110 = vpop.permute.xlu0 %1109
    %1111 = vrot.lane.b32.xlu0 %v932, 15
    %v1112 = vpop.permute.xlu0 %1111
    %v1113 = vsel %vm254, %v1110, %v1112
    %v1114 = vsel %vm254, %v1112, %v1110
    %v1115 = vmul.f32 %v1114, %v260
    %v1116 = vmul.f32 %v1113, %v264
    %v1118 = vsel %vm88, %v35, 0
    %v1121 = vsel %vm92, %v1115, 0
    %v1124 = vsel %vm92, %v1116, 0
    %1126 = vmatprep.subr.mxu0 0.0
    %1127 = vmatpush1.msra.mxu0 0.0
    %1128 = vmatprep.subr.mxu0 0.0
    %1129 = vmatpush1.msra.mxu0 0.0
    %1130 = vmatprep.subr.mxu0 0.0
    %1131 = vmatpush1.msra.mxu0 0.0
    %1132 = vmatprep.subr.mxu0 0.0
    %1133 = vmatpush1.msra.mxu0 0.0
    %1134 = vmatprep.subr.mxu0 0.0
    %1135 = vmatpush1.msra.mxu0 0.0
    %1136 = vmatprep.subr.mxu0 0.0
    %1137 = vmatpush1.msra.mxu0 0.0
    %1138 = vmatprep.subr.mxu0 0.0
    %1139 = vmatpush1.msra.mxu0 0.0
    %1140 = vmatprep.subr.mxu0 0.0
    %1141 = vmatpush1.msra.mxu0 0.0
    %1142 = vmatprep.subr.mxu0 0.0
    %1143 = vmatpush1.msra.mxu0 0.0
    %1144 = vmatprep.subr.mxu0 0.0
    %1145 = vmatpush1.msra.mxu0 0.0
    %1146 = vmatprep.subr.mxu0 0.0
    %1147 = vmatpush1.msra.mxu0 0.0
    %1148 = vmatprep.subr.mxu0 0.0
    %1149 = vmatpush1.msra.mxu0 0.0
    %1150 = vmatprep.subr.mxu0 0.0
    %1151 = vmatpush1.msra.mxu0 0.0
    %1152 = vmatprep.subr.mxu0 0.0
    %1153 = vmatpush1.msra.mxu0 0.0
    %1154 = vmatprep.subr.mxu0 0.0
    %1155 = vmatpush1.msra.mxu0 0.0
    %1156 = vmatprep.subr.mxu0 %v1124
    %1157 = vmatpush1.msra.mxu0 %v1121
    %1158 = vmatprep.subr.mxu0 0.0
    %1159 = vmatpush2.msra.mxu0 0.0
    %1160 = vmatprep.subr.mxu0 0.0
    %1161 = vmatpush2.msra.mxu0 0.0
    %1162 = vmatprep.subr.mxu0 0.0
    %1163 = vmatpush2.msra.mxu0 0.0
    %1164 = vmatprep.subr.mxu0 0.0
    %1165 = vmatpush2.msra.mxu0 0.0
    %1166 = vmatprep.subr.mxu0 0.0
    %1167 = vmatpush2.msra.mxu0 0.0
    %1168 = vmatprep.subr.mxu0 0.0
    %1169 = vmatpush2.msra.mxu0 0.0
    %1170 = vmatprep.subr.mxu0 0.0
    %1171 = vmatpush2.msra.mxu0 0.0
    %1172 = vmatprep.subr.mxu0 0.0
    %1173 = vmatpush2.msra.mxu0 0.0
    %1174 = vmatprep.subr.mxu0 0.0
    %1175 = vmatpush2.msra.mxu0 0.0
    %1176 = vmatprep.subr.mxu0 0.0
    %1177 = vmatpush2.msra.mxu0 0.0
    %1178 = vmatprep.subr.mxu0 0.0
    %1179 = vmatpush2.msra.mxu0 0.0
    %1180 = vmatprep.subr.mxu0 0.0
    %1181 = vmatpush2.msra.mxu0 0.0
    %1182 = vmatprep.subr.mxu0 0.0
    %1183 = vmatpush2.msra.mxu0 0.0
    %1184 = vmatprep.subr.mxu0 0.0
    %1185 = vmatpush2.msra.mxu0 0.0
    %1186 = vmatprep.subr.mxu0 0.0
    %1187 = vmatpush2.msra.mxu0 0.0
    %1188 = vmatprep.subr.mxu0 0.0
    %1189 = vmatpush2.msra.mxu0 0.0
    %1190 = vmatprep.mubr.f32.mxu0 0.0
    %1191 = vmatmul.mubr.f32.gmra.mxu0 %v1118
    %v1192 = vpop.f32.mrf.mxu0
    %v1193 = vadd.f32 0.0, %v1192
    %v1194 = vpop.f32.mrf.mxu0
    %v1195 = vadd.f32 0.0, %v1194
    %1196 = vdwg.mxu0
    %v1197 = vadd.f32 %v1105, %v1193
    %v1198 = vadd.f32 %v1107, %v1195
    %1199 = vrot.lane.b32.xlu0 %v931, 1
    %v1200 = vpop.permute.xlu0 %1199
    %1201 = vrot.lane.b32.xlu0 %v932, 1
    %v1202 = vpop.permute.xlu0 %1201
    %v1203 = vsel %vm353, %v1200, %v1202
    %v1204 = vsel %vm353, %v1202, %v1200
    %v1205 = vmul.f32 %v1204, %v359
    %v1206 = vmul.f32 %v1203, %v363
    %v1208 = vsel %vm88, %v36, 0
    %v1211 = vsel %vm92, %v1205, 0
    %v1214 = vsel %vm92, %v1206, 0
    %1216 = vmatprep.subr.mxu0 0.0
    %1217 = vmatpush1.msra.mxu0 0.0
    %1218 = vmatprep.subr.mxu0 0.0
    %1219 = vmatpush1.msra.mxu0 0.0
    %1220 = vmatprep.subr.mxu0 0.0
    %1221 = vmatpush1.msra.mxu0 0.0
    %1222 = vmatprep.subr.mxu0 0.0
    %1223 = vmatpush1.msra.mxu0 0.0
    %1224 = vmatprep.subr.mxu0 0.0
    %1225 = vmatpush1.msra.mxu0 0.0
    %1226 = vmatprep.subr.mxu0 0.0
    %1227 = vmatpush1.msra.mxu0 0.0
    %1228 = vmatprep.subr.mxu0 0.0
    %1229 = vmatpush1.msra.mxu0 0.0
    %1230 = vmatprep.subr.mxu0 0.0
    %1231 = vmatpush1.msra.mxu0 0.0
    %1232 = vmatprep.subr.mxu0 0.0
    %1233 = vmatpush1.msra.mxu0 0.0
    %1234 = vmatprep.subr.mxu0 0.0
    %1235 = vmatpush1.msra.mxu0 0.0
    %1236 = vmatprep.subr.mxu0 0.0
    %1237 = vmatpush1.msra.mxu0 0.0
    %1238 = vmatprep.subr.mxu0 0.0
    %1239 = vmatpush1.msra.mxu0 0.0
    %1240 = vmatprep.subr.mxu0 0.0
    %1241 = vmatpush1.msra.mxu0 0.0
    %1242 = vmatprep.subr.mxu0 0.0
    %1243 = vmatpush1.msra.mxu0 0.0
    %1244 = vmatprep.subr.mxu0 0.0
    %1245 = vmatpush1.msra.mxu0 0.0
    %1246 = vmatprep.subr.mxu0 %v1214
    %1247 = vmatpush1.msra.mxu0 %v1211
    %1248 = vmatprep.subr.mxu0 0.0
    %1249 = vmatpush2.msra.mxu0 0.0
    %1250 = vmatprep.subr.mxu0 0.0
    %1251 = vmatpush2.msra.mxu0 0.0
    %1252 = vmatprep.subr.mxu0 0.0
    %1253 = vmatpush2.msra.mxu0 0.0
    %1254 = vmatprep.subr.mxu0 0.0
    %1255 = vmatpush2.msra.mxu0 0.0
    %1256 = vmatprep.subr.mxu0 0.0
    %1257 = vmatpush2.msra.mxu0 0.0
    %1258 = vmatprep.subr.mxu0 0.0
    %1259 = vmatpush2.msra.mxu0 0.0
    %1260 = vmatprep.subr.mxu0 0.0
    %1261 = vmatpush2.msra.mxu0 0.0
    %1262 = vmatprep.subr.mxu0 0.0
    %1263 = vmatpush2.msra.mxu0 0.0
    %1264 = vmatprep.subr.mxu0 0.0
    %1265 = vmatpush2.msra.mxu0 0.0
    %1266 = vmatprep.subr.mxu0 0.0
    %1267 = vmatpush2.msra.mxu0 0.0
    %1268 = vmatprep.subr.mxu0 0.0
    %1269 = vmatpush2.msra.mxu0 0.0
    %1270 = vmatprep.subr.mxu0 0.0
    %1271 = vmatpush2.msra.mxu0 0.0
    %1272 = vmatprep.subr.mxu0 0.0
    %1273 = vmatpush2.msra.mxu0 0.0
    %1274 = vmatprep.subr.mxu0 0.0
    %1275 = vmatpush2.msra.mxu0 0.0
    %1276 = vmatprep.subr.mxu0 0.0
    %1277 = vmatpush2.msra.mxu0 0.0
    %1278 = vmatprep.subr.mxu0 0.0
    %1279 = vmatpush2.msra.mxu0 0.0
    %1280 = vmatprep.mubr.f32.mxu0 0.0
    %1281 = vmatmul.mubr.f32.gmra.mxu0 %v1208
    %v1282 = vpop.f32.mrf.mxu0
    %v1283 = vadd.f32 0.0, %v1282
    %v1284 = vpop.f32.mrf.mxu0
    %v1285 = vadd.f32 0.0, %v1284
    %1286 = vdwg.mxu0
    %v1287 = vadd.f32 %v1197, %v1283
    %v1288 = vadd.f32 %v1198, %v1285
    %v1290 = vsel %vm88, %v37, 0
    %v1293 = vsel %vm92, %v931, 0
    %v1296 = vsel %vm92, %v932, 0
    %1298 = vmatprep.subr.mxu0 0.0
    %1299 = vmatpush1.msra.mxu0 0.0
    %1300 = vmatprep.subr.mxu0 0.0
    %1301 = vmatpush1.msra.mxu0 0.0
    %1302 = vmatprep.subr.mxu0 0.0
    %1303 = vmatpush1.msra.mxu0 0.0
    %1304 = vmatprep.subr.mxu0 0.0
    %1305 = vmatpush1.msra.mxu0 0.0
    %1306 = vmatprep.subr.mxu0 0.0
    %1307 = vmatpush1.msra.mxu0 0.0
    %1308 = vmatprep.subr.mxu0 0.0
    %1309 = vmatpush1.msra.mxu0 0.0
    %1310 = vmatprep.subr.mxu0 0.0
    %1311 = vmatpush1.msra.mxu0 0.0
    %1312 = vmatprep.subr.mxu0 0.0
    %1313 = vmatpush1.msra.mxu0 0.0
    %1314 = vmatprep.subr.mxu0 0.0
    %1315 = vmatpush1.msra.mxu0 0.0
    %1316 = vmatprep.subr.mxu0 0.0
    %1317 = vmatpush1.msra.mxu0 0.0
    %1318 = vmatprep.subr.mxu0 0.0
    %1319 = vmatpush1.msra.mxu0 0.0
    %1320 = vmatprep.subr.mxu0 0.0
    %1321 = vmatpush1.msra.mxu0 0.0
    %1322 = vmatprep.subr.mxu0 0.0
    %1323 = vmatpush1.msra.mxu0 0.0
    %1324 = vmatprep.subr.mxu0 0.0
    %1325 = vmatpush1.msra.mxu0 0.0
    %1326 = vmatprep.subr.mxu0 0.0
    %1327 = vmatpush1.msra.mxu0 0.0
    %1328 = vmatprep.subr.mxu0 %v1296
    %1329 = vmatpush1.msra.mxu0 %v1293
    %1330 = vmatprep.subr.mxu0 0.0
    %1331 = vmatpush2.msra.mxu0 0.0
    %1332 = vmatprep.subr.mxu0 0.0
    %1333 = vmatpush2.msra.mxu0 0.0
    %1334 = vmatprep.subr.mxu0 0.0
    %1335 = vmatpush2.msra.mxu0 0.0
    %1336 = vmatprep.subr.mxu0 0.0
    %1337 = vmatpush2.msra.mxu0 0.0
    %1338 = vmatprep.subr.mxu0 0.0
    %1339 = vmatpush2.msra.mxu0 0.0
    %1340 = vmatprep.subr.mxu0 0.0
    %1341 = vmatpush2.msra.mxu0 0.0
    %1342 = vmatprep.subr.mxu0 0.0
    %1343 = vmatpush2.msra.mxu0 0.0
    %1344 = vmatprep.subr.mxu0 0.0
    %1345 = vmatpush2.msra.mxu0 0.0
    %1346 = vmatprep.subr.mxu0 0.0
    %1347 = vmatpush2.msra.mxu0 0.0
    %1348 = vmatprep.subr.mxu0 0.0
    %1349 = vmatpush2.msra.mxu0 0.0
    %1350 = vmatprep.subr.mxu0 0.0
    %1351 = vmatpush2.msra.mxu0 0.0
    %1352 = vmatprep.subr.mxu0 0.0
    %1353 = vmatpush2.msra.mxu0 0.0
    %1354 = vmatprep.subr.mxu0 0.0
    %1355 = vmatpush2.msra.mxu0 0.0
    %1356 = vmatprep.subr.mxu0 0.0
    %1357 = vmatpush2.msra.mxu0 0.0
    %1358 = vmatprep.subr.mxu0 0.0
    %1359 = vmatpush2.msra.mxu0 0.0
    %1360 = vmatprep.subr.mxu0 0.0
    %1361 = vmatpush2.msra.mxu0 0.0
    %1362 = vmatprep.mubr.f32.mxu0 0.0
    %1363 = vmatmul.mubr.f32.gmra.mxu0 %v1290
    %v1364 = vpop.f32.mrf.mxu0
    %v1365 = vadd.f32 0.0, %v1364
    %v1366 = vpop.f32.mrf.mxu0
    %v1367 = vadd.f32 0.0, %v1366
    %1368 = vdwg.mxu0
    %v1369 = vadd.f32 %v1287, %v1365
    %v1370 = vadd.f32 %v1288, %v1367
    %1371 = vrot.lane.b32.xlu0 %v931, 127
    %v1372 = vpop.permute.xlu0 %1371
    %1373 = vrot.lane.b32.xlu0 %v932, 127
    %v1374 = vpop.permute.xlu0 %1373
    %v1375 = vsel %vm532, %v1372, %v1374
    %v1376 = vsel %vm532, %v1374, %v1372
    %v1377 = vmul.f32 %v1375, %v538
    %v1378 = vmul.f32 %v1376, %v542
    %v1380 = vsel %vm88, %v38, 0
    %v1383 = vsel %vm92, %v1377, 0
    %v1386 = vsel %vm92, %v1378, 0
    %1388 = vmatprep.subr.mxu0 0.0
    %1389 = vmatpush1.msra.mxu0 0.0
    %1390 = vmatprep.subr.mxu0 0.0
    %1391 = vmatpush1.msra.mxu0 0.0
    %1392 = vmatprep.subr.mxu0 0.0
    %1393 = vmatpush1.msra.mxu0 0.0
    %1394 = vmatprep.subr.mxu0 0.0
    %1395 = vmatpush1.msra.mxu0 0.0
    %1396 = vmatprep.subr.mxu0 0.0
    %1397 = vmatpush1.msra.mxu0 0.0
    %1398 = vmatprep.subr.mxu0 0.0
    %1399 = vmatpush1.msra.mxu0 0.0
    %1400 = vmatprep.subr.mxu0 0.0
    %1401 = vmatpush1.msra.mxu0 0.0
    %1402 = vmatprep.subr.mxu0 0.0
    %1403 = vmatpush1.msra.mxu0 0.0
    %1404 = vmatprep.subr.mxu0 0.0
    %1405 = vmatpush1.msra.mxu0 0.0
    %1406 = vmatprep.subr.mxu0 0.0
    %1407 = vmatpush1.msra.mxu0 0.0
    %1408 = vmatprep.subr.mxu0 0.0
    %1409 = vmatpush1.msra.mxu0 0.0
    %1410 = vmatprep.subr.mxu0 0.0
    %1411 = vmatpush1.msra.mxu0 0.0
    %1412 = vmatprep.subr.mxu0 0.0
    %1413 = vmatpush1.msra.mxu0 0.0
    %1414 = vmatprep.subr.mxu0 0.0
    %1415 = vmatpush1.msra.mxu0 0.0
    %1416 = vmatprep.subr.mxu0 0.0
    %1417 = vmatpush1.msra.mxu0 0.0
    %1418 = vmatprep.subr.mxu0 %v1386
    %1419 = vmatpush1.msra.mxu0 %v1383
    %1420 = vmatprep.subr.mxu0 0.0
    %1421 = vmatpush2.msra.mxu0 0.0
    %1422 = vmatprep.subr.mxu0 0.0
    %1423 = vmatpush2.msra.mxu0 0.0
    %1424 = vmatprep.subr.mxu0 0.0
    %1425 = vmatpush2.msra.mxu0 0.0
    %1426 = vmatprep.subr.mxu0 0.0
    %1427 = vmatpush2.msra.mxu0 0.0
    %1428 = vmatprep.subr.mxu0 0.0
    %1429 = vmatpush2.msra.mxu0 0.0
    %1430 = vmatprep.subr.mxu0 0.0
    %1431 = vmatpush2.msra.mxu0 0.0
    %1432 = vmatprep.subr.mxu0 0.0
    %1433 = vmatpush2.msra.mxu0 0.0
    %1434 = vmatprep.subr.mxu0 0.0
    %1435 = vmatpush2.msra.mxu0 0.0
    %1436 = vmatprep.subr.mxu0 0.0
    %1437 = vmatpush2.msra.mxu0 0.0
    %1438 = vmatprep.subr.mxu0 0.0
    %1439 = vmatpush2.msra.mxu0 0.0
    %1440 = vmatprep.subr.mxu0 0.0
    %1441 = vmatpush2.msra.mxu0 0.0
    %1442 = vmatprep.subr.mxu0 0.0
    %1443 = vmatpush2.msra.mxu0 0.0
    %1444 = vmatprep.subr.mxu0 0.0
    %1445 = vmatpush2.msra.mxu0 0.0
    %1446 = vmatprep.subr.mxu0 0.0
    %1447 = vmatpush2.msra.mxu0 0.0
    %1448 = vmatprep.subr.mxu0 0.0
    %1449 = vmatpush2.msra.mxu0 0.0
    %1450 = vmatprep.subr.mxu0 0.0
    %1451 = vmatpush2.msra.mxu0 0.0
    %1452 = vmatprep.mubr.f32.mxu0 0.0
    %1453 = vmatmul.mubr.f32.gmra.mxu0 %v1380
    %v1454 = vpop.f32.mrf.mxu0
    %v1455 = vadd.f32 0.0, %v1454
    %v1456 = vpop.f32.mrf.mxu0
    %v1457 = vadd.f32 0.0, %v1456
    %1458 = vdwg.mxu0
    %v1459 = vadd.f32 %v1369, %v1455
    %v1460 = vadd.f32 %v1370, %v1457
    %1461 = vrot.lane.b32.xlu0 %v931, 113
    %v1462 = vpop.permute.xlu0 %1461
    %1463 = vrot.lane.b32.xlu0 %v932, 113
    %v1464 = vpop.permute.xlu0 %1463
    %v1465 = vsel %vm631, %v1462, %v1464
    %v1466 = vsel %vm631, %v1464, %v1462
    %v1467 = vmul.f32 %v1465, %v637
    %v1468 = vmul.f32 %v1466, %v641
    %v1470 = vsel %vm88, %v39, 0
    %v1473 = vsel %vm92, %v1467, 0
    %v1476 = vsel %vm92, %v1468, 0
    %1478 = vmatprep.subr.mxu0 0.0
    %1479 = vmatpush1.msra.mxu0 0.0
    %1480 = vmatprep.subr.mxu0 0.0
    %1481 = vmatpush1.msra.mxu0 0.0
    %1482 = vmatprep.subr.mxu0 0.0
    %1483 = vmatpush1.msra.mxu0 0.0
    %1484 = vmatprep.subr.mxu0 0.0
    %1485 = vmatpush1.msra.mxu0 0.0
    %1486 = vmatprep.subr.mxu0 0.0
    %1487 = vmatpush1.msra.mxu0 0.0
    %1488 = vmatprep.subr.mxu0 0.0
    %1489 = vmatpush1.msra.mxu0 0.0
    %1490 = vmatprep.subr.mxu0 0.0
    %1491 = vmatpush1.msra.mxu0 0.0
    %1492 = vmatprep.subr.mxu0 0.0
    %1493 = vmatpush1.msra.mxu0 0.0
    %1494 = vmatprep.subr.mxu0 0.0
    %1495 = vmatpush1.msra.mxu0 0.0
    %1496 = vmatprep.subr.mxu0 0.0
    %1497 = vmatpush1.msra.mxu0 0.0
    %1498 = vmatprep.subr.mxu0 0.0
    %1499 = vmatpush1.msra.mxu0 0.0
    %1500 = vmatprep.subr.mxu0 0.0
    %1501 = vmatpush1.msra.mxu0 0.0
    %1502 = vmatprep.subr.mxu0 0.0
    %1503 = vmatpush1.msra.mxu0 0.0
    %1504 = vmatprep.subr.mxu0 0.0
    %1505 = vmatpush1.msra.mxu0 0.0
    %1506 = vmatprep.subr.mxu0 0.0
    %1507 = vmatpush1.msra.mxu0 0.0
    %1508 = vmatprep.subr.mxu0 %v1476
    %1509 = vmatpush1.msra.mxu0 %v1473
    %1510 = vmatprep.subr.mxu0 0.0
    %1511 = vmatpush2.msra.mxu0 0.0
    %1512 = vmatprep.subr.mxu0 0.0
    %1513 = vmatpush2.msra.mxu0 0.0
    %1514 = vmatprep.subr.mxu0 0.0
    %1515 = vmatpush2.msra.mxu0 0.0
    %1516 = vmatprep.subr.mxu0 0.0
    %1517 = vmatpush2.msra.mxu0 0.0
    %1518 = vmatprep.subr.mxu0 0.0
    %1519 = vmatpush2.msra.mxu0 0.0
    %1520 = vmatprep.subr.mxu0 0.0
    %1521 = vmatpush2.msra.mxu0 0.0
    %1522 = vmatprep.subr.mxu0 0.0
    %1523 = vmatpush2.msra.mxu0 0.0
    %1524 = vmatprep.subr.mxu0 0.0
    %1525 = vmatpush2.msra.mxu0 0.0
    %1526 = vmatprep.subr.mxu0 0.0
    %1527 = vmatpush2.msra.mxu0 0.0
    %1528 = vmatprep.subr.mxu0 0.0
    %1529 = vmatpush2.msra.mxu0 0.0
    %1530 = vmatprep.subr.mxu0 0.0
    %1531 = vmatpush2.msra.mxu0 0.0
    %1532 = vmatprep.subr.mxu0 0.0
    %1533 = vmatpush2.msra.mxu0 0.0
    %1534 = vmatprep.subr.mxu0 0.0
    %1535 = vmatpush2.msra.mxu0 0.0
    %1536 = vmatprep.subr.mxu0 0.0
    %1537 = vmatpush2.msra.mxu0 0.0
    %1538 = vmatprep.subr.mxu0 0.0
    %1539 = vmatpush2.msra.mxu0 0.0
    %1540 = vmatprep.subr.mxu0 0.0
    %1541 = vmatpush2.msra.mxu0 0.0
    %1542 = vmatprep.mubr.f32.mxu0 0.0
    %1543 = vmatmul.mubr.f32.gmra.mxu0 %v1470
    %v1544 = vpop.f32.mrf.mxu0
    %v1545 = vadd.f32 0.0, %v1544
    %v1546 = vpop.f32.mrf.mxu0
    %v1547 = vadd.f32 0.0, %v1546
    %1548 = vdwg.mxu0
    %v1549 = vadd.f32 %v1459, %v1545
    %v1550 = vadd.f32 %v1460, %v1547
    %1551 = vrot.lane.b32.xlu0 %v931, 112
    %v1552 = vpop.permute.xlu0 %1551
    %1553 = vrot.lane.b32.xlu0 %v932, 112
    %v1554 = vpop.permute.xlu0 %1553
    %v1555 = vsel %vm730, %v1552, %v1554
    %v1556 = vsel %vm730, %v1554, %v1552
    %v1557 = vmul.f32 %v1555, %v736
    %v1558 = vmul.f32 %v1556, %v740
    %v1560 = vsel %vm88, %v40, 0
    %v1563 = vsel %vm92, %v1557, 0
    %v1566 = vsel %vm92, %v1558, 0
    %1568 = vmatprep.subr.mxu0 0.0
    %1569 = vmatpush1.msra.mxu0 0.0
    %1570 = vmatprep.subr.mxu0 0.0
    %1571 = vmatpush1.msra.mxu0 0.0
    %1572 = vmatprep.subr.mxu0 0.0
    %1573 = vmatpush1.msra.mxu0 0.0
    %1574 = vmatprep.subr.mxu0 0.0
    %1575 = vmatpush1.msra.mxu0 0.0
    %1576 = vmatprep.subr.mxu0 0.0
    %1577 = vmatpush1.msra.mxu0 0.0
    %1578 = vmatprep.subr.mxu0 0.0
    %1579 = vmatpush1.msra.mxu0 0.0
    %1580 = vmatprep.subr.mxu0 0.0
    %1581 = vmatpush1.msra.mxu0 0.0
    %1582 = vmatprep.subr.mxu0 0.0
    %1583 = vmatpush1.msra.mxu0 0.0
    %1584 = vmatprep.subr.mxu0 0.0
    %1585 = vmatpush1.msra.mxu0 0.0
    %1586 = vmatprep.subr.mxu0 0.0
    %1587 = vmatpush1.msra.mxu0 0.0
    %1588 = vmatprep.subr.mxu0 0.0
    %1589 = vmatpush1.msra.mxu0 0.0
    %1590 = vmatprep.subr.mxu0 0.0
    %1591 = vmatpush1.msra.mxu0 0.0
    %1592 = vmatprep.subr.mxu0 0.0
    %1593 = vmatpush1.msra.mxu0 0.0
    %1594 = vmatprep.subr.mxu0 0.0
    %1595 = vmatpush1.msra.mxu0 0.0
    %1596 = vmatprep.subr.mxu0 0.0
    %1597 = vmatpush1.msra.mxu0 0.0
    %1598 = vmatprep.subr.mxu0 %v1566
    %1599 = vmatpush1.msra.mxu0 %v1563
    %1600 = vmatprep.subr.mxu0 0.0
    %1601 = vmatpush2.msra.mxu0 0.0
    %1602 = vmatprep.subr.mxu0 0.0
    %1603 = vmatpush2.msra.mxu0 0.0
    %1604 = vmatprep.subr.mxu0 0.0
    %1605 = vmatpush2.msra.mxu0 0.0
    %1606 = vmatprep.subr.mxu0 0.0
    %1607 = vmatpush2.msra.mxu0 0.0
    %1608 = vmatprep.subr.mxu0 0.0
    %1609 = vmatpush2.msra.mxu0 0.0
    %1610 = vmatprep.subr.mxu0 0.0
    %1611 = vmatpush2.msra.mxu0 0.0
    %1612 = vmatprep.subr.mxu0 0.0
    %1613 = vmatpush2.msra.mxu0 0.0
    %1614 = vmatprep.subr.mxu0 0.0
    %1615 = vmatpush2.msra.mxu0 0.0
    %1616 = vmatprep.subr.mxu0 0.0
    %1617 = vmatpush2.msra.mxu0 0.0
    %1618 = vmatprep.subr.mxu0 0.0
    %1619 = vmatpush2.msra.mxu0 0.0
    %1620 = vmatprep.subr.mxu0 0.0
    %1621 = vmatpush2.msra.mxu0 0.0
    %1622 = vmatprep.subr.mxu0 0.0
    %1623 = vmatpush2.msra.mxu0 0.0
    %1624 = vmatprep.subr.mxu0 0.0
    %1625 = vmatpush2.msra.mxu0 0.0
    %1626 = vmatprep.subr.mxu0 0.0
    %1627 = vmatpush2.msra.mxu0 0.0
    %1628 = vmatprep.subr.mxu0 0.0
    %1629 = vmatpush2.msra.mxu0 0.0
    %1630 = vmatprep.subr.mxu0 0.0
    %1631 = vmatpush2.msra.mxu0 0.0
    %1632 = vmatprep.mubr.f32.mxu0 0.0
    %1633 = vmatmul.mubr.f32.gmra.mxu0 %v1560
    %v1634 = vpop.f32.mrf.mxu0
    %v1635 = vadd.f32 0.0, %v1634
    %v1636 = vpop.f32.mrf.mxu0
    %v1637 = vadd.f32 0.0, %v1636
    %1638 = vdwg.mxu0
    %v1639 = vadd.f32 %v1549, %v1635
    %v1640 = vadd.f32 %v1550, %v1637
    %1641 = vrot.lane.b32.xlu0 %v931, 111
    %v1642 = vpop.permute.xlu0 %1641
    %1643 = vrot.lane.b32.xlu0 %v932, 111
    %v1644 = vpop.permute.xlu0 %1643
    %v1645 = vsel %vm829, %v1642, %v1644
    %v1646 = vsel %vm829, %v1644, %v1642
    %v1647 = vmul.f32 %v1645, %v835
    %v1648 = vmul.f32 %v1646, %v839
    %v1650 = vsel %vm88, %v41, 0
    %v1653 = vsel %vm92, %v1647, 0
    %v1656 = vsel %vm92, %v1648, 0
    %1658 = vmatprep.subr.mxu0 0.0
    %1659 = vmatpush1.msra.mxu0 0.0
    %1660 = vmatprep.subr.mxu0 0.0
    %1661 = vmatpush1.msra.mxu0 0.0
    %1662 = vmatprep.subr.mxu0 0.0
    %1663 = vmatpush1.msra.mxu0 0.0
    %1664 = vmatprep.subr.mxu0 0.0
    %1665 = vmatpush1.msra.mxu0 0.0
    %1666 = vmatprep.subr.mxu0 0.0
    %1667 = vmatpush1.msra.mxu0 0.0
    %1668 = vmatprep.subr.mxu0 0.0
    %1669 = vmatpush1.msra.mxu0 0.0
    %1670 = vmatprep.subr.mxu0 0.0
    %1671 = vmatpush1.msra.mxu0 0.0
    %1672 = vmatprep.subr.mxu0 0.0
    %1673 = vmatpush1.msra.mxu0 0.0
    %1674 = vmatprep.subr.mxu0 0.0
    %1675 = vmatpush1.msra.mxu0 0.0
    %1676 = vmatprep.subr.mxu0 0.0
    %1677 = vmatpush1.msra.mxu0 0.0
    %1678 = vmatprep.subr.mxu0 0.0
    %1679 = vmatpush1.msra.mxu0 0.0
    %1680 = vmatprep.subr.mxu0 0.0
    %1681 = vmatpush1.msra.mxu0 0.0
    %1682 = vmatprep.subr.mxu0 0.0
    %1683 = vmatpush1.msra.mxu0 0.0
    %1684 = vmatprep.subr.mxu0 0.0
    %1685 = vmatpush1.msra.mxu0 0.0
    %1686 = vmatprep.subr.mxu0 0.0
    %1687 = vmatpush1.msra.mxu0 0.0
    %1688 = vmatprep.subr.mxu0 %v1656
    %1689 = vmatpush1.msra.mxu0 %v1653
    %1690 = vmatprep.subr.mxu0 0.0
    %1691 = vmatpush2.msra.mxu0 0.0
    %1692 = vmatprep.subr.mxu0 0.0
    %1693 = vmatpush2.msra.mxu0 0.0
    %1694 = vmatprep.subr.mxu0 0.0
    %1695 = vmatpush2.msra.mxu0 0.0
    %1696 = vmatprep.subr.mxu0 0.0
    %1697 = vmatpush2.msra.mxu0 0.0
    %1698 = vmatprep.subr.mxu0 0.0
    %1699 = vmatpush2.msra.mxu0 0.0
    %1700 = vmatprep.subr.mxu0 0.0
    %1701 = vmatpush2.msra.mxu0 0.0
    %1702 = vmatprep.subr.mxu0 0.0
    %1703 = vmatpush2.msra.mxu0 0.0
    %1704 = vmatprep.subr.mxu0 0.0
    %1705 = vmatpush2.msra.mxu0 0.0
    %1706 = vmatprep.subr.mxu0 0.0
    %1707 = vmatpush2.msra.mxu0 0.0
    %1708 = vmatprep.subr.mxu0 0.0
    %1709 = vmatpush2.msra.mxu0 0.0
    %1710 = vmatprep.subr.mxu0 0.0
    %1711 = vmatpush2.msra.mxu0 0.0
    %1712 = vmatprep.subr.mxu0 0.0
    %1713 = vmatpush2.msra.mxu0 0.0
    %1714 = vmatprep.subr.mxu0 0.0
    %1715 = vmatpush2.msra.mxu0 0.0
    %1716 = vmatprep.subr.mxu0 0.0
    %1717 = vmatpush2.msra.mxu0 0.0
    %1718 = vmatprep.subr.mxu0 0.0
    %1719 = vmatpush2.msra.mxu0 0.0
    %1720 = vmatprep.subr.mxu0 0.0
    %1721 = vmatpush2.msra.mxu0 0.0
    %1722 = vmatprep.mubr.f32.mxu0 0.0
    %1723 = vmatmul.mubr.f32.gmra.mxu0 %v1650
    %v1724 = vpop.f32.mrf.mxu0
    %v1725 = vadd.f32 0.0, %v1724
    %v1726 = vpop.f32.mrf.mxu0
    %v1727 = vadd.f32 0.0, %v1726
    %1728 = vdwg.mxu0
    %v1729 = vadd.f32 %v1639, %v1725
    %v1730 = vadd.f32 %v1640, %v1727
    %1732 = vset.pattern.permute.xlu0 0
    %1733 = vperm.xlu0 %1732, %v43
    %v1734 = vpop.permute.xlu0 %1733
    %v1736 = vadd.f32 %v1729, %v1734
    %v1737 = vadd.f32 %v1730, %v1734
    %v1738 = vmax.f32 %v1736, 0.0
    %v1739 = vmax.f32 %v1737, 0.0
    %v1740 = vadd.f32 %v1738, %v48
    %v1741 = vadd.f32 %v1739, %v50
    %v1744 = vcombine.low %v1740, %v1741
    %1746 = vst [vmem:[#allocation2] sm:$0xff] %v1744
    %s1747 = scalar_lea.vmem %s0, 8
    %v1748 = vld [vmem:[%s1747] sm:$0xff]
    %v1750 = vcombine.high %v1748, %v1748
    %1752 = vrot.lane.b32.xlu0 %v1748, 17
    %v1753 = vpop.permute.xlu0 %1752
    %1754 = vrot.lane.b32.xlu0 %v1750, 17
    %v1755 = vpop.permute.xlu0 %1754
    %v1756 = vsel %vm58, %v1753, %v1755
    %v1757 = vsel %vm58, %v1755, %v1753
    %v1758 = vmul.f32 %v1757, %v64
    %v1759 = vmul.f32 %v1756, %v68
    %1760 = vrot.lane.b32.xlu0 %v1748, 16
    %v1761 = vpop.permute.xlu0 %1760
    %1762 = vrot.lane.b32.xlu0 %v1750, 16
    %v1763 = vpop.permute.xlu0 %1762
    %v1764 = vsel %vm75, %v1761, %v1763
    %v1765 = vsel %vm75, %v1763, %v1761
    %v1766 = vmul.f32 %v1765, %v81
    %v1767 = vmul.f32 %v1764, %v85
    %v1769 = vsel %vm92, %v1766, 0
    %v1772 = vsel %vm92, %v1767, 0
    %1774 = vmatprep.subr.mxu0 0.0
    %1775 = vmatpush1.msra.mxu0 0.0
    %1776 = vmatprep.subr.mxu0 0.0
    %1777 = vmatpush1.msra.mxu0 0.0
    %1778 = vmatprep.subr.mxu0 0.0
    %1779 = vmatpush1.msra.mxu0 0.0
    %1780 = vmatprep.subr.mxu0 0.0
    %1781 = vmatpush1.msra.mxu0 0.0
    %1782 = vmatprep.subr.mxu0 0.0
    %1783 = vmatpush1.msra.mxu0 0.0
    %1784 = vmatprep.subr.mxu0 0.0
    %1785 = vmatpush1.msra.mxu0 0.0
    %1786 = vmatprep.subr.mxu0 0.0
    %1787 = vmatpush1.msra.mxu0 0.0
    %1788 = vmatprep.subr.mxu0 0.0
    %1789 = vmatpush1.msra.mxu0 0.0
    %1790 = vmatprep.subr.mxu0 0.0
    %1791 = vmatpush1.msra.mxu0 0.0
    %1792 = vmatprep.subr.mxu0 0.0
    %1793 = vmatpush1.msra.mxu0 0.0
    %1794 = vmatprep.subr.mxu0 0.0
    %1795 = vmatpush1.msra.mxu0 0.0
    %1796 = vmatprep.subr.mxu0 0.0
    %1797 = vmatpush1.msra.mxu0 0.0
    %1798 = vmatprep.subr.mxu0 0.0
    %1799 = vmatpush1.msra.mxu0 0.0
    %1800 = vmatprep.subr.mxu0 0.0
    %1801 = vmatpush1.msra.mxu0 0.0
    %1802 = vmatprep.subr.mxu0 0.0
    %1803 = vmatpush1.msra.mxu0 0.0
    %1804 = vmatprep.subr.mxu0 %v1772
    %1805 = vmatpush1.msra.mxu0 %v1769
    %1806 = vmatprep.subr.mxu0 0.0
    %1807 = vmatpush2.msra.mxu0 0.0
    %1808 = vmatprep.subr.mxu0 0.0
    %1809 = vmatpush2.msra.mxu0 0.0
    %1810 = vmatprep.subr.mxu0 0.0
    %1811 = vmatpush2.msra.mxu0 0.0
    %1812 = vmatprep.subr.mxu0 0.0
    %1813 = vmatpush2.msra.mxu0 0.0
    %1814 = vmatprep.subr.mxu0 0.0
    %1815 = vmatpush2.msra.mxu0 0.0
    %1816 = vmatprep.subr.mxu0 0.0
    %1817 = vmatpush2.msra.mxu0 0.0
    %1818 = vmatprep.subr.mxu0 0.0
    %1819 = vmatpush2.msra.mxu0 0.0
    %1820 = vmatprep.subr.mxu0 0.0
    %1821 = vmatpush2.msra.mxu0 0.0
    %1822 = vmatprep.subr.mxu0 0.0
    %1823 = vmatpush2.msra.mxu0 0.0
    %1824 = vmatprep.subr.mxu0 0.0
    %1825 = vmatpush2.msra.mxu0 0.0
    %1826 = vmatprep.subr.mxu0 0.0
    %1827 = vmatpush2.msra.mxu0 0.0
    %1828 = vmatprep.subr.mxu0 0.0
    %1829 = vmatpush2.msra.mxu0 0.0
    %1830 = vmatprep.subr.mxu0 0.0
    %1831 = vmatpush2.msra.mxu0 0.0
    %1832 = vmatprep.subr.mxu0 0.0
    %1833 = vmatpush2.msra.mxu0 0.0
    %1834 = vmatprep.subr.mxu0 0.0
    %1835 = vmatpush2.msra.mxu0 0.0
    %1836 = vmatprep.subr.mxu0 0.0
    %1837 = vmatpush2.msra.mxu0 0.0
    %1838 = vmatprep.mubr.f32.mxu0 0.0
    %1839 = vmatmul.mubr.f32.gmra.mxu0 %v90
    %v1840 = vpop.f32.mrf.mxu0
    %v1841 = vadd.f32 0.0, %v1840
    %v1842 = vpop.f32.mrf.mxu0
    %v1843 = vadd.f32 0.0, %v1842
    %1844 = vdwg.mxu0
    %v1846 = vsel %vm92, %v1758, 0
    %v1849 = vsel %vm92, %v1759, 0
    %1851 = vmatprep.subr.mxu0 0.0
    %1852 = vmatpush1.msra.mxu0 0.0
    %1853 = vmatprep.subr.mxu0 0.0
    %1854 = vmatpush1.msra.mxu0 0.0
    %1855 = vmatprep.subr.mxu0 0.0
    %1856 = vmatpush1.msra.mxu0 0.0
    %1857 = vmatprep.subr.mxu0 0.0
    %1858 = vmatpush1.msra.mxu0 0.0
    %1859 = vmatprep.subr.mxu0 0.0
    %1860 = vmatpush1.msra.mxu0 0.0
    %1861 = vmatprep.subr.mxu0 0.0
    %1862 = vmatpush1.msra.mxu0 0.0
    %1863 = vmatprep.subr.mxu0 0.0
    %1864 = vmatpush1.msra.mxu0 0.0
    %1865 = vmatprep.subr.mxu0 0.0
    %1866 = vmatpush1.msra.mxu0 0.0
    %1867 = vmatprep.subr.mxu0 0.0
    %1868 = vmatpush1.msra.mxu0 0.0
    %1869 = vmatprep.subr.mxu0 0.0
    %1870 = vmatpush1.msra.mxu0 0.0
    %1871 = vmatprep.subr.mxu0 0.0
    %1872 = vmatpush1.msra.mxu0 0.0
    %1873 = vmatprep.subr.mxu0 0.0
    %1874 = vmatpush1.msra.mxu0 0.0
    %1875 = vmatprep.subr.mxu0 0.0
    %1876 = vmatpush1.msra.mxu0 0.0
    %1877 = vmatprep.subr.mxu0 0.0
    %1878 = vmatpush1.msra.mxu0 0.0
    %1879 = vmatprep.subr.mxu0 0.0
    %1880 = vmatpush1.msra.mxu0 0.0
    %1881 = vmatprep.subr.mxu0 %v1849
    %1882 = vmatpush1.msra.mxu0 %v1846
    %1883 = vmatprep.subr.mxu0 0.0
    %1884 = vmatpush2.msra.mxu0 0.0
    %1885 = vmatprep.subr.mxu0 0.0
    %1886 = vmatpush2.msra.mxu0 0.0
    %1887 = vmatprep.subr.mxu0 0.0
    %1888 = vmatpush2.msra.mxu0 0.0
    %1889 = vmatprep.subr.mxu0 0.0
    %1890 = vmatpush2.msra.mxu0 0.0
    %1891 = vmatprep.subr.mxu0 0.0
    %1892 = vmatpush2.msra.mxu0 0.0
    %1893 = vmatprep.subr.mxu0 0.0
    %1894 = vmatpush2.msra.mxu0 0.0
    %1895 = vmatprep.subr.mxu0 0.0
    %1896 = vmatpush2.msra.mxu0 0.0
    %1897 = vmatprep.subr.mxu0 0.0
    %1898 = vmatpush2.msra.mxu0 0.0
    %1899 = vmatprep.subr.mxu0 0.0
    %1900 = vmatpush2.msra.mxu0 0.0
    %1901 = vmatprep.subr.mxu0 0.0
    %1902 = vmatpush2.msra.mxu0 0.0
    %1903 = vmatprep.subr.mxu0 0.0
    %1904 = vmatpush2.msra.mxu0 0.0
    %1905 = vmatprep.subr.mxu0 0.0
    %1906 = vmatpush2.msra.mxu0 0.0
    %1907 = vmatprep.subr.mxu0 0.0
    %1908 = vmatpush2.msra.mxu0 0.0
    %1909 = vmatprep.subr.mxu0 0.0
    %1910 = vmatpush2.msra.mxu0 0.0
    %1911 = vmatprep.subr.mxu0 0.0
    %1912 = vmatpush2.msra.mxu0 0.0
    %1913 = vmatprep.subr.mxu0 0.0
    %1914 = vmatpush2.msra.mxu0 0.0
    %1915 = vmatprep.mubr.f32.mxu0 0.0
    %1916 = vmatmul.mubr.f32.gmra.mxu0 %v171
    %v1917 = vpop.f32.mrf.mxu0
    %v1918 = vadd.f32 %v1841, %v1917
    %v1919 = vpop.f32.mrf.mxu0
    %v1920 = vadd.f32 %v1843, %v1919
    %1921 = vdwg.mxu0
    %1922 = vrot.lane.b32.xlu0 %v1748, 15
    %v1923 = vpop.permute.xlu0 %1922
    %1924 = vrot.lane.b32.xlu0 %v1750, 15
    %v1925 = vpop.permute.xlu0 %1924
    %v1926 = vsel %vm254, %v1923, %v1925
    %v1927 = vsel %vm254, %v1925, %v1923
    %v1928 = vmul.f32 %v1927, %v260
    %v1929 = vmul.f32 %v1926, %v264
    %v1931 = vsel %vm92, %v1928, 0
    %v1934 = vsel %vm92, %v1929, 0
    %1936 = vmatprep.subr.mxu0 0.0
    %1937 = vmatpush1.msra.mxu0 0.0
    %1938 = vmatprep.subr.mxu0 0.0
    %1939 = vmatpush1.msra.mxu0 0.0
    %1940 = vmatprep.subr.mxu0 0.0
    %1941 = vmatpush1.msra.mxu0 0.0
    %1942 = vmatprep.subr.mxu0 0.0
    %1943 = vmatpush1.msra.mxu0 0.0
    %1944 = vmatprep.subr.mxu0 0.0
    %1945 = vmatpush1.msra.mxu0 0.0
    %1946 = vmatprep.subr.mxu0 0.0
    %1947 = vmatpush1.msra.mxu0 0.0
    %1948 = vmatprep.subr.mxu0 0.0
    %1949 = vmatpush1.msra.mxu0 0.0
    %1950 = vmatprep.subr.mxu0 0.0
    %1951 = vmatpush1.msra.mxu0 0.0
    %1952 = vmatprep.subr.mxu0 0.0
    %1953 = vmatpush1.msra.mxu0 0.0
    %1954 = vmatprep.subr.mxu0 0.0
    %1955 = vmatpush1.msra.mxu0 0.0
    %1956 = vmatprep.subr.mxu0 0.0
    %1957 = vmatpush1.msra.mxu0 0.0
    %1958 = vmatprep.subr.mxu0 0.0
    %1959 = vmatpush1.msra.mxu0 0.0
    %1960 = vmatprep.subr.mxu0 0.0
    %1961 = vmatpush1.msra.mxu0 0.0
    %1962 = vmatprep.subr.mxu0 0.0
    %1963 = vmatpush1.msra.mxu0 0.0
    %1964 = vmatprep.subr.mxu0 0.0
    %1965 = vmatpush1.msra.mxu0 0.0
    %1966 = vmatprep.subr.mxu0 %v1934
    %1967 = vmatpush1.msra.mxu0 %v1931
    %1968 = vmatprep.subr.mxu0 0.0
    %1969 = vmatpush2.msra.mxu0 0.0
    %1970 = vmatprep.subr.mxu0 0.0
    %1971 = vmatpush2.msra.mxu0 0.0
    %1972 = vmatprep.subr.mxu0 0.0
    %1973 = vmatpush2.msra.mxu0 0.0
    %1974 = vmatprep.subr.mxu0 0.0
    %1975 = vmatpush2.msra.mxu0 0.0
    %1976 = vmatprep.subr.mxu0 0.0
    %1977 = vmatpush2.msra.mxu0 0.0
    %1978 = vmatprep.subr.mxu0 0.0
    %1979 = vmatpush2.msra.mxu0 0.0
    %1980 = vmatprep.subr.mxu0 0.0
    %1981 = vmatpush2.msra.mxu0 0.0
    %1982 = vmatprep.subr.mxu0 0.0
    %1983 = vmatpush2.msra.mxu0 0.0
    %1984 = vmatprep.subr.mxu0 0.0
    %1985 = vmatpush2.msra.mxu0 0.0
    %1986 = vmatprep.subr.mxu0 0.0
    %1987 = vmatpush2.msra.mxu0 0.0
    %1988 = vmatprep.subr.mxu0 0.0
    %1989 = vmatpush2.msra.mxu0 0.0
    %1990 = vmatprep.subr.mxu0 0.0
    %1991 = vmatpush2.msra.mxu0 0.0
    %1992 = vmatprep.subr.mxu0 0.0
    %1993 = vmatpush2.msra.mxu0 0.0
    %1994 = vmatprep.subr.mxu0 0.0
    %1995 = vmatpush2.msra.mxu0 0.0
    %1996 = vmatprep.subr.mxu0 0.0
    %1997 = vmatpush2.msra.mxu0 0.0
    %1998 = vmatprep.subr.mxu0 0.0
    %1999 = vmatpush2.msra.mxu0 0.0
    %2000 = vmatprep.mubr.f32.mxu0 0.0
    %2001 = vmatmul.mubr.f32.gmra.mxu0 %v268
    %v2002 = vpop.f32.mrf.mxu0
    %v2003 = vadd.f32 0.0, %v2002
    %v2004 = vpop.f32.mrf.mxu0
    %v2005 = vadd.f32 0.0, %v2004
    %2006 = vdwg.mxu0
    %v2007 = vadd.f32 %v1918, %v2003
    %v2008 = vadd.f32 %v1920, %v2005
    %2009 = vrot.lane.b32.xlu0 %v1748, 1
    %v2010 = vpop.permute.xlu0 %2009
    %2011 = vrot.lane.b32.xlu0 %v1750, 1
    %v2012 = vpop.permute.xlu0 %2011
    %v2013 = vsel %vm353, %v2010, %v2012
    %v2014 = vsel %vm353, %v2012, %v2010
    %v2015 = vmul.f32 %v2014, %v359
    %v2016 = vmul.f32 %v2013, %v363
    %v2018 = vsel %vm92, %v2015, 0
    %v2021 = vsel %vm92, %v2016, 0
    %2023 = vmatprep.subr.mxu0 0.0
    %2024 = vmatpush1.msra.mxu0 0.0
    %2025 = vmatprep.subr.mxu0 0.0
    %2026 = vmatpush1.msra.mxu0 0.0
    %2027 = vmatprep.subr.mxu0 0.0
    %2028 = vmatpush1.msra.mxu0 0.0
    %2029 = vmatprep.subr.mxu0 0.0
    %2030 = vmatpush1.msra.mxu0 0.0
    %2031 = vmatprep.subr.mxu0 0.0
    %2032 = vmatpush1.msra.mxu0 0.0
    %2033 = vmatprep.subr.mxu0 0.0
    %2034 = vmatpush1.msra.mxu0 0.0
    %2035 = vmatprep.subr.mxu0 0.0
    %2036 = vmatpush1.msra.mxu0 0.0
    %2037 = vmatprep.subr.mxu0 0.0
    %2038 = vmatpush1.msra.mxu0 0.0
    %2039 = vmatprep.subr.mxu0 0.0
    %2040 = vmatpush1.msra.mxu0 0.0
    %2041 = vmatprep.subr.mxu0 0.0
    %2042 = vmatpush1.msra.mxu0 0.0
    %2043 = vmatprep.subr.mxu0 0.0
    %2044 = vmatpush1.msra.mxu0 0.0
    %2045 = vmatprep.subr.mxu0 0.0
    %2046 = vmatpush1.msra.mxu0 0.0
    %2047 = vmatprep.subr.mxu0 0.0
    %2048 = vmatpush1.msra.mxu0 0.0
    %2049 = vmatprep.subr.mxu0 0.0
    %2050 = vmatpush1.msra.mxu0 0.0
    %2051 = vmatprep.subr.mxu0 0.0
    %2052 = vmatpush1.msra.mxu0 0.0
    %2053 = vmatprep.subr.mxu0 %v2021
    %2054 = vmatpush1.msra.mxu0 %v2018
    %2055 = vmatprep.subr.mxu0 0.0
    %2056 = vmatpush2.msra.mxu0 0.0
    %2057 = vmatprep.subr.mxu0 0.0
    %2058 = vmatpush2.msra.mxu0 0.0
    %2059 = vmatprep.subr.mxu0 0.0
    %2060 = vmatpush2.msra.mxu0 0.0
    %2061 = vmatprep.subr.mxu0 0.0
    %2062 = vmatpush2.msra.mxu0 0.0
    %2063 = vmatprep.subr.mxu0 0.0
    %2064 = vmatpush2.msra.mxu0 0.0
    %2065 = vmatprep.subr.mxu0 0.0
    %2066 = vmatpush2.msra.mxu0 0.0
    %2067 = vmatprep.subr.mxu0 0.0
    %2068 = vmatpush2.msra.mxu0 0.0
    %2069 = vmatprep.subr.mxu0 0.0
    %2070 = vmatpush2.msra.mxu0 0.0
    %2071 = vmatprep.subr.mxu0 0.0
    %2072 = vmatpush2.msra.mxu0 0.0
    %2073 = vmatprep.subr.mxu0 0.0
    %2074 = vmatpush2.msra.mxu0 0.0
    %2075 = vmatprep.subr.mxu0 0.0
    %2076 = vmatpush2.msra.mxu0 0.0
    %2077 = vmatprep.subr.mxu0 0.0
    %2078 = vmatpush2.msra.mxu0 0.0
    %2079 = vmatprep.subr.mxu0 0.0
    %2080 = vmatpush2.msra.mxu0 0.0
    %2081 = vmatprep.subr.mxu0 0.0
    %2082 = vmatpush2.msra.mxu0 0.0
    %2083 = vmatprep.subr.mxu0 0.0
    %2084 = vmatpush2.msra.mxu0 0.0
    %2085 = vmatprep.subr.mxu0 0.0
    %2086 = vmatpush2.msra.mxu0 0.0
    %2087 = vmatprep.mubr.f32.mxu0 0.0
    %2088 = vmatmul.mubr.f32.gmra.mxu0 %v367
    %v2089 = vpop.f32.mrf.mxu0
    %v2090 = vadd.f32 0.0, %v2089
    %v2091 = vpop.f32.mrf.mxu0
    %v2092 = vadd.f32 0.0, %v2091
    %2093 = vdwg.mxu0
    %v2094 = vadd.f32 %v2007, %v2090
    %v2095 = vadd.f32 %v2008, %v2092
    %v2096 = vsel %vm92, %v1748, 0
    %v2098 = vsel %vm92, %v1750, 0
    %2100 = vmatprep.subr.mxu0 0.0
    %2101 = vmatpush1.msra.mxu0 0.0
    %2102 = vmatprep.subr.mxu0 0.0
    %2103 = vmatpush1.msra.mxu0 0.0
    %2104 = vmatprep.subr.mxu0 0.0
    %2105 = vmatpush1.msra.mxu0 0.0
    %2106 = vmatprep.subr.mxu0 0.0
    %2107 = vmatpush1.msra.mxu0 0.0
    %2108 = vmatprep.subr.mxu0 0.0
    %2109 = vmatpush1.msra.mxu0 0.0
    %2110 = vmatprep.subr.mxu0 0.0
    %2111 = vmatpush1.msra.mxu0 0.0
    %2112 = vmatprep.subr.mxu0 0.0
    %2113 = vmatpush1.msra.mxu0 0.0
    %2114 = vmatprep.subr.mxu0 0.0
    %2115 = vmatpush1.msra.mxu0 0.0
    %2116 = vmatprep.subr.mxu0 0.0
    %2117 = vmatpush1.msra.mxu0 0.0
    %2118 = vmatprep.subr.mxu0 0.0
    %2119 = vmatpush1.msra.mxu0 0.0
    %2120 = vmatprep.subr.mxu0 0.0
    %2121 = vmatpush1.msra.mxu0 0.0
    %2122 = vmatprep.subr.mxu0 0.0
    %2123 = vmatpush1.msra.mxu0 0.0
    %2124 = vmatprep.subr.mxu0 0.0
    %2125 = vmatpush1.msra.mxu0 0.0
    %2126 = vmatprep.subr.mxu0 0.0
    %2127 = vmatpush1.msra.mxu0 0.0
    %2128 = vmatprep.subr.mxu0 0.0
    %2129 = vmatpush1.msra.mxu0 0.0
    %2130 = vmatprep.subr.mxu0 %v2098
    %2131 = vmatpush1.msra.mxu0 %v2096
    %2132 = vmatprep.subr.mxu0 0.0
    %2133 = vmatpush2.msra.mxu0 0.0
    %2134 = vmatprep.subr.mxu0 0.0
    %2135 = vmatpush2.msra.mxu0 0.0
    %2136 = vmatprep.subr.mxu0 0.0
    %2137 = vmatpush2.msra.mxu0 0.0
    %2138 = vmatprep.subr.mxu0 0.0
    %2139 = vmatpush2.msra.mxu0 0.0
    %2140 = vmatprep.subr.mxu0 0.0
    %2141 = vmatpush2.msra.mxu0 0.0
    %2142 = vmatprep.subr.mxu0 0.0
    %2143 = vmatpush2.msra.mxu0 0.0
    %2144 = vmatprep.subr.mxu0 0.0
    %2145 = vmatpush2.msra.mxu0 0.0
    %2146 = vmatprep.subr.mxu0 0.0
    %2147 = vmatpush2.msra.mxu0 0.0
    %2148 = vmatprep.subr.mxu0 0.0
    %2149 = vmatpush2.msra.mxu0 0.0
    %2150 = vmatprep.subr.mxu0 0.0
    %2151 = vmatpush2.msra.mxu0 0.0
    %2152 = vmatprep.subr.mxu0 0.0
    %2153 = vmatpush2.msra.mxu0 0.0
    %2154 = vmatprep.subr.mxu0 0.0
    %2155 = vmatpush2.msra.mxu0 0.0
    %2156 = vmatprep.subr.mxu0 0.0
    %2157 = vmatpush2.msra.mxu0 0.0
    %2158 = vmatprep.subr.mxu0 0.0
    %2159 = vmatpush2.msra.mxu0 0.0
    %2160 = vmatprep.subr.mxu0 0.0
    %2161 = vmatpush2.msra.mxu0 0.0
    %2162 = vmatprep.subr.mxu0 0.0
    %2163 = vmatpush2.msra.mxu0 0.0
    %2164 = vmatprep.mubr.f32.mxu0 0.0
    %2165 = vmatmul.mubr.f32.gmra.mxu0 %v449
    %v2166 = vpop.f32.mrf.mxu0
    %v2167 = vadd.f32 0.0, %v2166
    %v2168 = vpop.f32.mrf.mxu0
    %v2169 = vadd.f32 0.0, %v2168
    %2170 = vdwg.mxu0
    %v2171 = vadd.f32 %v2094, %v2167
    %v2172 = vadd.f32 %v2095, %v2169
    %2173 = vrot.lane.b32.xlu0 %v1748, 127
    %v2174 = vpop.permute.xlu0 %2173
    %2175 = vrot.lane.b32.xlu0 %v1750, 127
    %v2176 = vpop.permute.xlu0 %2175
    %v2177 = vsel %vm532, %v2174, %v2176
    %v2178 = vsel %vm532, %v2176, %v2174
    %v2179 = vmul.f32 %v2177, %v538
    %v2180 = vmul.f32 %v2178, %v542
    %v2182 = vsel %vm92, %v2179, 0
    %v2185 = vsel %vm92, %v2180, 0
    %2187 = vmatprep.subr.mxu0 0.0
    %2188 = vmatpush1.msra.mxu0 0.0
    %2189 = vmatprep.subr.mxu0 0.0
    %2190 = vmatpush1.msra.mxu0 0.0
    %2191 = vmatprep.subr.mxu0 0.0
    %2192 = vmatpush1.msra.mxu0 0.0
    %2193 = vmatprep.subr.mxu0 0.0
    %2194 = vmatpush1.msra.mxu0 0.0
    %2195 = vmatprep.subr.mxu0 0.0
    %2196 = vmatpush1.msra.mxu0 0.0
    %2197 = vmatprep.subr.mxu0 0.0
    %2198 = vmatpush1.msra.mxu0 0.0
    %2199 = vmatprep.subr.mxu0 0.0
    %2200 = vmatpush1.msra.mxu0 0.0
    %2201 = vmatprep.subr.mxu0 0.0
    %2202 = vmatpush1.msra.mxu0 0.0
    %2203 = vmatprep.subr.mxu0 0.0
    %2204 = vmatpush1.msra.mxu0 0.0
    %2205 = vmatprep.subr.mxu0 0.0
    %2206 = vmatpush1.msra.mxu0 0.0
    %2207 = vmatprep.subr.mxu0 0.0
    %2208 = vmatpush1.msra.mxu0 0.0
    %2209 = vmatprep.subr.mxu0 0.0
    %2210 = vmatpush1.msra.mxu0 0.0
    %2211 = vmatprep.subr.mxu0 0.0
    %2212 = vmatpush1.msra.mxu0 0.0
    %2213 = vmatprep.subr.mxu0 0.0
    %2214 = vmatpush1.msra.mxu0 0.0
    %2215 = vmatprep.subr.mxu0 0.0
    %2216 = vmatpush1.msra.mxu0 0.0
    %2217 = vmatprep.subr.mxu0 %v2185
    %2218 = vmatpush1.msra.mxu0 %v2182
    %2219 = vmatprep.subr.mxu0 0.0
    %2220 = vmatpush2.msra.mxu0 0.0
    %2221 = vmatprep.subr.mxu0 0.0
    %2222 = vmatpush2.msra.mxu0 0.0
    %2223 = vmatprep.subr.mxu0 0.0
    %2224 = vmatpush2.msra.mxu0 0.0
    %2225 = vmatprep.subr.mxu0 0.0
    %2226 = vmatpush2.msra.mxu0 0.0
    %2227 = vmatprep.subr.mxu0 0.0
    %2228 = vmatpush2.msra.mxu0 0.0
    %2229 = vmatprep.subr.mxu0 0.0
    %2230 = vmatpush2.msra.mxu0 0.0
    %2231 = vmatprep.subr.mxu0 0.0
    %2232 = vmatpush2.msra.mxu0 0.0
    %2233 = vmatprep.subr.mxu0 0.0
    %2234 = vmatpush2.msra.mxu0 0.0
    %2235 = vmatprep.subr.mxu0 0.0
    %2236 = vmatpush2.msra.mxu0 0.0
    %2237 = vmatprep.subr.mxu0 0.0
    %2238 = vmatpush2.msra.mxu0 0.0
    %2239 = vmatprep.subr.mxu0 0.0
    %2240 = vmatpush2.msra.mxu0 0.0
    %2241 = vmatprep.subr.mxu0 0.0
    %2242 = vmatpush2.msra.mxu0 0.0
    %2243 = vmatprep.subr.mxu0 0.0
    %2244 = vmatpush2.msra.mxu0 0.0
    %2245 = vmatprep.subr.mxu0 0.0
    %2246 = vmatpush2.msra.mxu0 0.0
    %2247 = vmatprep.subr.mxu0 0.0
    %2248 = vmatpush2.msra.mxu0 0.0
    %2249 = vmatprep.subr.mxu0 0.0
    %2250 = vmatpush2.msra.mxu0 0.0
    %2251 = vmatprep.mubr.f32.mxu0 0.0
    %2252 = vmatmul.mubr.f32.gmra.mxu0 %v546
    %v2253 = vpop.f32.mrf.mxu0
    %v2254 = vadd.f32 0.0, %v2253
    %v2255 = vpop.f32.mrf.mxu0
    %v2256 = vadd.f32 0.0, %v2255
    %2257 = vdwg.mxu0
    %v2258 = vadd.f32 %v2171, %v2254
    %v2259 = vadd.f32 %v2172, %v2256
    %2260 = vrot.lane.b32.xlu0 %v1748, 113
    %v2261 = vpop.permute.xlu0 %2260
    %2262 = vrot.lane.b32.xlu0 %v1750, 113
    %v2263 = vpop.permute.xlu0 %2262
    %v2264 = vsel %vm631, %v2261, %v2263
    %v2265 = vsel %vm631, %v2263, %v2261
    %v2266 = vmul.f32 %v2264, %v637
    %v2267 = vmul.f32 %v2265, %v641
    %v2269 = vsel %vm92, %v2266, 0
    %v2272 = vsel %vm92, %v2267, 0
    %2274 = vmatprep.subr.mxu0 0.0
    %2275 = vmatpush1.msra.mxu0 0.0
    %2276 = vmatprep.subr.mxu0 0.0
    %2277 = vmatpush1.msra.mxu0 0.0
    %2278 = vmatprep.subr.mxu0 0.0
    %2279 = vmatpush1.msra.mxu0 0.0
    %2280 = vmatprep.subr.mxu0 0.0
    %2281 = vmatpush1.msra.mxu0 0.0
    %2282 = vmatprep.subr.mxu0 0.0
    %2283 = vmatpush1.msra.mxu0 0.0
    %2284 = vmatprep.subr.mxu0 0.0
    %2285 = vmatpush1.msra.mxu0 0.0
    %2286 = vmatprep.subr.mxu0 0.0
    %2287 = vmatpush1.msra.mxu0 0.0
    %2288 = vmatprep.subr.mxu0 0.0
    %2289 = vmatpush1.msra.mxu0 0.0
    %2290 = vmatprep.subr.mxu0 0.0
    %2291 = vmatpush1.msra.mxu0 0.0
    %2292 = vmatprep.subr.mxu0 0.0
    %2293 = vmatpush1.msra.mxu0 0.0
    %2294 = vmatprep.subr.mxu0 0.0
    %2295 = vmatpush1.msra.mxu0 0.0
    %2296 = vmatprep.subr.mxu0 0.0
    %2297 = vmatpush1.msra.mxu0 0.0
    %2298 = vmatprep.subr.mxu0 0.0
    %2299 = vmatpush1.msra.mxu0 0.0
    %2300 = vmatprep.subr.mxu0 0.0
    %2301 = vmatpush1.msra.mxu0 0.0
    %2302 = vmatprep.subr.mxu0 0.0
    %2303 = vmatpush1.msra.mxu0 0.0
    %2304 = vmatprep.subr.mxu0 %v2272
    %2305 = vmatpush1.msra.mxu0 %v2269
    %2306 = vmatprep.subr.mxu0 0.0
    %2307 = vmatpush2.msra.mxu0 0.0
    %2308 = vmatprep.subr.mxu0 0.0
    %2309 = vmatpush2.msra.mxu0 0.0
    %2310 = vmatprep.subr.mxu0 0.0
    %2311 = vmatpush2.msra.mxu0 0.0
    %2312 = vmatprep.subr.mxu0 0.0
    %2313 = vmatpush2.msra.mxu0 0.0
    %2314 = vmatprep.subr.mxu0 0.0
    %2315 = vmatpush2.msra.mxu0 0.0
    %2316 = vmatprep.subr.mxu0 0.0
    %2317 = vmatpush2.msra.mxu0 0.0
    %2318 = vmatprep.subr.mxu0 0.0
    %2319 = vmatpush2.msra.mxu0 0.0
    %2320 = vmatprep.subr.mxu0 0.0
    %2321 = vmatpush2.msra.mxu0 0.0
    %2322 = vmatprep.subr.mxu0 0.0
    %2323 = vmatpush2.msra.mxu0 0.0
    %2324 = vmatprep.subr.mxu0 0.0
    %2325 = vmatpush2.msra.mxu0 0.0
    %2326 = vmatprep.subr.mxu0 0.0
    %2327 = vmatpush2.msra.mxu0 0.0
    %2328 = vmatprep.subr.mxu0 0.0
    %2329 = vmatpush2.msra.mxu0 0.0
    %2330 = vmatprep.subr.mxu0 0.0
    %2331 = vmatpush2.msra.mxu0 0.0
    %2332 = vmatprep.subr.mxu0 0.0
    %2333 = vmatpush2.msra.mxu0 0.0
    %2334 = vmatprep.subr.mxu0 0.0
    %2335 = vmatpush2.msra.mxu0 0.0
    %2336 = vmatprep.subr.mxu0 0.0
    %2337 = vmatpush2.msra.mxu0 0.0
    %2338 = vmatprep.mubr.f32.mxu0 0.0
    %2339 = vmatmul.mubr.f32.gmra.mxu0 %v645
    %v2340 = vpop.f32.mrf.mxu0
    %v2341 = vadd.f32 0.0, %v2340
    %v2342 = vpop.f32.mrf.mxu0
    %v2343 = vadd.f32 0.0, %v2342
    %2344 = vdwg.mxu0
    %v2345 = vadd.f32 %v2258, %v2341
    %v2346 = vadd.f32 %v2259, %v2343
    %2347 = vrot.lane.b32.xlu0 %v1748, 112
    %v2348 = vpop.permute.xlu0 %2347
    %2349 = vrot.lane.b32.xlu0 %v1750, 112
    %v2350 = vpop.permute.xlu0 %2349
    %v2351 = vsel %vm730, %v2348, %v2350
    %v2352 = vsel %vm730, %v2350, %v2348
    %v2353 = vmul.f32 %v2351, %v736
    %v2354 = vmul.f32 %v2352, %v740
    %v2356 = vsel %vm92, %v2353, 0
    %v2359 = vsel %vm92, %v2354, 0
    %2361 = vmatprep.subr.mxu0 0.0
    %2362 = vmatpush1.msra.mxu0 0.0
    %2363 = vmatprep.subr.mxu0 0.0
    %2364 = vmatpush1.msra.mxu0 0.0
    %2365 = vmatprep.subr.mxu0 0.0
    %2366 = vmatpush1.msra.mxu0 0.0
    %2367 = vmatprep.subr.mxu0 0.0
    %2368 = vmatpush1.msra.mxu0 0.0
    %2369 = vmatprep.subr.mxu0 0.0
    %2370 = vmatpush1.msra.mxu0 0.0
    %2371 = vmatprep.subr.mxu0 0.0
    %2372 = vmatpush1.msra.mxu0 0.0
    %2373 = vmatprep.subr.mxu0 0.0
    %2374 = vmatpush1.msra.mxu0 0.0
    %2375 = vmatprep.subr.mxu0 0.0
    %2376 = vmatpush1.msra.mxu0 0.0
    %2377 = vmatprep.subr.mxu0 0.0
    %2378 = vmatpush1.msra.mxu0 0.0
    %2379 = vmatprep.subr.mxu0 0.0
    %2380 = vmatpush1.msra.mxu0 0.0
    %2381 = vmatprep.subr.mxu0 0.0
    %2382 = vmatpush1.msra.mxu0 0.0
    %2383 = vmatprep.subr.mxu0 0.0
    %2384 = vmatpush1.msra.mxu0 0.0
    %2385 = vmatprep.subr.mxu0 0.0
    %2386 = vmatpush1.msra.mxu0 0.0
    %2387 = vmatprep.subr.mxu0 0.0
    %2388 = vmatpush1.msra.mxu0 0.0
    %2389 = vmatprep.subr.mxu0 0.0
    %2390 = vmatpush1.msra.mxu0 0.0
    %2391 = vmatprep.subr.mxu0 %v2359
    %2392 = vmatpush1.msra.mxu0 %v2356
    %2393 = vmatprep.subr.mxu0 0.0
    %2394 = vmatpush2.msra.mxu0 0.0
    %2395 = vmatprep.subr.mxu0 0.0
    %2396 = vmatpush2.msra.mxu0 0.0
    %2397 = vmatprep.subr.mxu0 0.0
    %2398 = vmatpush2.msra.mxu0 0.0
    %2399 = vmatprep.subr.mxu0 0.0
    %2400 = vmatpush2.msra.mxu0 0.0
    %2401 = vmatprep.subr.mxu0 0.0
    %2402 = vmatpush2.msra.mxu0 0.0
    %2403 = vmatprep.subr.mxu0 0.0
    %2404 = vmatpush2.msra.mxu0 0.0
    %2405 = vmatprep.subr.mxu0 0.0
    %2406 = vmatpush2.msra.mxu0 0.0
    %2407 = vmatprep.subr.mxu0 0.0
    %2408 = vmatpush2.msra.mxu0 0.0
    %2409 = vmatprep.subr.mxu0 0.0
    %2410 = vmatpush2.msra.mxu0 0.0
    %2411 = vmatprep.subr.mxu0 0.0
    %2412 = vmatpush2.msra.mxu0 0.0
    %2413 = vmatprep.subr.mxu0 0.0
    %2414 = vmatpush2.msra.mxu0 0.0
    %2415 = vmatprep.subr.mxu0 0.0
    %2416 = vmatpush2.msra.mxu0 0.0
    %2417 = vmatprep.subr.mxu0 0.0
    %2418 = vmatpush2.msra.mxu0 0.0
    %2419 = vmatprep.subr.mxu0 0.0
    %2420 = vmatpush2.msra.mxu0 0.0
    %2421 = vmatprep.subr.mxu0 0.0
    %2422 = vmatpush2.msra.mxu0 0.0
    %2423 = vmatprep.subr.mxu0 0.0
    %2424 = vmatpush2.msra.mxu0 0.0
    %2425 = vmatprep.mubr.f32.mxu0 0.0
    %2426 = vmatmul.mubr.f32.gmra.mxu0 %v744
    %v2427 = vpop.f32.mrf.mxu0
    %v2428 = vadd.f32 0.0, %v2427
    %v2429 = vpop.f32.mrf.mxu0
    %v2430 = vadd.f32 0.0, %v2429
    %2431 = vdwg.mxu0
    %v2432 = vadd.f32 %v2345, %v2428
    %v2433 = vadd.f32 %v2346, %v2430
    %2434 = vrot.lane.b32.xlu0 %v1748, 111
    %v2435 = vpop.permute.xlu0 %2434
    %2436 = vrot.lane.b32.xlu0 %v1750, 111
    %v2437 = vpop.permute.xlu0 %2436
    %v2438 = vsel %vm829, %v2435, %v2437
    %v2439 = vsel %vm829, %v2437, %v2435
    %v2440 = vmul.f32 %v2438, %v835
    %v2441 = vmul.f32 %v2439, %v839
    %v2443 = vsel %vm92, %v2440, 0
    %v2446 = vsel %vm92, %v2441, 0
    %2448 = vmatprep.subr.mxu0 0.0
    %2449 = vmatpush1.msra.mxu0 0.0
    %2450 = vmatprep.subr.mxu0 0.0
    %2451 = vmatpush1.msra.mxu0 0.0
    %2452 = vmatprep.subr.mxu0 0.0
    %2453 = vmatpush1.msra.mxu0 0.0
    %2454 = vmatprep.subr.mxu0 0.0
    %2455 = vmatpush1.msra.mxu0 0.0
    %2456 = vmatprep.subr.mxu0 0.0
    %2457 = vmatpush1.msra.mxu0 0.0
    %2458 = vmatprep.subr.mxu0 0.0
    %2459 = vmatpush1.msra.mxu0 0.0
    %2460 = vmatprep.subr.mxu0 0.0
    %2461 = vmatpush1.msra.mxu0 0.0
    %2462 = vmatprep.subr.mxu0 0.0
    %2463 = vmatpush1.msra.mxu0 0.0
    %2464 = vmatprep.subr.mxu0 0.0
    %2465 = vmatpush1.msra.mxu0 0.0
    %2466 = vmatprep.subr.mxu0 0.0
    %2467 = vmatpush1.msra.mxu0 0.0
    %2468 = vmatprep.subr.mxu0 0.0
    %2469 = vmatpush1.msra.mxu0 0.0
    %2470 = vmatprep.subr.mxu0 0.0
    %2471 = vmatpush1.msra.mxu0 0.0
    %2472 = vmatprep.subr.mxu0 0.0
    %2473 = vmatpush1.msra.mxu0 0.0
    %2474 = vmatprep.subr.mxu0 0.0
    %2475 = vmatpush1.msra.mxu0 0.0
    %2476 = vmatprep.subr.mxu0 0.0
    %2477 = vmatpush1.msra.mxu0 0.0
    %2478 = vmatprep.subr.mxu0 %v2446
    %2479 = vmatpush1.msra.mxu0 %v2443
    %2480 = vmatprep.subr.mxu0 0.0
    %2481 = vmatpush2.msra.mxu0 0.0
    %2482 = vmatprep.subr.mxu0 0.0
    %2483 = vmatpush2.msra.mxu0 0.0
    %2484 = vmatprep.subr.mxu0 0.0
    %2485 = vmatpush2.msra.mxu0 0.0
    %2486 = vmatprep.subr.mxu0 0.0
    %2487 = vmatpush2.msra.mxu0 0.0
    %2488 = vmatprep.subr.mxu0 0.0
    %2489 = vmatpush2.msra.mxu0 0.0
    %2490 = vmatprep.subr.mxu0 0.0
    %2491 = vmatpush2.msra.mxu0 0.0
    %2492 = vmatprep.subr.mxu0 0.0
    %2493 = vmatpush2.msra.mxu0 0.0
    %2494 = vmatprep.subr.mxu0 0.0
    %2495 = vmatpush2.msra.mxu0 0.0
    %2496 = vmatprep.subr.mxu0 0.0
    %2497 = vmatpush2.msra.mxu0 0.0
    %2498 = vmatprep.subr.mxu0 0.0
    %2499 = vmatpush2.msra.mxu0 0.0
    %2500 = vmatprep.subr.mxu0 0.0
    %2501 = vmatpush2.msra.mxu0 0.0
    %2502 = vmatprep.subr.mxu0 0.0
    %2503 = vmatpush2.msra.mxu0 0.0
    %2504 = vmatprep.subr.mxu0 0.0
    %2505 = vmatpush2.msra.mxu0 0.0
    %2506 = vmatprep.subr.mxu0 0.0
    %2507 = vmatpush2.msra.mxu0 0.0
    %2508 = vmatprep.subr.mxu0 0.0
    %2509 = vmatpush2.msra.mxu0 0.0
    %2510 = vmatprep.subr.mxu0 0.0
    %2511 = vmatpush2.msra.mxu0 0.0
    %2512 = vmatprep.mubr.f32.mxu0 0.0
    %2513 = vmatmul.mubr.f32.gmra.mxu0 %v843
    %v2514 = vpop.f32.mrf.mxu0
    %v2515 = vadd.f32 0.0, %v2514
    %v2516 = vpop.f32.mrf.mxu0
    %v2517 = vadd.f32 0.0, %v2516
    %2518 = vdwg.mxu0
    %v2519 = vadd.f32 %v2432, %v2515
    %v2520 = vadd.f32 %v2433, %v2517
    %v2521 = vadd.f32 %v2519, %v927
    %v2522 = vadd.f32 %v2520, %v927
    %v2523 = vmax.f32 %v2521, 0.0
    %v2524 = vmax.f32 %v2522, 0.0
    %2525 = vrot.lane.b32.xlu0 %v2523, 17
    %v2526 = vpop.permute.xlu0 %2525
    %2527 = vrot.lane.b32.xlu0 %v2524, 17
    %v2528 = vpop.permute.xlu0 %2527
    %v2529 = vsel %vm58, %v2526, %v2528
    %v2530 = vsel %vm58, %v2528, %v2526
    %v2531 = vmul.f32 %v2530, %v64
    %v2532 = vmul.f32 %v2529, %v68
    %2533 = vrot.lane.b32.xlu0 %v2523, 16
    %v2534 = vpop.permute.xlu0 %2533
    %2535 = vrot.lane.b32.xlu0 %v2524, 16
    %v2536 = vpop.permute.xlu0 %2535
    %v2537 = vsel %vm75, %v2534, %v2536
    %v2538 = vsel %vm75, %v2536, %v2534
    %v2539 = vmul.f32 %v2538, %v81
    %v2540 = vmul.f32 %v2537, %v85
    %v2542 = vsel %vm92, %v2539, 0
    %v2545 = vsel %vm92, %v2540, 0
    %2547 = vmatprep.subr.mxu0 0.0
    %2548 = vmatpush1.msra.mxu0 0.0
    %2549 = vmatprep.subr.mxu0 0.0
    %2550 = vmatpush1.msra.mxu0 0.0
    %2551 = vmatprep.subr.mxu0 0.0
    %2552 = vmatpush1.msra.mxu0 0.0
    %2553 = vmatprep.subr.mxu0 0.0
    %2554 = vmatpush1.msra.mxu0 0.0
    %2555 = vmatprep.subr.mxu0 0.0
    %2556 = vmatpush1.msra.mxu0 0.0
    %2557 = vmatprep.subr.mxu0 0.0
    %2558 = vmatpush1.msra.mxu0 0.0
    %2559 = vmatprep.subr.mxu0 0.0
    %2560 = vmatpush1.msra.mxu0 0.0
    %2561 = vmatprep.subr.mxu0 0.0
    %2562 = vmatpush1.msra.mxu0 0.0
    %2563 = vmatprep.subr.mxu0 0.0
    %2564 = vmatpush1.msra.mxu0 0.0
    %2565 = vmatprep.subr.mxu0 0.0
    %2566 = vmatpush1.msra.mxu0 0.0
    %2567 = vmatprep.subr.mxu0 0.0
    %2568 = vmatpush1.msra.mxu0 0.0
    %2569 = vmatprep.subr.mxu0 0.0
    %2570 = vmatpush1.msra.mxu0 0.0
    %2571 = vmatprep.subr.mxu0 0.0
    %2572 = vmatpush1.msra.mxu0 0.0
    %2573 = vmatprep.subr.mxu0 0.0
    %2574 = vmatpush1.msra.mxu0 0.0
    %2575 = vmatprep.subr.mxu0 0.0
    %2576 = vmatpush1.msra.mxu0 0.0
    %2577 = vmatprep.subr.mxu0 %v2545
    %2578 = vmatpush1.msra.mxu0 %v2542
    %2579 = vmatprep.subr.mxu0 0.0
    %2580 = vmatpush2.msra.mxu0 0.0
    %2581 = vmatprep.subr.mxu0 0.0
    %2582 = vmatpush2.msra.mxu0 0.0
    %2583 = vmatprep.subr.mxu0 0.0
    %2584 = vmatpush2.msra.mxu0 0.0
    %2585 = vmatprep.subr.mxu0 0.0
    %2586 = vmatpush2.msra.mxu0 0.0
    %2587 = vmatprep.subr.mxu0 0.0
    %2588 = vmatpush2.msra.mxu0 0.0
    %2589 = vmatprep.subr.mxu0 0.0
    %2590 = vmatpush2.msra.mxu0 0.0
    %2591 = vmatprep.subr.mxu0 0.0
    %2592 = vmatpush2.msra.mxu0 0.0
    %2593 = vmatprep.subr.mxu0 0.0
    %2594 = vmatpush2.msra.mxu0 0.0
    %2595 = vmatprep.subr.mxu0 0.0
    %2596 = vmatpush2.msra.mxu0 0.0
    %2597 = vmatprep.subr.mxu0 0.0
    %2598 = vmatpush2.msra.mxu0 0.0
    %2599 = vmatprep.subr.mxu0 0.0
    %2600 = vmatpush2.msra.mxu0 0.0
    %2601 = vmatprep.subr.mxu0 0.0
    %2602 = vmatpush2.msra.mxu0 0.0
    %2603 = vmatprep.subr.mxu0 0.0
    %2604 = vmatpush2.msra.mxu0 0.0
    %2605 = vmatprep.subr.mxu0 0.0
    %2606 = vmatpush2.msra.mxu0 0.0
    %2607 = vmatprep.subr.mxu0 0.0
    %2608 = vmatpush2.msra.mxu0 0.0
    %2609 = vmatprep.subr.mxu0 0.0
    %2610 = vmatpush2.msra.mxu0 0.0
    %2611 = vmatprep.mubr.f32.mxu0 0.0
    %2612 = vmatmul.mubr.f32.gmra.mxu0 %v950
    %v2613 = vpop.f32.mrf.mxu0
    %v2614 = vadd.f32 0.0, %v2613
    %v2615 = vpop.f32.mrf.mxu0
    %v2616 = vadd.f32 0.0, %v2615
    %2617 = vdwg.mxu0
    %v2619 = vsel %vm92, %v2531, 0
    %v2622 = vsel %vm92, %v2532, 0
    %2624 = vmatprep.subr.mxu0 0.0
    %2625 = vmatpush1.msra.mxu0 0.0
    %2626 = vmatprep.subr.mxu0 0.0
    %2627 = vmatpush1.msra.mxu0 0.0
    %2628 = vmatprep.subr.mxu0 0.0
    %2629 = vmatpush1.msra.mxu0 0.0
    %2630 = vmatprep.subr.mxu0 0.0
    %2631 = vmatpush1.msra.mxu0 0.0
    %2632 = vmatprep.subr.mxu0 0.0
    %2633 = vmatpush1.msra.mxu0 0.0
    %2634 = vmatprep.subr.mxu0 0.0
    %2635 = vmatpush1.msra.mxu0 0.0
    %2636 = vmatprep.subr.mxu0 0.0
    %2637 = vmatpush1.msra.mxu0 0.0
    %2638 = vmatprep.subr.mxu0 0.0
    %2639 = vmatpush1.msra.mxu0 0.0
    %2640 = vmatprep.subr.mxu0 0.0
    %2641 = vmatpush1.msra.mxu0 0.0
    %2642 = vmatprep.subr.mxu0 0.0
    %2643 = vmatpush1.msra.mxu0 0.0
    %2644 = vmatprep.subr.mxu0 0.0
    %2645 = vmatpush1.msra.mxu0 0.0
    %2646 = vmatprep.subr.mxu0 0.0
    %2647 = vmatpush1.msra.mxu0 0.0
    %2648 = vmatprep.subr.mxu0 0.0
    %2649 = vmatpush1.msra.mxu0 0.0
    %2650 = vmatprep.subr.mxu0 0.0
    %2651 = vmatpush1.msra.mxu0 0.0
    %2652 = vmatprep.subr.mxu0 0.0
    %2653 = vmatpush1.msra.mxu0 0.0
    %2654 = vmatprep.subr.mxu0 %v2622
    %2655 = vmatpush1.msra.mxu0 %v2619
    %2656 = vmatprep.subr.mxu0 0.0
    %2657 = vmatpush2.msra.mxu0 0.0
    %2658 = vmatprep.subr.mxu0 0.0
    %2659 = vmatpush2.msra.mxu0 0.0
    %2660 = vmatprep.subr.mxu0 0.0
    %2661 = vmatpush2.msra.mxu0 0.0
    %2662 = vmatprep.subr.mxu0 0.0
    %2663 = vmatpush2.msra.mxu0 0.0
    %2664 = vmatprep.subr.mxu0 0.0
    %2665 = vmatpush2.msra.mxu0 0.0
    %2666 = vmatprep.subr.mxu0 0.0
    %2667 = vmatpush2.msra.mxu0 0.0
    %2668 = vmatprep.subr.mxu0 0.0
    %2669 = vmatpush2.msra.mxu0 0.0
    %2670 = vmatprep.subr.mxu0 0.0
    %2671 = vmatpush2.msra.mxu0 0.0
    %2672 = vmatprep.subr.mxu0 0.0
    %2673 = vmatpush2.msra.mxu0 0.0
    %2674 = vmatprep.subr.mxu0 0.0
    %2675 = vmatpush2.msra.mxu0 0.0
    %2676 = vmatprep.subr.mxu0 0.0
    %2677 = vmatpush2.msra.mxu0 0.0
    %2678 = vmatprep.subr.mxu0 0.0
    %2679 = vmatpush2.msra.mxu0 0.0
    %2680 = vmatprep.subr.mxu0 0.0
    %2681 = vmatpush2.msra.mxu0 0.0
    %2682 = vmatprep.subr.mxu0 0.0
    %2683 = vmatpush2.msra.mxu0 0.0
    %2684 = vmatprep.subr.mxu0 0.0
    %2685 = vmatpush2.msra.mxu0 0.0
    %2686 = vmatprep.subr.mxu0 0.0
    %2687 = vmatpush2.msra.mxu0 0.0
    %2688 = vmatprep.mubr.f32.mxu0 0.0
    %2689 = vmatmul.mubr.f32.gmra.mxu0 %v1030
    %v2690 = vpop.f32.mrf.mxu0
    %v2691 = vadd.f32 %v2614, %v2690
    %v2692 = vpop.f32.mrf.mxu0
    %v2693 = vadd.f32 %v2616, %v2692
    %2694 = vdwg.mxu0
    %2695 = vrot.lane.b32.xlu0 %v2523, 15
    %v2696 = vpop.permute.xlu0 %2695
    %2697 = vrot.lane.b32.xlu0 %v2524, 15
    %v2698 = vpop.permute.xlu0 %2697
    %v2699 = vsel %vm254, %v2696, %v2698
    %v2700 = vsel %vm254, %v2698, %v2696
    %v2701 = vmul.f32 %v2700, %v260
    %v2702 = vmul.f32 %v2699, %v264
    %v2704 = vsel %vm92, %v2701, 0
    %v2707 = vsel %vm92, %v2702, 0
    %2709 = vmatprep.subr.mxu0 0.0
    %2710 = vmatpush1.msra.mxu0 0.0
    %2711 = vmatprep.subr.mxu0 0.0
    %2712 = vmatpush1.msra.mxu0 0.0
    %2713 = vmatprep.subr.mxu0 0.0
    %2714 = vmatpush1.msra.mxu0 0.0
    %2715 = vmatprep.subr.mxu0 0.0
    %2716 = vmatpush1.msra.mxu0 0.0
    %2717 = vmatprep.subr.mxu0 0.0
    %2718 = vmatpush1.msra.mxu0 0.0
    %2719 = vmatprep.subr.mxu0 0.0
    %2720 = vmatpush1.msra.mxu0 0.0
    %2721 = vmatprep.subr.mxu0 0.0
    %2722 = vmatpush1.msra.mxu0 0.0
    %2723 = vmatprep.subr.mxu0 0.0
    %2724 = vmatpush1.msra.mxu0 0.0
    %2725 = vmatprep.subr.mxu0 0.0
    %2726 = vmatpush1.msra.mxu0 0.0
    %2727 = vmatprep.subr.mxu0 0.0
    %2728 = vmatpush1.msra.mxu0 0.0
    %2729 = vmatprep.subr.mxu0 0.0
    %2730 = vmatpush1.msra.mxu0 0.0
    %2731 = vmatprep.subr.mxu0 0.0
    %2732 = vmatpush1.msra.mxu0 0.0
    %2733 = vmatprep.subr.mxu0 0.0
    %2734 = vmatpush1.msra.mxu0 0.0
    %2735 = vmatprep.subr.mxu0 0.0
    %2736 = vmatpush1.msra.mxu0 0.0
    %2737 = vmatprep.subr.mxu0 0.0
    %2738 = vmatpush1.msra.mxu0 0.0
    %2739 = vmatprep.subr.mxu0 %v2707
    %2740 = vmatpush1.msra.mxu0 %v2704
    %2741 = vmatprep.subr.mxu0 0.0
    %2742 = vmatpush2.msra.mxu0 0.0
    %2743 = vmatprep.subr.mxu0 0.0
    %2744 = vmatpush2.msra.mxu0 0.0
    %2745 = vmatprep.subr.mxu0 0.0
    %2746 = vmatpush2.msra.mxu0 0.0
    %2747 = vmatprep.subr.mxu0 0.0
    %2748 = vmatpush2.msra.mxu0 0.0
    %2749 = vmatprep.subr.mxu0 0.0
    %2750 = vmatpush2.msra.mxu0 0.0
    %2751 = vmatprep.subr.mxu0 0.0
    %2752 = vmatpush2.msra.mxu0 0.0
    %2753 = vmatprep.subr.mxu0 0.0
    %2754 = vmatpush2.msra.mxu0 0.0
    %2755 = vmatprep.subr.mxu0 0.0
    %2756 = vmatpush2.msra.mxu0 0.0
    %2757 = vmatprep.subr.mxu0 0.0
    %2758 = vmatpush2.msra.mxu0 0.0
    %2759 = vmatprep.subr.mxu0 0.0
    %2760 = vmatpush2.msra.mxu0 0.0
    %2761 = vmatprep.subr.mxu0 0.0
    %2762 = vmatpush2.msra.mxu0 0.0
    %2763 = vmatprep.subr.mxu0 0.0
    %2764 = vmatpush2.msra.mxu0 0.0
    %2765 = vmatprep.subr.mxu0 0.0
    %2766 = vmatpush2.msra.mxu0 0.0
    %2767 = vmatprep.subr.mxu0 0.0
    %2768 = vmatpush2.msra.mxu0 0.0
    %2769 = vmatprep.subr.mxu0 0.0
    %2770 = vmatpush2.msra.mxu0 0.0
    %2771 = vmatprep.subr.mxu0 0.0
    %2772 = vmatpush2.msra.mxu0 0.0
    %2773 = vmatprep.mubr.f32.mxu0 0.0
    %2774 = vmatmul.mubr.f32.gmra.mxu0 %v1118
    %v2775 = vpop.f32.mrf.mxu0
    %v2776 = vadd.f32 0.0, %v2775
    %v2777 = vpop.f32.mrf.mxu0
    %v2778 = vadd.f32 0.0, %v2777
    %2779 = vdwg.mxu0
    %v2780 = vadd.f32 %v2691, %v2776
    %v2781 = vadd.f32 %v2693, %v2778
    %2782 = vrot.lane.b32.xlu0 %v2523, 1
    %v2783 = vpop.permute.xlu0 %2782
    %2784 = vrot.lane.b32.xlu0 %v2524, 1
    %v2785 = vpop.permute.xlu0 %2784
    %v2786 = vsel %vm353, %v2783, %v2785
    %v2787 = vsel %vm353, %v2785, %v2783
    %v2788 = vmul.f32 %v2787, %v359
    %v2789 = vmul.f32 %v2786, %v363
    %v2791 = vsel %vm92, %v2788, 0
    %v2794 = vsel %vm92, %v2789, 0
    %2796 = vmatprep.subr.mxu0 0.0
    %2797 = vmatpush1.msra.mxu0 0.0
    %2798 = vmatprep.subr.mxu0 0.0
    %2799 = vmatpush1.msra.mxu0 0.0
    %2800 = vmatprep.subr.mxu0 0.0
    %2801 = vmatpush1.msra.mxu0 0.0
    %2802 = vmatprep.subr.mxu0 0.0
    %2803 = vmatpush1.msra.mxu0 0.0
    %2804 = vmatprep.subr.mxu0 0.0
    %2805 = vmatpush1.msra.mxu0 0.0
    %2806 = vmatprep.subr.mxu0 0.0
    %2807 = vmatpush1.msra.mxu0 0.0
    %2808 = vmatprep.subr.mxu0 0.0
    %2809 = vmatpush1.msra.mxu0 0.0
    %2810 = vmatprep.subr.mxu0 0.0
    %2811 = vmatpush1.msra.mxu0 0.0
    %2812 = vmatprep.subr.mxu0 0.0
    %2813 = vmatpush1.msra.mxu0 0.0
    %2814 = vmatprep.subr.mxu0 0.0
    %2815 = vmatpush1.msra.mxu0 0.0
    %2816 = vmatprep.subr.mxu0 0.0
    %2817 = vmatpush1.msra.mxu0 0.0
    %2818 = vmatprep.subr.mxu0 0.0
    %2819 = vmatpush1.msra.mxu0 0.0
    %2820 = vmatprep.subr.mxu0 0.0
    %2821 = vmatpush1.msra.mxu0 0.0
    %2822 = vmatprep.subr.mxu0 0.0
    %2823 = vmatpush1.msra.mxu0 0.0
    %2824 = vmatprep.subr.mxu0 0.0
    %2825 = vmatpush1.msra.mxu0 0.0
    %2826 = vmatprep.subr.mxu0 %v2794
    %2827 = vmatpush1.msra.mxu0 %v2791
    %2828 = vmatprep.subr.mxu0 0.0
    %2829 = vmatpush2.msra.mxu0 0.0
    %2830 = vmatprep.subr.mxu0 0.0
    %2831 = vmatpush2.msra.mxu0 0.0
    %2832 = vmatprep.subr.mxu0 0.0
    %2833 = vmatpush2.msra.mxu0 0.0
    %2834 = vmatprep.subr.mxu0 0.0
    %2835 = vmatpush2.msra.mxu0 0.0
    %2836 = vmatprep.subr.mxu0 0.0
    %2837 = vmatpush2.msra.mxu0 0.0
    %2838 = vmatprep.subr.mxu0 0.0
    %2839 = vmatpush2.msra.mxu0 0.0
    %2840 = vmatprep.subr.mxu0 0.0
    %2841 = vmatpush2.msra.mxu0 0.0
    %2842 = vmatprep.subr.mxu0 0.0
    %2843 = vmatpush2.msra.mxu0 0.0
    %2844 = vmatprep.subr.mxu0 0.0
    %2845 = vmatpush2.msra.mxu0 0.0
    %2846 = vmatprep.subr.mxu0 0.0
    %2847 = vmatpush2.msra.mxu0 0.0
    %2848 = vmatprep.subr.mxu0 0.0
    %2849 = vmatpush2.msra.mxu0 0.0
    %2850 = vmatprep.subr.mxu0 0.0
    %2851 = vmatpush2.msra.mxu0 0.0
    %2852 = vmatprep.subr.mxu0 0.0
    %2853 = vmatpush2.msra.mxu0 0.0
    %2854 = vmatprep.subr.mxu0 0.0
    %2855 = vmatpush2.msra.mxu0 0.0
    %2856 = vmatprep.subr.mxu0 0.0
    %2857 = vmatpush2.msra.mxu0 0.0
    %2858 = vmatprep.subr.mxu0 0.0
    %2859 = vmatpush2.msra.mxu0 0.0
    %2860 = vmatprep.mubr.f32.mxu0 0.0
    %2861 = vmatmul.mubr.f32.gmra.mxu0 %v1208
    %v2862 = vpop.f32.mrf.mxu0
    %v2863 = vadd.f32 0.0, %v2862
    %v2864 = vpop.f32.mrf.mxu0
    %v2865 = vadd.f32 0.0, %v2864
    %2866 = vdwg.mxu0
    %v2867 = vadd.f32 %v2780, %v2863
    %v2868 = vadd.f32 %v2781, %v2865
    %v2870 = vsel %vm92, %v2523, 0
    %v2873 = vsel %vm92, %v2524, 0
    %2875 = vmatprep.subr.mxu0 0.0
    %2876 = vmatpush1.msra.mxu0 0.0
    %2877 = vmatprep.subr.mxu0 0.0
    %2878 = vmatpush1.msra.mxu0 0.0
    %2879 = vmatprep.subr.mxu0 0.0
    %2880 = vmatpush1.msra.mxu0 0.0
    %2881 = vmatprep.subr.mxu0 0.0
    %2882 = vmatpush1.msra.mxu0 0.0
    %2883 = vmatprep.subr.mxu0 0.0
    %2884 = vmatpush1.msra.mxu0 0.0
    %2885 = vmatprep.subr.mxu0 0.0
    %2886 = vmatpush1.msra.mxu0 0.0
    %2887 = vmatprep.subr.mxu0 0.0
    %2888 = vmatpush1.msra.mxu0 0.0
    %2889 = vmatprep.subr.mxu0 0.0
    %2890 = vmatpush1.msra.mxu0 0.0
    %2891 = vmatprep.subr.mxu0 0.0
    %2892 = vmatpush1.msra.mxu0 0.0
    %2893 = vmatprep.subr.mxu0 0.0
    %2894 = vmatpush1.msra.mxu0 0.0
    %2895 = vmatprep.subr.mxu0 0.0
    %2896 = vmatpush1.msra.mxu0 0.0
    %2897 = vmatprep.subr.mxu0 0.0
    %2898 = vmatpush1.msra.mxu0 0.0
    %2899 = vmatprep.subr.mxu0 0.0
    %2900 = vmatpush1.msra.mxu0 0.0
    %2901 = vmatprep.subr.mxu0 0.0
    %2902 = vmatpush1.msra.mxu0 0.0
    %2903 = vmatprep.subr.mxu0 0.0
    %2904 = vmatpush1.msra.mxu0 0.0
    %2905 = vmatprep.subr.mxu0 %v2873
    %2906 = vmatpush1.msra.mxu0 %v2870
    %2907 = vmatprep.subr.mxu0 0.0
    %2908 = vmatpush2.msra.mxu0 0.0
    %2909 = vmatprep.subr.mxu0 0.0
    %2910 = vmatpush2.msra.mxu0 0.0
    %2911 = vmatprep.subr.mxu0 0.0
    %2912 = vmatpush2.msra.mxu0 0.0
    %2913 = vmatprep.subr.mxu0 0.0
    %2914 = vmatpush2.msra.mxu0 0.0
    %2915 = vmatprep.subr.mxu0 0.0
    %2916 = vmatpush2.msra.mxu0 0.0
    %2917 = vmatprep.subr.mxu0 0.0
    %2918 = vmatpush2.msra.mxu0 0.0
    %2919 = vmatprep.subr.mxu0 0.0
    %2920 = vmatpush2.msra.mxu0 0.0
    %2921 = vmatprep.subr.mxu0 0.0
    %2922 = vmatpush2.msra.mxu0 0.0
    %2923 = vmatprep.subr.mxu0 0.0
    %2924 = vmatpush2.msra.mxu0 0.0
    %2925 = vmatprep.subr.mxu0 0.0
    %2926 = vmatpush2.msra.mxu0 0.0
    %2927 = vmatprep.subr.mxu0 0.0
    %2928 = vmatpush2.msra.mxu0 0.0
    %2929 = vmatprep.subr.mxu0 0.0
    %2930 = vmatpush2.msra.mxu0 0.0
    %2931 = vmatprep.subr.mxu0 0.0
    %2932 = vmatpush2.msra.mxu0 0.0
    %2933 = vmatprep.subr.mxu0 0.0
    %2934 = vmatpush2.msra.mxu0 0.0
    %2935 = vmatprep.subr.mxu0 0.0
    %2936 = vmatpush2.msra.mxu0 0.0
    %2937 = vmatprep.subr.mxu0 0.0
    %2938 = vmatpush2.msra.mxu0 0.0
    %2939 = vmatprep.mubr.f32.mxu0 0.0
    %2940 = vmatmul.mubr.f32.gmra.mxu0 %v1290
    %v2941 = vpop.f32.mrf.mxu0
    %v2942 = vadd.f32 0.0, %v2941
    %v2943 = vpop.f32.mrf.mxu0
    %v2944 = vadd.f32 0.0, %v2943
    %2945 = vdwg.mxu0
    %v2946 = vadd.f32 %v2867, %v2942
    %v2947 = vadd.f32 %v2868, %v2944
    %2948 = vrot.lane.b32.xlu0 %v2523, 127
    %v2949 = vpop.permute.xlu0 %2948
    %2950 = vrot.lane.b32.xlu0 %v2524, 127
    %v2951 = vpop.permute.xlu0 %2950
    %v2952 = vsel %vm532, %v2949, %v2951
    %v2953 = vsel %vm532, %v2951, %v2949
    %v2954 = vmul.f32 %v2952, %v538
    %v2955 = vmul.f32 %v2953, %v542
    %v2957 = vsel %vm92, %v2954, 0
    %v2960 = vsel %vm92, %v2955, 0
    %2962 = vmatprep.subr.mxu0 0.0
    %2963 = vmatpush1.msra.mxu0 0.0
    %2964 = vmatprep.subr.mxu0 0.0
    %2965 = vmatpush1.msra.mxu0 0.0
    %2966 = vmatprep.subr.mxu0 0.0
    %2967 = vmatpush1.msra.mxu0 0.0
    %2968 = vmatprep.subr.mxu0 0.0
    %2969 = vmatpush1.msra.mxu0 0.0
    %2970 = vmatprep.subr.mxu0 0.0
    %2971 = vmatpush1.msra.mxu0 0.0
    %2972 = vmatprep.subr.mxu0 0.0
    %2973 = vmatpush1.msra.mxu0 0.0
    %2974 = vmatprep.subr.mxu0 0.0
    %2975 = vmatpush1.msra.mxu0 0.0
    %2976 = vmatprep.subr.mxu0 0.0
    %2977 = vmatpush1.msra.mxu0 0.0
    %2978 = vmatprep.subr.mxu0 0.0
    %2979 = vmatpush1.msra.mxu0 0.0
    %2980 = vmatprep.subr.mxu0 0.0
    %2981 = vmatpush1.msra.mxu0 0.0
    %2982 = vmatprep.subr.mxu0 0.0
    %2983 = vmatpush1.msra.mxu0 0.0
    %2984 = vmatprep.subr.mxu0 0.0
    %2985 = vmatpush1.msra.mxu0 0.0
    %2986 = vmatprep.subr.mxu0 0.0
    %2987 = vmatpush1.msra.mxu0 0.0
    %2988 = vmatprep.subr.mxu0 0.0
    %2989 = vmatpush1.msra.mxu0 0.0
    %2990 = vmatprep.subr.mxu0 0.0
    %2991 = vmatpush1.msra.mxu0 0.0
    %2992 = vmatprep.subr.mxu0 %v2960
    %2993 = vmatpush1.msra.mxu0 %v2957
    %2994 = vmatprep.subr.mxu0 0.0
    %2995 = vmatpush2.msra.mxu0 0.0
    %2996 = vmatprep.subr.mxu0 0.0
    %2997 = vmatpush2.msra.mxu0 0.0
    %2998 = vmatprep.subr.mxu0 0.0
    %2999 = vmatpush2.msra.mxu0 0.0
    %3000 = vmatprep.subr.mxu0 0.0
    %3001 = vmatpush2.msra.mxu0 0.0
    %3002 = vmatprep.subr.mxu0 0.0
    %3003 = vmatpush2.msra.mxu0 0.0
    %3004 = vmatprep.subr.mxu0 0.0
    %3005 = vmatpush2.msra.mxu0 0.0
    %3006 = vmatprep.subr.mxu0 0.0
    %3007 = vmatpush2.msra.mxu0 0.0
    %3008 = vmatprep.subr.mxu0 0.0
    %3009 = vmatpush2.msra.mxu0 0.0
    %3010 = vmatprep.subr.mxu0 0.0
    %3011 = vmatpush2.msra.mxu0 0.0
    %3012 = vmatprep.subr.mxu0 0.0
    %3013 = vmatpush2.msra.mxu0 0.0
    %3014 = vmatprep.subr.mxu0 0.0
    %3015 = vmatpush2.msra.mxu0 0.0
    %3016 = vmatprep.subr.mxu0 0.0
    %3017 = vmatpush2.msra.mxu0 0.0
    %3018 = vmatprep.subr.mxu0 0.0
    %3019 = vmatpush2.msra.mxu0 0.0
    %3020 = vmatprep.subr.mxu0 0.0
    %3021 = vmatpush2.msra.mxu0 0.0
    %3022 = vmatprep.subr.mxu0 0.0
    %3023 = vmatpush2.msra.mxu0 0.0
    %3024 = vmatprep.subr.mxu0 0.0
    %3025 = vmatpush2.msra.mxu0 0.0
    %3026 = vmatprep.mubr.f32.mxu0 0.0
    %3027 = vmatmul.mubr.f32.gmra.mxu0 %v1380
    %v3028 = vpop.f32.mrf.mxu0
    %v3029 = vadd.f32 0.0, %v3028
    %v3030 = vpop.f32.mrf.mxu0
    %v3031 = vadd.f32 0.0, %v3030
    %3032 = vdwg.mxu0
    %v3033 = vadd.f32 %v2946, %v3029
    %v3034 = vadd.f32 %v2947, %v3031
    %3035 = vrot.lane.b32.xlu0 %v2523, 113
    %v3036 = vpop.permute.xlu0 %3035
    %3037 = vrot.lane.b32.xlu0 %v2524, 113
    %v3038 = vpop.permute.xlu0 %3037
    %v3039 = vsel %vm631, %v3036, %v3038
    %v3040 = vsel %vm631, %v3038, %v3036
    %v3041 = vmul.f32 %v3039, %v637
    %v3042 = vmul.f32 %v3040, %v641
    %v3044 = vsel %vm92, %v3041, 0
    %v3047 = vsel %vm92, %v3042, 0
    %3049 = vmatprep.subr.mxu0 0.0
    %3050 = vmatpush1.msra.mxu0 0.0
    %3051 = vmatprep.subr.mxu0 0.0
    %3052 = vmatpush1.msra.mxu0 0.0
    %3053 = vmatprep.subr.mxu0 0.0
    %3054 = vmatpush1.msra.mxu0 0.0
    %3055 = vmatprep.subr.mxu0 0.0
    %3056 = vmatpush1.msra.mxu0 0.0
    %3057 = vmatprep.subr.mxu0 0.0
    %3058 = vmatpush1.msra.mxu0 0.0
    %3059 = vmatprep.subr.mxu0 0.0
    %3060 = vmatpush1.msra.mxu0 0.0
    %3061 = vmatprep.subr.mxu0 0.0
    %3062 = vmatpush1.msra.mxu0 0.0
    %3063 = vmatprep.subr.mxu0 0.0
    %3064 = vmatpush1.msra.mxu0 0.0
    %3065 = vmatprep.subr.mxu0 0.0
    %3066 = vmatpush1.msra.mxu0 0.0
    %3067 = vmatprep.subr.mxu0 0.0
    %3068 = vmatpush1.msra.mxu0 0.0
    %3069 = vmatprep.subr.mxu0 0.0
    %3070 = vmatpush1.msra.mxu0 0.0
    %3071 = vmatprep.subr.mxu0 0.0
    %3072 = vmatpush1.msra.mxu0 0.0
    %3073 = vmatprep.subr.mxu0 0.0
    %3074 = vmatpush1.msra.mxu0 0.0
    %3075 = vmatprep.subr.mxu0 0.0
    %3076 = vmatpush1.msra.mxu0 0.0
    %3077 = vmatprep.subr.mxu0 0.0
    %3078 = vmatpush1.msra.mxu0 0.0
    %3079 = vmatprep.subr.mxu0 %v3047
    %3080 = vmatpush1.msra.mxu0 %v3044
    %3081 = vmatprep.subr.mxu0 0.0
    %3082 = vmatpush2.msra.mxu0 0.0
    %3083 = vmatprep.subr.mxu0 0.0
    %3084 = vmatpush2.msra.mxu0 0.0
    %3085 = vmatprep.subr.mxu0 0.0
    %3086 = vmatpush2.msra.mxu0 0.0
    %3087 = vmatprep.subr.mxu0 0.0
    %3088 = vmatpush2.msra.mxu0 0.0
    %3089 = vmatprep.subr.mxu0 0.0
    %3090 = vmatpush2.msra.mxu0 0.0
    %3091 = vmatprep.subr.mxu0 0.0
    %3092 = vmatpush2.msra.mxu0 0.0
    %3093 = vmatprep.subr.mxu0 0.0
    %3094 = vmatpush2.msra.mxu0 0.0
    %3095 = vmatprep.subr.mxu0 0.0
    %3096 = vmatpush2.msra.mxu0 0.0
    %3097 = vmatprep.subr.mxu0 0.0
    %3098 = vmatpush2.msra.mxu0 0.0
    %3099 = vmatprep.subr.mxu0 0.0
    %3100 = vmatpush2.msra.mxu0 0.0
    %3101 = vmatprep.subr.mxu0 0.0
    %3102 = vmatpush2.msra.mxu0 0.0
    %3103 = vmatprep.subr.mxu0 0.0
    %3104 = vmatpush2.msra.mxu0 0.0
    %3105 = vmatprep.subr.mxu0 0.0
    %3106 = vmatpush2.msra.mxu0 0.0
    %3107 = vmatprep.subr.mxu0 0.0
    %3108 = vmatpush2.msra.mxu0 0.0
    %3109 = vmatprep.subr.mxu0 0.0
    %3110 = vmatpush2.msra.mxu0 0.0
    %3111 = vmatprep.subr.mxu0 0.0
    %3112 = vmatpush2.msra.mxu0 0.0
    %3113 = vmatprep.mubr.f32.mxu0 0.0
    %3114 = vmatmul.mubr.f32.gmra.mxu0 %v1470
    %v3115 = vpop.f32.mrf.mxu0
    %v3116 = vadd.f32 0.0, %v3115
    %v3117 = vpop.f32.mrf.mxu0
    %v3118 = vadd.f32 0.0, %v3117
    %3119 = vdwg.mxu0
    %v3120 = vadd.f32 %v3033, %v3116
    %v3121 = vadd.f32 %v3034, %v3118
    %3122 = vrot.lane.b32.xlu0 %v2523, 112
    %v3123 = vpop.permute.xlu0 %3122
    %3124 = vrot.lane.b32.xlu0 %v2524, 112
    %v3125 = vpop.permute.xlu0 %3124
    %v3126 = vsel %vm730, %v3123, %v3125
    %v3127 = vsel %vm730, %v3125, %v3123
    %v3128 = vmul.f32 %v3126, %v736
    %v3129 = vmul.f32 %v3127, %v740
    %v3131 = vsel %vm92, %v3128, 0
    %v3134 = vsel %vm92, %v3129, 0
    %3136 = vmatprep.subr.mxu0 0.0
    %3137 = vmatpush1.msra.mxu0 0.0
    %3138 = vmatprep.subr.mxu0 0.0
    %3139 = vmatpush1.msra.mxu0 0.0
    %3140 = vmatprep.subr.mxu0 0.0
    %3141 = vmatpush1.msra.mxu0 0.0
    %3142 = vmatprep.subr.mxu0 0.0
    %3143 = vmatpush1.msra.mxu0 0.0
    %3144 = vmatprep.subr.mxu0 0.0
    %3145 = vmatpush1.msra.mxu0 0.0
    %3146 = vmatprep.subr.mxu0 0.0
    %3147 = vmatpush1.msra.mxu0 0.0
    %3148 = vmatprep.subr.mxu0 0.0
    %3149 = vmatpush1.msra.mxu0 0.0
    %3150 = vmatprep.subr.mxu0 0.0
    %3151 = vmatpush1.msra.mxu0 0.0
    %3152 = vmatprep.subr.mxu0 0.0
    %3153 = vmatpush1.msra.mxu0 0.0
    %3154 = vmatprep.subr.mxu0 0.0
    %3155 = vmatpush1.msra.mxu0 0.0
    %3156 = vmatprep.subr.mxu0 0.0
    %3157 = vmatpush1.msra.mxu0 0.0
    %3158 = vmatprep.subr.mxu0 0.0
    %3159 = vmatpush1.msra.mxu0 0.0
    %3160 = vmatprep.subr.mxu0 0.0
    %3161 = vmatpush1.msra.mxu0 0.0
    %3162 = vmatprep.subr.mxu0 0.0
    %3163 = vmatpush1.msra.mxu0 0.0
    %3164 = vmatprep.subr.mxu0 0.0
    %3165 = vmatpush1.msra.mxu0 0.0
    %3166 = vmatprep.subr.mxu0 %v3134
    %3167 = vmatpush1.msra.mxu0 %v3131
    %3168 = vmatprep.subr.mxu0 0.0
    %3169 = vmatpush2.msra.mxu0 0.0
    %3170 = vmatprep.subr.mxu0 0.0
    %3171 = vmatpush2.msra.mxu0 0.0
    %3172 = vmatprep.subr.mxu0 0.0
    %3173 = vmatpush2.msra.mxu0 0.0
    %3174 = vmatprep.subr.mxu0 0.0
    %3175 = vmatpush2.msra.mxu0 0.0
    %3176 = vmatprep.subr.mxu0 0.0
    %3177 = vmatpush2.msra.mxu0 0.0
    %3178 = vmatprep.subr.mxu0 0.0
    %3179 = vmatpush2.msra.mxu0 0.0
    %3180 = vmatprep.subr.mxu0 0.0
    %3181 = vmatpush2.msra.mxu0 0.0
    %3182 = vmatprep.subr.mxu0 0.0
    %3183 = vmatpush2.msra.mxu0 0.0
    %3184 = vmatprep.subr.mxu0 0.0
    %3185 = vmatpush2.msra.mxu0 0.0
    %3186 = vmatprep.subr.mxu0 0.0
    %3187 = vmatpush2.msra.mxu0 0.0
    %3188 = vmatprep.subr.mxu0 0.0
    %3189 = vmatpush2.msra.mxu0 0.0
    %3190 = vmatprep.subr.mxu0 0.0
    %3191 = vmatpush2.msra.mxu0 0.0
    %3192 = vmatprep.subr.mxu0 0.0
    %3193 = vmatpush2.msra.mxu0 0.0
    %3194 = vmatprep.subr.mxu0 0.0
    %3195 = vmatpush2.msra.mxu0 0.0
    %3196 = vmatprep.subr.mxu0 0.0
    %3197 = vmatpush2.msra.mxu0 0.0
    %3198 = vmatprep.subr.mxu0 0.0
    %3199 = vmatpush2.msra.mxu0 0.0
    %3200 = vmatprep.mubr.f32.mxu0 0.0
    %3201 = vmatmul.mubr.f32.gmra.mxu0 %v1560
    %v3202 = vpop.f32.mrf.mxu0
    %v3203 = vadd.f32 0.0, %v3202
    %v3204 = vpop.f32.mrf.mxu0
    %v3205 = vadd.f32 0.0, %v3204
    %3206 = vdwg.mxu0
    %v3207 = vadd.f32 %v3120, %v3203
    %v3208 = vadd.f32 %v3121, %v3205
    %3209 = vrot.lane.b32.xlu0 %v2523, 111
    %v3210 = vpop.permute.xlu0 %3209
    %3211 = vrot.lane.b32.xlu0 %v2524, 111
    %v3212 = vpop.permute.xlu0 %3211
    %v3213 = vsel %vm829, %v3210, %v3212
    %v3214 = vsel %vm829, %v3212, %v3210
    %v3215 = vmul.f32 %v3213, %v835
    %v3216 = vmul.f32 %v3214, %v839
    %v3218 = vsel %vm92, %v3215, 0
    %v3221 = vsel %vm92, %v3216, 0
    %3223 = vmatprep.subr.mxu0 0.0
    %3224 = vmatpush1.msra.mxu0 0.0
    %3225 = vmatprep.subr.mxu0 0.0
    %3226 = vmatpush1.msra.mxu0 0.0
    %3227 = vmatprep.subr.mxu0 0.0
    %3228 = vmatpush1.msra.mxu0 0.0
    %3229 = vmatprep.subr.mxu0 0.0
    %3230 = vmatpush1.msra.mxu0 0.0
    %3231 = vmatprep.subr.mxu0 0.0
    %3232 = vmatpush1.msra.mxu0 0.0
    %3233 = vmatprep.subr.mxu0 0.0
    %3234 = vmatpush1.msra.mxu0 0.0
    %3235 = vmatprep.subr.mxu0 0.0
    %3236 = vmatpush1.msra.mxu0 0.0
    %3237 = vmatprep.subr.mxu0 0.0
    %3238 = vmatpush1.msra.mxu0 0.0
    %3239 = vmatprep.subr.mxu0 0.0
    %3240 = vmatpush1.msra.mxu0 0.0
    %3241 = vmatprep.subr.mxu0 0.0
    %3242 = vmatpush1.msra.mxu0 0.0
    %3243 = vmatprep.subr.mxu0 0.0
    %3244 = vmatpush1.msra.mxu0 0.0
    %3245 = vmatprep.subr.mxu0 0.0
    %3246 = vmatpush1.msra.mxu0 0.0
    %3247 = vmatprep.subr.mxu0 0.0
    %3248 = vmatpush1.msra.mxu0 0.0
    %3249 = vmatprep.subr.mxu0 0.0
    %3250 = vmatpush1.msra.mxu0 0.0
    %3251 = vmatprep.subr.mxu0 0.0
    %3252 = vmatpush1.msra.mxu0 0.0
    %3253 = vmatprep.subr.mxu0 %v3221
    %3254 = vmatpush1.msra.mxu0 %v3218
    %3255 = vmatprep.subr.mxu0 0.0
    %3256 = vmatpush2.msra.mxu0 0.0
    %3257 = vmatprep.subr.mxu0 0.0
    %3258 = vmatpush2.msra.mxu0 0.0
    %3259 = vmatprep.subr.mxu0 0.0
    %3260 = vmatpush2.msra.mxu0 0.0
    %3261 = vmatprep.subr.mxu0 0.0
    %3262 = vmatpush2.msra.mxu0 0.0
    %3263 = vmatprep.subr.mxu0 0.0
    %3264 = vmatpush2.msra.mxu0 0.0
    %3265 = vmatprep.subr.mxu0 0.0
    %3266 = vmatpush2.msra.mxu0 0.0
    %3267 = vmatprep.subr.mxu0 0.0
    %3268 = vmatpush2.msra.mxu0 0.0
    %3269 = vmatprep.subr.mxu0 0.0
    %3270 = vmatpush2.msra.mxu0 0.0
    %3271 = vmatprep.subr.mxu0 0.0
    %3272 = vmatpush2.msra.mxu0 0.0
    %3273 = vmatprep.subr.mxu0 0.0
    %3274 = vmatpush2.msra.mxu0 0.0
    %3275 = vmatprep.subr.mxu0 0.0
    %3276 = vmatpush2.msra.mxu0 0.0
    %3277 = vmatprep.subr.mxu0 0.0
    %3278 = vmatpush2.msra.mxu0 0.0
    %3279 = vmatprep.subr.mxu0 0.0
    %3280 = vmatpush2.msra.mxu0 0.0
    %3281 = vmatprep.subr.mxu0 0.0
    %3282 = vmatpush2.msra.mxu0 0.0
    %3283 = vmatprep.subr.mxu0 0.0
    %3284 = vmatpush2.msra.mxu0 0.0
    %3285 = vmatprep.subr.mxu0 0.0
    %3286 = vmatpush2.msra.mxu0 0.0
    %3287 = vmatprep.mubr.f32.mxu0 0.0
    %3288 = vmatmul.mubr.f32.gmra.mxu0 %v1650
    %v3289 = vpop.f32.mrf.mxu0
    %v3290 = vadd.f32 0.0, %v3289
    %v3291 = vpop.f32.mrf.mxu0
    %v3292 = vadd.f32 0.0, %v3291
    %3293 = vdwg.mxu0
    %v3294 = vadd.f32 %v3207, %v3290
    %v3295 = vadd.f32 %v3208, %v3292
    %v3296 = vadd.f32 %v3294, %v1734
    %v3297 = vadd.f32 %v3295, %v1734
    %v3298 = vmax.f32 %v3296, 0.0
    %v3299 = vmax.f32 %v3297, 0.0
    %v3300 = vadd.f32 %v3298, %v1748
    %v3301 = vadd.f32 %v3299, %v1750
    %v3304 = vcombine.low %v3300, %v3301
    %s3306 = scalar_lea.vmem [#allocation2], 8
    %3307 = vst [vmem:[%s3306] sm:$0xff] %v3304
    // Predicated region
    $region26: #{tpu_custom_call.1} parent=1 // pred_check
      _
    $region27: #{tpu_custom_call.1} parent=1 // pred_check_branch
      %3309 = sbr.rel (0) target = $region29
    $region28: #{tpu_custom_call.1} parent=1 // pred_region
      %s3311 = ssub.s32 256, 256
      %3312 = vsyncadd [#allocation3], %s3311
      %s3313 = sshll.u32 [#allocation2], 4
      %s3314 = int_to_ptr.vmem [resolvable:$true] %s3313
      %3319 = dma.vmem_to_hbm [thread:$0]  %s3314, 256, %s6, [#allocation3], 128, 128, 8
    $region29: #{tpu_custom_call.1} parent=1 // pred_fallthru
      _
    // Predicated region
    $region30: #{tpu_custom_call.1} parent=1 // pred_check
      _
    $region31: #{tpu_custom_call.1} parent=1 // pred_check_branch
      %3321 = sbr.rel (0) target = $region33
    $region32: #{tpu_custom_call.1} parent=1 // pred_region
      %3322 = dma.done [#allocation3], 256
    $region33: #{tpu_custom_call.1} parent=1 // pred_fallthru
      _
    %3323 = vsyncpa [#allocation3], 1

</llo_original>
